<compile_context>
chip_gen: v5e
topology: v5e:2x2
jax: 0.10.0
libtpu: 0.0.40
codegen_flags: <defaults>
</compile_context>

<pallas_src>
import functools
import math

import jax
import jax.numpy as jnp
from jax import lax
from jax.experimental import pallas as pl
from jax.experimental.pallas import tpu as pltpu


# ----------------------------- config ---------------------------------------
N_EMBD = 32
N_HEAD = 4
N_LAYER = 2
N_LOOP = 2
USE_GEGLU = True
USE_LOOP_WEIGHT = True
USE_LOOP_PE = True
BIAS = True
DROPOUT = 0.0          # eval-mode / dropout=0 -> dropout layers are identity
HIDDEN = 4 * N_EMBD    # MLP hidden dim (c_proj input)
FC_OUT = 2 * HIDDEN if USE_GEGLU else HIDDEN

B, T = 2, 8            # small example shapes


# ----------------------------- kernel ---------------------------------------
def backbone_kernel(n_loop, n_layer, n_head, use_loop_weight, use_loop_pe,
                    use_geglu,
                    x_ref, loop_pe_ref,
                    ln1w_ref, ln1b_ref,
                    wqkv_ref, bqkv_ref, wproj_ref, bproj_ref,
                    ln2w_ref, ln2b_ref,
                    wfc_ref, bfc_ref, wp2_ref, bp2_ref,
                    loop_w_ref,
                    o_ref):
    Bb, Tt, C = x_ref.shape
    Dh = C // n_head
    hid = wp2_ref.shape[1]            # MLP hidden dim (c_proj in_features)
    BT = Bb * Tt
    scale = 1.0 / math.sqrt(Dh)
    bf16 = jnp.bfloat16
    f32 = jnp.float32

    # Residual stream, kept f32 and VMEM-resident for the whole backbone.
    x = x_ref[...].reshape(BT, C)     # trivial leading-dim collapse

    # Additive causal mask, hoisted once (JAX does not CSE broadcast_in_dim).
    row = lax.broadcasted_iota(jnp.int32, (Tt, Tt), 0)
    col = lax.broadcasted_iota(jnp.int32, (Tt, Tt), 1)
    causal_bias = jnp.where(col <= row, jnp.float32(0.0), jnp.float32(-1e30))

    def layer_norm(h, w, b):
        # F.layer_norm semantics: biased variance, eps=1e-5, affine on last dim.
        mu = jnp.mean(h, axis=-1, keepdims=True)
        var = jnp.mean((h - mu) ** 2, axis=-1, keepdims=True)
        return (h - mu) * lax.rsqrt(var + 1e-5) * w + b

    def gelu_exact(h):
        # nn.GELU / F.gelu(approximate='none'): 0.5*x*(1+erf(x/sqrt(2)))
        return 0.5 * h * (1.0 + lax.erf(h * 0.7071067811865476))

    def block(h, l):
        # per-layer parameter views (static layer index -> cheap major-dim loads)
        ln1w, ln1b = ln1w_ref[l], ln1b_ref[l]      # (1, C)
        wqkv, bqkv = wqkv_ref[l], bqkv_ref[l]      # (C, 3C) bf16, (1, 3C)
        wproj, bproj = wproj_ref[l], bproj_ref[l]  # (C, C)  bf16, (1, C)
        ln2w, ln2b = ln2w_ref[l], ln2b_ref[l]
        wfc, bfc = wfc_ref[l], bfc_ref[l]          # (C, FC_OUT) bf16, (1, FC_OUT)
        wp2, bp2 = wp2_ref[l], bp2_ref[l]          # (hid, C) bf16, (1, C)

        # ---- attention branch: h + c_proj(attn(ln_1(h))) --------------------
        h1 = layer_norm(h, ln1w, ln1b).astype(bf16)                  # (BT, C)
        # ONE fused QKV matmul: lane-dense 3C=96-wide output.
        qkv = jnp.dot(h1, wqkv, preferred_element_type=f32) + bqkv   # (BT, 3C)

        # Split per head with static lane slices, stack along a *leading* axis:
        # batch index = head * B + b  (only leading-dim concats -> cheap).
        def gather_heads(base):
            parts = [qkv[:, base + hd * Dh: base + (hd + 1) * Dh]
                         .reshape(Bb, Tt, Dh)
                     for hd in range(n_head)]
            return jnp.concatenate(parts, axis=0)                    # (H*B, T, Dh)

        q = gather_heads(0).astype(bf16)
        k = gather_heads(C).astype(bf16)
        v = gather_heads(2 * C).astype(bf16)

        # Scores / softmax / PV, fully batched over (head, batch) in one shot.
        s = jnp.einsum('btd,bsd->bts', q, k,
                       preferred_element_type=f32) * scale + causal_bias
        s = s - jnp.max(s, axis=-1, keepdims=True)
        p = jnp.exp(s)
        p = p * pl.reciprocal(jnp.sum(p, axis=-1, keepdims=True), approx=True)
        y = jnp.einsum('bts,bsd->btd', p.astype(bf16), v,
                       preferred_element_type=f32)                   # (H*B, T, Dh)

        # Re-assemble heads along lanes (channel c = head*Dh + d), then ONE
        # depth-C output projection matmul.
        y_cat = jnp.concatenate([y[hd * Bb:(hd + 1) * Bb] for hd in range(n_head)],
                                axis=-1)                             # (B, T, C)
        attn = jnp.dot(y_cat.reshape(BT, C).astype(bf16), wproj,
                       preferred_element_type=f32) + bproj
        # TODO(synk): attn_dropout / resid_dropout omitted (dropout=0 / eval mode)
        h = h + attn

        # ---- MLP branch: h + c_proj(GEGLU(c_fc(ln_2(h)))) --------------------
        h2 = layer_norm(h, ln2w, ln2b).astype(bf16)
        fc = jnp.dot(h2, wfc, preferred_element_type=f32) + bfc      # (BT, FC_OUT)
        if use_geglu:
            val = fc[:, :hid]                      # GEGLU: first chunk = value
            gate = fc[:, hid:]                     #        second chunk = gate
            act = gelu_exact(gate) * val                             # (BT, hid)
        else:
            act = gelu_exact(fc)
        out = jnp.dot(act.astype(bf16), wp2, preferred_element_type=f32) + bp2
        return h + out

    # full loop-residual backbone, fully unrolled (N_LOOP, N_LAYER are tiny)
    for i in range(n_loop):
        x_copy = x
        if use_loop_pe:
            x = x + loop_pe_ref[pl.ds(i, 1), :]    # (1, C) broadcast add
        for l in range(n_layer):
            x = block(x, l)
        if use_loop_weight:
            x = x_copy + loop_w_ref[i] * x         # scalar from SMEM

    o_ref[...] = x.reshape(Bb, Tt, C).astype(o_ref.dtype)


# ----------------------------- wrapper ---------------------------------------
def transformer_backbone(x, packed):
    kernel = functools.partial(
        backbone_kernel, N_LOOP, N_LAYER, N_HEAD,
        packed["use_loop_weight"], packed["use_loop_pe"], USE_GEGLU)
    args = (
        x, packed["loop_pe"],
        packed["ln1_w"], packed["ln1_b"],
        packed["w_qkv"], packed["b_qkv"],
        packed["w_proj"], packed["b_proj"],
        packed["ln2_w"], packed["ln2_b"],
        packed["w_fc"], packed["b_fc"],
        packed["w_p2"], packed["b_p2"],
        packed["loop_w"],
    )
    in_specs = ([pl.BlockSpec(memory_space=pltpu.MemorySpace.VMEM)
                 for _ in range(len(args) - 1)]
                + [pl.BlockSpec(memory_space=pltpu.MemorySpace.SMEM)])
    return pl.pallas_call(
        kernel,
        out_shape=jax.ShapeDtypeStruct(x.shape, jnp.float32),
        in_specs=in_specs,
        out_specs=pl.BlockSpec(memory_space=pltpu.MemorySpace.VMEM),
    )(*args)


# ----------------------------- params ---------------------------------------
def init_params(key):
    params = {"blocks": []}
    for _ in range(N_LAYER):
        key, k1, k2, k3, k4 = jax.random.split(key, 5)
        blk = {
            # LayerNorm: weight=1, bias=0 (matches nn.Parameter init)
            "ln1_w": jnp.ones((1, N_EMBD), jnp.float32),
            "ln1_b": jnp.zeros((1, N_EMBD), jnp.float32),
            "ln2_w": jnp.ones((1, N_EMBD), jnp.float32),
            "ln2_b": jnp.zeros((1, N_EMBD), jnp.float32),
            # Linear weights stored pre-transposed as (in, out); GPT-style init
            "w_qkv": 0.02 * jax.random.normal(k1, (N_EMBD, 3 * N_EMBD), jnp.float32),
            "b_qkv": jnp.zeros((1, 3 * N_EMBD), jnp.float32),
            "w_proj": 0.02 * jax.random.normal(k2, (N_EMBD, N_EMBD), jnp.float32),
            "b_proj": jnp.zeros((1, N_EMBD), jnp.float32),
            "w_fc": 0.02 * jax.random.normal(k3, (N_EMBD, FC_OUT), jnp.float32),
            "b_fc": jnp.zeros((1, FC_OUT), jnp.float32),
            "w_proj2": 0.02 * jax.random.normal(k4, (HIDDEN, N_EMBD), jnp.float32),
            "b_proj2": jnp.zeros((1, N_EMBD), jnp.float32),
        }
        params["blocks"].append(blk)

    if N_LOOP > 1 and USE_LOOP_WEIGHT:
        # nn.Parameter(torch.ones(1)) per loop
        params["loop_weights"] = jnp.ones((N_LOOP,), jnp.float32)
        # nn.Embedding(n_loop, n_embd) initialized to 0.0
        params["loop_pe"] = (jnp.zeros((N_LOOP, N_EMBD), jnp.float32)
                             if USE_LOOP_PE else None)
    else:
        params["loop_weights"] = None
        params["loop_pe"] = None
    return params


def pack_params(params):
    """Stack per-layer weights (lane-dense layouts only), cast matmul weights to bf16."""
    blocks = params["blocks"]

    def stack(name):
        return jnp.stack([b[name] for b in blocks], axis=0)

    packed = {
        "ln1_w": stack("ln1_w"), "ln1_b": stack("ln1_b"),        # (L,1,C)
        "ln2_w": stack("ln2_w"), "ln2_b": stack("ln2_b"),
        "w_qkv": stack("w_qkv").astype(jnp.bfloat16),            # (L,C,3C)
        "b_qkv": stack("b_qkv"),                                  # (L,1,3C)
        "w_proj": stack("w_proj").astype(jnp.bfloat16),           # (L,C,C)
        "b_proj": stack("b_proj"),                                # (L,1,C)
        "w_fc": stack("w_fc").astype(jnp.bfloat16),               # (L,C,FC_OUT)
        "b_fc": stack("b_fc"),                                    # (L,1,FC_OUT)
        "w_p2": stack("w_proj2").astype(jnp.bfloat16),            # (L,HID,C)
        "b_p2": stack("b_proj2"),                                 # (L,1,C)
    }
    use_loop_weight = params["loop_weights"] is not None
    use_loop_pe = params["loop_pe"] is not None
    packed["loop_w"] = (params["loop_weights"] if use_loop_weight
                        else jnp.ones((N_LOOP,), jnp.float32))
    packed["loop_pe"] = (params["loop_pe"] if use_loop_pe
                         else jnp.zeros((N_LOOP, N_EMBD), jnp.float32))
    packed["use_loop_weight"] = use_loop_weight
    packed["use_loop_pe"] = use_loop_pe
    return packed


# ----------------------------- main ------------------------------------------
if __name__ == "__main__":
    key = jax.random.PRNGKey(0)
    kx, kp = jax.random.split(key)
    x = jax.random.normal(kx, (B, T, N_EMBD), jnp.float32)
    params = init_params(kp)
    packed = pack_params(params)

    y = transformer_backbone(x, packed)
    y = jax.block_until_ready(y)
    assert y.shape == (B, T, N_EMBD)
    assert bool(jnp.all(jnp.isfinite(y)))
    print("KERNEL_OK")
</pallas_src>

<mosaic_0001>
module attributes {stable_mosaic.version = 11 : i64} {
  func.func @backbone_kernel(%arg0: memref<2x8x32xf32, #tpu.memory_space<vmem>>, %arg1: memref<2x32xf32, #tpu.memory_space<vmem>>, %arg2: memref<2x1x32xf32, #tpu.memory_space<vmem>>, %arg3: memref<2x1x32xf32, #tpu.memory_space<vmem>>, %arg4: memref<2x32x96xbf16, #tpu.memory_space<vmem>>, %arg5: memref<2x1x96xf32, #tpu.memory_space<vmem>>, %arg6: memref<2x32x32xbf16, #tpu.memory_space<vmem>>, %arg7: memref<2x1x32xf32, #tpu.memory_space<vmem>>, %arg8: memref<2x1x32xf32, #tpu.memory_space<vmem>>, %arg9: memref<2x1x32xf32, #tpu.memory_space<vmem>>, %arg10: memref<2x32x256xbf16, #tpu.memory_space<vmem>>, %arg11: memref<2x1x256xf32, #tpu.memory_space<vmem>>, %arg12: memref<2x128x32xbf16, #tpu.memory_space<vmem>>, %arg13: memref<2x1x32xf32, #tpu.memory_space<vmem>>, %arg14: memref<2xf32, #tpu.memory_space<smem>>, %arg15: memref<2x8x32xf32, #tpu.memory_space<vmem>>) attributes {dimension_semantics = [], scalar_prefetch = 0 : i64, scratch_operands = 0 : i64, tpu.core_type = #tpu.core_type<tc>} {
    %c0 = arith.constant 0 : index
    %c0_0 = arith.constant 0 : index
    %c0_1 = arith.constant 0 : index
    %0 = vector.load %arg0[%c0, %c0_0, %c0_1] : memref<2x8x32xf32, #tpu.memory_space<vmem>>, vector<2x8x32xf32>
    %1 = vector.shape_cast %0 : vector<2x8x32xf32> to vector<16x32xf32>
    %2 = tpu.iota {dimensions = array<i32: 0>} : vector<8x8xi32>
    %3 = tpu.iota {dimensions = array<i32: 1>} : vector<8x8xi32>
    %4 = arith.cmpi sle, %3, %2 : vector<8x8xi32>
    %cst = arith.constant 0.000000e+00 : f32
    %cst_2 = arith.constant -1.000000e+30 : f32
    %5 = vector.broadcast %cst : f32 to vector<8x8xf32>
    %6 = vector.broadcast %cst_2 : f32 to vector<8x8xf32>
    %7 = arith.select %4, %5, %6 : vector<8x8xi1>, vector<8x8xf32>
    %c0_3 = arith.constant 0 : index
    %c0_4 = arith.constant 0 : index
    %8 = vector.load %arg1[%c0_3, %c0_4] : memref<2x32xf32, #tpu.memory_space<vmem>>, vector<1x32xf32>
    %9 = vector.broadcast %8 : vector<1x32xf32> to vector<16x32xf32>
    %10 = arith.addf %1, %9 : vector<16x32xf32>
    %c0_5 = arith.constant 0 : index
    %c0_6 = arith.constant 0 : index
    %c0_7 = arith.constant 0 : index
    %11 = vector.load %arg2[%c0_5, %c0_6, %c0_7] : memref<2x1x32xf32, #tpu.memory_space<vmem>>, vector<1x1x32xf32>
    %12 = vector.shape_cast %11 : vector<1x1x32xf32> to vector<1x32xf32>
    %c0_8 = arith.constant 0 : index
    %c0_9 = arith.constant 0 : index
    %c0_10 = arith.constant 0 : index
    %13 = vector.load %arg3[%c0_8, %c0_9, %c0_10] : memref<2x1x32xf32, #tpu.memory_space<vmem>>, vector<1x1x32xf32>
    %14 = vector.shape_cast %13 : vector<1x1x32xf32> to vector<1x32xf32>
    %c0_11 = arith.constant 0 : index
    %c0_12 = arith.constant 0 : index
    %c0_13 = arith.constant 0 : index
    %15 = vector.load %arg4[%c0_11, %c0_12, %c0_13] : memref<2x32x96xbf16, #tpu.memory_space<vmem>>, vector<1x32x96xbf16>
    %16 = vector.shape_cast %15 : vector<1x32x96xbf16> to vector<32x96xbf16>
    %c0_14 = arith.constant 0 : index
    %c0_15 = arith.constant 0 : index
    %c0_16 = arith.constant 0 : index
    %17 = vector.load %arg5[%c0_14, %c0_15, %c0_16] : memref<2x1x96xf32, #tpu.memory_space<vmem>>, vector<1x1x96xf32>
    %18 = vector.shape_cast %17 : vector<1x1x96xf32> to vector<1x96xf32>
    %c0_17 = arith.constant 0 : index
    %c0_18 = arith.constant 0 : index
    %c0_19 = arith.constant 0 : index
    %19 = vector.load %arg6[%c0_17, %c0_18, %c0_19] : memref<2x32x32xbf16, #tpu.memory_space<vmem>>, vector<1x32x32xbf16>
    %20 = vector.shape_cast %19 : vector<1x32x32xbf16> to vector<32x32xbf16>
    %c0_20 = arith.constant 0 : index
    %c0_21 = arith.constant 0 : index
    %c0_22 = arith.constant 0 : index
    %21 = vector.load %arg7[%c0_20, %c0_21, %c0_22] : memref<2x1x32xf32, #tpu.memory_space<vmem>>, vector<1x1x32xf32>
    %22 = vector.shape_cast %21 : vector<1x1x32xf32> to vector<1x32xf32>
    %c0_23 = arith.constant 0 : index
    %c0_24 = arith.constant 0 : index
    %c0_25 = arith.constant 0 : index
    %23 = vector.load %arg8[%c0_23, %c0_24, %c0_25] : memref<2x1x32xf32, #tpu.memory_space<vmem>>, vector<1x1x32xf32>
    %24 = vector.shape_cast %23 : vector<1x1x32xf32> to vector<1x32xf32>
    %c0_26 = arith.constant 0 : index
    %c0_27 = arith.constant 0 : index
    %c0_28 = arith.constant 0 : index
    %25 = vector.load %arg9[%c0_26, %c0_27, %c0_28] : memref<2x1x32xf32, #tpu.memory_space<vmem>>, vector<1x1x32xf32>
    %26 = vector.shape_cast %25 : vector<1x1x32xf32> to vector<1x32xf32>
    %c0_29 = arith.constant 0 : index
    %c0_30 = arith.constant 0 : index
    %c0_31 = arith.constant 0 : index
    %27 = vector.load %arg10[%c0_29, %c0_30, %c0_31] : memref<2x32x256xbf16, #tpu.memory_space<vmem>>, vector<1x32x256xbf16>
    %28 = vector.shape_cast %27 : vector<1x32x256xbf16> to vector<32x256xbf16>
    %c0_32 = arith.constant 0 : index
    %c0_33 = arith.constant 0 : index
    %c0_34 = arith.constant 0 : index
    %29 = vector.load %arg11[%c0_32, %c0_33, %c0_34] : memref<2x1x256xf32, #tpu.memory_space<vmem>>, vector<1x1x256xf32>
    %30 = vector.shape_cast %29 : vector<1x1x256xf32> to vector<1x256xf32>
    %c0_35 = arith.constant 0 : index
    %c0_36 = arith.constant 0 : index
    %c0_37 = arith.constant 0 : index
    %31 = vector.load %arg12[%c0_35, %c0_36, %c0_37] : memref<2x128x32xbf16, #tpu.memory_space<vmem>>, vector<1x128x32xbf16>
    %32 = vector.shape_cast %31 : vector<1x128x32xbf16> to vector<128x32xbf16>
    %c0_38 = arith.constant 0 : index
    %c0_39 = arith.constant 0 : index
    %c0_40 = arith.constant 0 : index
    %33 = vector.load %arg13[%c0_38, %c0_39, %c0_40] : memref<2x1x32xf32, #tpu.memory_space<vmem>>, vector<1x1x32xf32>
    %34 = vector.shape_cast %33 : vector<1x1x32xf32> to vector<1x32xf32>
    %cst_41 = arith.constant dense<0.000000e+00> : vector<16xf32>
    %35 = vector.multi_reduction <add>, %10, %cst_41 [1] : vector<16x32xf32> to vector<16xf32>
    %36 = vector.shape_cast %35 : vector<16xf32> to vector<16x1xf32>
    %cst_42 = arith.constant 3.200000e+01 : f32
    %37 = vector.broadcast %cst_42 : f32 to vector<16x1xf32>
    %38 = arith.divf %36, %37 : vector<16x1xf32>
    %39 = vector.broadcast %38 : vector<16x1xf32> to vector<16x32xf32>
    %40 = arith.subf %10, %39 : vector<16x32xf32>
    %41 = arith.mulf %40, %40 : vector<16x32xf32>
    %cst_43 = arith.constant dense<0.000000e+00> : vector<16xf32>
    %42 = vector.multi_reduction <add>, %41, %cst_43 [1] : vector<16x32xf32> to vector<16xf32>
    %43 = vector.shape_cast %42 : vector<16xf32> to vector<16x1xf32>
    %cst_44 = arith.constant 3.200000e+01 : f32
    %44 = vector.broadcast %cst_44 : f32 to vector<16x1xf32>
    %45 = arith.divf %43, %44 : vector<16x1xf32>
    %46 = vector.broadcast %38 : vector<16x1xf32> to vector<16x32xf32>
    %47 = arith.subf %10, %46 : vector<16x32xf32>
    %cst_45 = arith.constant 9.99999974E-6 : f32
    %48 = vector.broadcast %cst_45 : f32 to vector<16x1xf32>
    %49 = arith.addf %45, %48 : vector<16x1xf32>
    %50 = math.rsqrt %49 : vector<16x1xf32>
    %51 = vector.broadcast %50 : vector<16x1xf32> to vector<16x32xf32>
    %52 = arith.mulf %47, %51 : vector<16x32xf32>
    %53 = vector.broadcast %12 : vector<1x32xf32> to vector<16x32xf32>
    %54 = arith.mulf %52, %53 : vector<16x32xf32>
    %55 = vector.broadcast %14 : vector<1x32xf32> to vector<16x32xf32>
    %56 = arith.addf %54, %55 : vector<16x32xf32>
    %57 = arith.truncf %56 : vector<16x32xf32> to vector<16x32xbf16>
    %cst_46 = arith.constant dense<0.000000e+00> : vector<16x96xf32>
    %58 = tpu.matmul %57, %16, %cst_46 {dimension_numbers = #tpu.dot_dimension_numbers<[1], [0], [0], [1], [0, 0, 1, 1], [], []>} : vector<16x32xbf16>, vector<32x96xbf16>, vector<16x96xf32> -> vector<16x96xf32>
    %59 = vector.broadcast %18 : vector<1x96xf32> to vector<16x96xf32>
    %60 = arith.addf %58, %59 : vector<16x96xf32>
    %61 = vector.extract_strided_slice %60 {offsets = [0, 0], sizes = [16, 8], strides = [1, 1]} : vector<16x96xf32> to vector<16x8xf32>
    %62 = vector.shape_cast %61 : vector<16x8xf32> to vector<2x8x8xf32>
    %63 = vector.extract_strided_slice %60 {offsets = [0, 8], sizes = [16, 8], strides = [1, 1]} : vector<16x96xf32> to vector<16x8xf32>
    %64 = vector.shape_cast %63 : vector<16x8xf32> to vector<2x8x8xf32>
    %65 = vector.extract_strided_slice %60 {offsets = [0, 16], sizes = [16, 8], strides = [1, 1]} : vector<16x96xf32> to vector<16x8xf32>
    %66 = vector.shape_cast %65 : vector<16x8xf32> to vector<2x8x8xf32>
    %67 = vector.extract_strided_slice %60 {offsets = [0, 24], sizes = [16, 8], strides = [1, 1]} : vector<16x96xf32> to vector<16x8xf32>
    %68 = vector.shape_cast %67 : vector<16x8xf32> to vector<2x8x8xf32>
    %69 = tpu.concatenate %62, %64, %66, %68 in 0 : vector<2x8x8xf32>, vector<2x8x8xf32>, vector<2x8x8xf32>, vector<2x8x8xf32> -> vector<8x8x8xf32>
    %70 = arith.truncf %69 : vector<8x8x8xf32> to vector<8x8x8xbf16>
    %71 = vector.extract_strided_slice %60 {offsets = [0, 32], sizes = [16, 8], strides = [1, 1]} : vector<16x96xf32> to vector<16x8xf32>
    %72 = vector.shape_cast %71 : vector<16x8xf32> to vector<2x8x8xf32>
    %73 = vector.extract_strided_slice %60 {offsets = [0, 40], sizes = [16, 8], strides = [1, 1]} : vector<16x96xf32> to vector<16x8xf32>
    %74 = vector.shape_cast %73 : vector<16x8xf32> to vector<2x8x8xf32>
    %75 = vector.extract_strided_slice %60 {offsets = [0, 48], sizes = [16, 8], strides = [1, 1]} : vector<16x96xf32> to vector<16x8xf32>
    %76 = vector.shape_cast %75 : vector<16x8xf32> to vector<2x8x8xf32>
    %77 = vector.extract_strided_slice %60 {offsets = [0, 56], sizes = [16, 8], strides = [1, 1]} : vector<16x96xf32> to vector<16x8xf32>
    %78 = vector.shape_cast %77 : vector<16x8xf32> to vector<2x8x8xf32>
    %79 = tpu.concatenate %72, %74, %76, %78 in 0 : vector<2x8x8xf32>, vector<2x8x8xf32>, vector<2x8x8xf32>, vector<2x8x8xf32> -> vector<8x8x8xf32>
    %80 = arith.truncf %79 : vector<8x8x8xf32> to vector<8x8x8xbf16>
    %81 = vector.extract_strided_slice %60 {offsets = [0, 64], sizes = [16, 8], strides = [1, 1]} : vector<16x96xf32> to vector<16x8xf32>
    %82 = vector.shape_cast %81 : vector<16x8xf32> to vector<2x8x8xf32>
    %83 = vector.extract_strided_slice %60 {offsets = [0, 72], sizes = [16, 8], strides = [1, 1]} : vector<16x96xf32> to vector<16x8xf32>
    %84 = vector.shape_cast %83 : vector<16x8xf32> to vector<2x8x8xf32>
    %85 = vector.extract_strided_slice %60 {offsets = [0, 80], sizes = [16, 8], strides = [1, 1]} : vector<16x96xf32> to vector<16x8xf32>
    %86 = vector.shape_cast %85 : vector<16x8xf32> to vector<2x8x8xf32>
    %87 = vector.extract_strided_slice %60 {offsets = [0, 88], sizes = [16, 8], strides = [1, 1]} : vector<16x96xf32> to vector<16x8xf32>
    %88 = vector.shape_cast %87 : vector<16x8xf32> to vector<2x8x8xf32>
    %89 = tpu.concatenate %82, %84, %86, %88 in 0 : vector<2x8x8xf32>, vector<2x8x8xf32>, vector<2x8x8xf32>, vector<2x8x8xf32> -> vector<8x8x8xf32>
    %90 = arith.truncf %89 : vector<8x8x8xf32> to vector<8x8x8xbf16>
    "tpu.trace_start"() <{level = 10 : i32, message = "btd,bsd->bts"}> : () -> ()
    %cst_47 = arith.constant dense<0.000000e+00> : vector<8x8x8xf32>
    %91 = tpu.matmul %70, %80, %cst_47 {dimension_numbers = #tpu.dot_dimension_numbers<[2], [2], [1], [1], [0, 0, 0, 1, 1, 1], [0], [0]>} : vector<8x8x8xbf16>, vector<8x8x8xbf16>, vector<8x8x8xf32> -> vector<8x8x8xf32>
    "tpu.trace_stop"() : () -> ()
    %cst_48 = arith.constant 0.353553385 : f32
    %92 = vector.broadcast %cst_48 : f32 to vector<8x8x8xf32>
    %93 = arith.mulf %91, %92 : vector<8x8x8xf32>
    %94 = vector.shape_cast %7 : vector<8x8xf32> to vector<1x8x8xf32>
    %95 = vector.broadcast %94 : vector<1x8x8xf32> to vector<8x8x8xf32>
    %96 = arith.addf %93, %95 : vector<8x8x8xf32>
    %cst_49 = arith.constant dense<0xFF800000> : vector<8x8xf32>
    %97 = vector.multi_reduction <maximumf>, %96, %cst_49 [2] : vector<8x8x8xf32> to vector<8x8xf32>
    %98 = vector.shape_cast %97 : vector<8x8xf32> to vector<8x8x1xf32>
    %99 = vector.broadcast %98 : vector<8x8x1xf32> to vector<8x8x8xf32>
    %100 = arith.subf %96, %99 : vector<8x8x8xf32>
    %101 = math.exp %100 : vector<8x8x8xf32>
    %cst_50 = arith.constant dense<0.000000e+00> : vector<8x8xf32>
    %102 = vector.multi_reduction <add>, %101, %cst_50 [2] : vector<8x8x8xf32> to vector<8x8xf32>
    %103 = vector.shape_cast %102 : vector<8x8xf32> to vector<8x8x1xf32>
    %104 = tpu.reciprocal %103 {approx = true} : vector<8x8x1xf32> -> vector<8x8x1xf32>
    %105 = vector.broadcast %104 : vector<8x8x1xf32> to vector<8x8x8xf32>
    %106 = arith.mulf %101, %105 : vector<8x8x8xf32>
    %107 = arith.truncf %106 : vector<8x8x8xf32> to vector<8x8x8xbf16>
    "tpu.trace_start"() <{level = 10 : i32, message = "bts,bsd->btd"}> : () -> ()
    %cst_51 = arith.constant dense<0.000000e+00> : vector<8x8x8xf32>
    %108 = tpu.matmul %107, %90, %cst_51 {dimension_numbers = #tpu.dot_dimension_numbers<[2], [1], [1], [2], [0, 0, 0, 1, 1, 2], [0], [0]>} : vector<8x8x8xbf16>, vector<8x8x8xbf16>, vector<8x8x8xf32> -> vector<8x8x8xf32>
    "tpu.trace_stop"() : () -> ()
    %109 = vector.extract_strided_slice %108 {offsets = [0, 0, 0], sizes = [2, 8, 8], strides = [1, 1, 1]} : vector<8x8x8xf32> to vector<2x8x8xf32>
    %110 = vector.extract_strided_slice %108 {offsets = [2, 0, 0], sizes = [2, 8, 8], strides = [1, 1, 1]} : vector<8x8x8xf32> to vector<2x8x8xf32>
    %111 = vector.extract_strided_slice %108 {offsets = [4, 0, 0], sizes = [2, 8, 8], strides = [1, 1, 1]} : vector<8x8x8xf32> to vector<2x8x8xf32>
    %112 = vector.extract_strided_slice %108 {offsets = [6, 0, 0], sizes = [2, 8, 8], strides = [1, 1, 1]} : vector<8x8x8xf32> to vector<2x8x8xf32>
    %113 = tpu.concatenate %109, %110, %111, %112 in 2 : vector<2x8x8xf32>, vector<2x8x8xf32>, vector<2x8x8xf32>, vector<2x8x8xf32> -> vector<2x8x32xf32>
    %114 = vector.shape_cast %113 : vector<2x8x32xf32> to vector<16x32xf32>
    %115 = arith.truncf %114 : vector<16x32xf32> to vector<16x32xbf16>
    %cst_52 = arith.constant dense<0.000000e+00> : vector<16x32xf32>
    %116 = tpu.matmul %115, %20, %cst_52 {dimension_numbers = #tpu.dot_dimension_numbers<[1], [0], [0], [1], [0, 0, 1, 1], [], []>} : vector<16x32xbf16>, vector<32x32xbf16>, vector<16x32xf32> -> vector<16x32xf32>
    %117 = vector.broadcast %22 : vector<1x32xf32> to vector<16x32xf32>
    %118 = arith.addf %116, %117 : vector<16x32xf32>
    %119 = arith.addf %10, %118 : vector<16x32xf32>
    %cst_53 = arith.constant dense<0.000000e+00> : vector<16xf32>
    %120 = vector.multi_reduction <add>, %119, %cst_53 [1] : vector<16x32xf32> to vector<16xf32>
    %121 = vector.shape_cast %120 : vector<16xf32> to vector<16x1xf32>
    %cst_54 = arith.constant 3.200000e+01 : f32
    %122 = vector.broadcast %cst_54 : f32 to vector<16x1xf32>
    %123 = arith.divf %121, %122 : vector<16x1xf32>
    %124 = vector.broadcast %123 : vector<16x1xf32> to vector<16x32xf32>
    %125 = arith.subf %119, %124 : vector<16x32xf32>
    %126 = arith.mulf %125, %125 : vector<16x32xf32>
    %cst_55 = arith.constant dense<0.000000e+00> : vector<16xf32>
    %127 = vector.multi_reduction <add>, %126, %cst_55 [1] : vector<16x32xf32> to vector<16xf32>
    %128 = vector.shape_cast %127 : vector<16xf32> to vector<16x1xf32>
    %cst_56 = arith.constant 3.200000e+01 : f32
    %129 = vector.broadcast %cst_56 : f32 to vector<16x1xf32>
    %130 = arith.divf %128, %129 : vector<16x1xf32>
    %131 = vector.broadcast %123 : vector<16x1xf32> to vector<16x32xf32>
    %132 = arith.subf %119, %131 : vector<16x32xf32>
    %cst_57 = arith.constant 9.99999974E-6 : f32
    %133 = vector.broadcast %cst_57 : f32 to vector<16x1xf32>
    %134 = arith.addf %130, %133 : vector<16x1xf32>
    %135 = math.rsqrt %134 : vector<16x1xf32>
    %136 = vector.broadcast %135 : vector<16x1xf32> to vector<16x32xf32>
    %137 = arith.mulf %132, %136 : vector<16x32xf32>
    %138 = vector.broadcast %24 : vector<1x32xf32> to vector<16x32xf32>
    %139 = arith.mulf %137, %138 : vector<16x32xf32>
    %140 = vector.broadcast %26 : vector<1x32xf32> to vector<16x32xf32>
    %141 = arith.addf %139, %140 : vector<16x32xf32>
    %142 = arith.truncf %141 : vector<16x32xf32> to vector<16x32xbf16>
    %cst_58 = arith.constant dense<0.000000e+00> : vector<16x256xf32>
    %143 = tpu.matmul %142, %28, %cst_58 {dimension_numbers = #tpu.dot_dimension_numbers<[1], [0], [0], [1], [0, 0, 1, 1], [], []>} : vector<16x32xbf16>, vector<32x256xbf16>, vector<16x256xf32> -> vector<16x256xf32>
    %144 = vector.broadcast %30 : vector<1x256xf32> to vector<16x256xf32>
    %145 = arith.addf %143, %144 : vector<16x256xf32>
    %146 = vector.extract_strided_slice %145 {offsets = [0, 0], sizes = [16, 128], strides = [1, 1]} : vector<16x256xf32> to vector<16x128xf32>
    %147 = vector.extract_strided_slice %145 {offsets = [0, 128], sizes = [16, 128], strides = [1, 1]} : vector<16x256xf32> to vector<16x128xf32>
    %cst_59 = arith.constant 5.000000e-01 : f32
    %148 = vector.broadcast %cst_59 : f32 to vector<16x128xf32>
    %149 = arith.mulf %148, %147 : vector<16x128xf32>
    %cst_60 = arith.constant 0.707106769 : f32
    %150 = vector.broadcast %cst_60 : f32 to vector<16x128xf32>
    %151 = arith.mulf %147, %150 : vector<16x128xf32>
    %152 = math.erf %151 : vector<16x128xf32>
    %cst_61 = arith.constant 1.000000e+00 : f32
    %153 = vector.broadcast %cst_61 : f32 to vector<16x128xf32>
    %154 = arith.addf %153, %152 : vector<16x128xf32>
    %155 = arith.mulf %149, %154 : vector<16x128xf32>
    %156 = arith.mulf %155, %146 : vector<16x128xf32>
    %157 = arith.truncf %156 : vector<16x128xf32> to vector<16x128xbf16>
    %cst_62 = arith.constant dense<0.000000e+00> : vector<16x32xf32>
    %158 = tpu.matmul %157, %32, %cst_62 {dimension_numbers = #tpu.dot_dimension_numbers<[1], [0], [0], [1], [0, 0, 1, 1], [], []>} : vector<16x128xbf16>, vector<128x32xbf16>, vector<16x32xf32> -> vector<16x32xf32>
    %159 = vector.broadcast %34 : vector<1x32xf32> to vector<16x32xf32>
    %160 = arith.addf %158, %159 : vector<16x32xf32>
    %161 = arith.addf %119, %160 : vector<16x32xf32>
    %c1 = arith.constant 1 : index
    %c0_63 = arith.constant 0 : index
    %c0_64 = arith.constant 0 : index
    %162 = vector.load %arg2[%c1, %c0_63, %c0_64] : memref<2x1x32xf32, #tpu.memory_space<vmem>>, vector<1x1x32xf32>
    %163 = vector.shape_cast %162 : vector<1x1x32xf32> to vector<1x32xf32>
    %c1_65 = arith.constant 1 : index
    %c0_66 = arith.constant 0 : index
    %c0_67 = arith.constant 0 : index
    %164 = vector.load %arg3[%c1_65, %c0_66, %c0_67] : memref<2x1x32xf32, #tpu.memory_space<vmem>>, vector<1x1x32xf32>
    %165 = vector.shape_cast %164 : vector<1x1x32xf32> to vector<1x32xf32>
    %c1_68 = arith.constant 1 : index
    %c0_69 = arith.constant 0 : index
    %c0_70 = arith.constant 0 : index
    %166 = vector.load %arg4[%c1_68, %c0_69, %c0_70] : memref<2x32x96xbf16, #tpu.memory_space<vmem>>, vector<1x32x96xbf16>
    %167 = vector.shape_cast %166 : vector<1x32x96xbf16> to vector<32x96xbf16>
    %c1_71 = arith.constant 1 : index
    %c0_72 = arith.constant 0 : index
    %c0_73 = arith.constant 0 : index
    %168 = vector.load %arg5[%c1_71, %c0_72, %c0_73] : memref<2x1x96xf32, #tpu.memory_space<vmem>>, vector<1x1x96xf32>
    %169 = vector.shape_cast %168 : vector<1x1x96xf32> to vector<1x96xf32>
    %c1_74 = arith.constant 1 : index
    %c0_75 = arith.constant 0 : index
    %c0_76 = arith.constant 0 : index
    %170 = vector.load %arg6[%c1_74, %c0_75, %c0_76] : memref<2x32x32xbf16, #tpu.memory_space<vmem>>, vector<1x32x32xbf16>
    %171 = vector.shape_cast %170 : vector<1x32x32xbf16> to vector<32x32xbf16>
    %c1_77 = arith.constant 1 : index
    %c0_78 = arith.constant 0 : index
    %c0_79 = arith.constant 0 : index
    %172 = vector.load %arg7[%c1_77, %c0_78, %c0_79] : memref<2x1x32xf32, #tpu.memory_space<vmem>>, vector<1x1x32xf32>
    %173 = vector.shape_cast %172 : vector<1x1x32xf32> to vector<1x32xf32>
    %c1_80 = arith.constant 1 : index
    %c0_81 = arith.constant 0 : index
    %c0_82 = arith.constant 0 : index
    %174 = vector.load %arg8[%c1_80, %c0_81, %c0_82] : memref<2x1x32xf32, #tpu.memory_space<vmem>>, vector<1x1x32xf32>
    %175 = vector.shape_cast %174 : vector<1x1x32xf32> to vector<1x32xf32>
    %c1_83 = arith.constant 1 : index
    %c0_84 = arith.constant 0 : index
    %c0_85 = arith.constant 0 : index
    %176 = vector.load %arg9[%c1_83, %c0_84, %c0_85] : memref<2x1x32xf32, #tpu.memory_space<vmem>>, vector<1x1x32xf32>
    %177 = vector.shape_cast %176 : vector<1x1x32xf32> to vector<1x32xf32>
    %c1_86 = arith.constant 1 : index
    %c0_87 = arith.constant 0 : index
    %c0_88 = arith.constant 0 : index
    %178 = vector.load %arg10[%c1_86, %c0_87, %c0_88] : memref<2x32x256xbf16, #tpu.memory_space<vmem>>, vector<1x32x256xbf16>
    %179 = vector.shape_cast %178 : vector<1x32x256xbf16> to vector<32x256xbf16>
    %c1_89 = arith.constant 1 : index
    %c0_90 = arith.constant 0 : index
    %c0_91 = arith.constant 0 : index
    %180 = vector.load %arg11[%c1_89, %c0_90, %c0_91] : memref<2x1x256xf32, #tpu.memory_space<vmem>>, vector<1x1x256xf32>
    %181 = vector.shape_cast %180 : vector<1x1x256xf32> to vector<1x256xf32>
    %c1_92 = arith.constant 1 : index
    %c0_93 = arith.constant 0 : index
    %c0_94 = arith.constant 0 : index
    %182 = vector.load %arg12[%c1_92, %c0_93, %c0_94] : memref<2x128x32xbf16, #tpu.memory_space<vmem>>, vector<1x128x32xbf16>
    %183 = vector.shape_cast %182 : vector<1x128x32xbf16> to vector<128x32xbf16>
    %c1_95 = arith.constant 1 : index
    %c0_96 = arith.constant 0 : index
    %c0_97 = arith.constant 0 : index
    %184 = vector.load %arg13[%c1_95, %c0_96, %c0_97] : memref<2x1x32xf32, #tpu.memory_space<vmem>>, vector<1x1x32xf32>
    %185 = vector.shape_cast %184 : vector<1x1x32xf32> to vector<1x32xf32>
    %cst_98 = arith.constant dense<0.000000e+00> : vector<16xf32>
    %186 = vector.multi_reduction <add>, %161, %cst_98 [1] : vector<16x32xf32> to vector<16xf32>
    %187 = vector.shape_cast %186 : vector<16xf32> to vector<16x1xf32>
    %cst_99 = arith.constant 3.200000e+01 : f32
    %188 = vector.broadcast %cst_99 : f32 to vector<16x1xf32>
    %189 = arith.divf %187, %188 : vector<16x1xf32>
    %190 = vector.broadcast %189 : vector<16x1xf32> to vector<16x32xf32>
    %191 = arith.subf %161, %190 : vector<16x32xf32>
    %192 = arith.mulf %191, %191 : vector<16x32xf32>
    %cst_100 = arith.constant dense<0.000000e+00> : vector<16xf32>
    %193 = vector.multi_reduction <add>, %192, %cst_100 [1] : vector<16x32xf32> to vector<16xf32>
    %194 = vector.shape_cast %193 : vector<16xf32> to vector<16x1xf32>
    %cst_101 = arith.constant 3.200000e+01 : f32
    %195 = vector.broadcast %cst_101 : f32 to vector<16x1xf32>
    %196 = arith.divf %194, %195 : vector<16x1xf32>
    %197 = vector.broadcast %189 : vector<16x1xf32> to vector<16x32xf32>
    %198 = arith.subf %161, %197 : vector<16x32xf32>
    %cst_102 = arith.constant 9.99999974E-6 : f32
    %199 = vector.broadcast %cst_102 : f32 to vector<16x1xf32>
    %200 = arith.addf %196, %199 : vector<16x1xf32>
    %201 = math.rsqrt %200 : vector<16x1xf32>
    %202 = vector.broadcast %201 : vector<16x1xf32> to vector<16x32xf32>
    %203 = arith.mulf %198, %202 : vector<16x32xf32>
    %204 = vector.broadcast %163 : vector<1x32xf32> to vector<16x32xf32>
    %205 = arith.mulf %203, %204 : vector<16x32xf32>
    %206 = vector.broadcast %165 : vector<1x32xf32> to vector<16x32xf32>
    %207 = arith.addf %205, %206 : vector<16x32xf32>
    %208 = arith.truncf %207 : vector<16x32xf32> to vector<16x32xbf16>
    %cst_103 = arith.constant dense<0.000000e+00> : vector<16x96xf32>
    %209 = tpu.matmul %208, %167, %cst_103 {dimension_numbers = #tpu.dot_dimension_numbers<[1], [0], [0], [1], [0, 0, 1, 1], [], []>} : vector<16x32xbf16>, vector<32x96xbf16>, vector<16x96xf32> -> vector<16x96xf32>
    %210 = vector.broadcast %169 : vector<1x96xf32> to vector<16x96xf32>
    %211 = arith.addf %209, %210 : vector<16x96xf32>
    %212 = vector.extract_strided_slice %211 {offsets = [0, 0], sizes = [16, 8], strides = [1, 1]} : vector<16x96xf32> to vector<16x8xf32>
    %213 = vector.shape_cast %212 : vector<16x8xf32> to vector<2x8x8xf32>
    %214 = vector.extract_strided_slice %211 {offsets = [0, 8], sizes = [16, 8], strides = [1, 1]} : vector<16x96xf32> to vector<16x8xf32>
    %215 = vector.shape_cast %214 : vector<16x8xf32> to vector<2x8x8xf32>
    %216 = vector.extract_strided_slice %211 {offsets = [0, 16], sizes = [16, 8], strides = [1, 1]} : vector<16x96xf32> to vector<16x8xf32>
    %217 = vector.shape_cast %216 : vector<16x8xf32> to vector<2x8x8xf32>
    %218 = vector.extract_strided_slice %211 {offsets = [0, 24], sizes = [16, 8], strides = [1, 1]} : vector<16x96xf32> to vector<16x8xf32>
    %219 = vector.shape_cast %218 : vector<16x8xf32> to vector<2x8x8xf32>
    %220 = tpu.concatenate %213, %215, %217, %219 in 0 : vector<2x8x8xf32>, vector<2x8x8xf32>, vector<2x8x8xf32>, vector<2x8x8xf32> -> vector<8x8x8xf32>
    %221 = arith.truncf %220 : vector<8x8x8xf32> to vector<8x8x8xbf16>
    %222 = vector.extract_strided_slice %211 {offsets = [0, 32], sizes = [16, 8], strides = [1, 1]} : vector<16x96xf32> to vector<16x8xf32>
    %223 = vector.shape_cast %222 : vector<16x8xf32> to vector<2x8x8xf32>
    %224 = vector.extract_strided_slice %211 {offsets = [0, 40], sizes = [16, 8], strides = [1, 1]} : vector<16x96xf32> to vector<16x8xf32>
    %225 = vector.shape_cast %224 : vector<16x8xf32> to vector<2x8x8xf32>
    %226 = vector.extract_strided_slice %211 {offsets = [0, 48], sizes = [16, 8], strides = [1, 1]} : vector<16x96xf32> to vector<16x8xf32>
    %227 = vector.shape_cast %226 : vector<16x8xf32> to vector<2x8x8xf32>
    %228 = vector.extract_strided_slice %211 {offsets = [0, 56], sizes = [16, 8], strides = [1, 1]} : vector<16x96xf32> to vector<16x8xf32>
    %229 = vector.shape_cast %228 : vector<16x8xf32> to vector<2x8x8xf32>
    %230 = tpu.concatenate %223, %225, %227, %229 in 0 : vector<2x8x8xf32>, vector<2x8x8xf32>, vector<2x8x8xf32>, vector<2x8x8xf32> -> vector<8x8x8xf32>
    %231 = arith.truncf %230 : vector<8x8x8xf32> to vector<8x8x8xbf16>
    %232 = vector.extract_strided_slice %211 {offsets = [0, 64], sizes = [16, 8], strides = [1, 1]} : vector<16x96xf32> to vector<16x8xf32>
    %233 = vector.shape_cast %232 : vector<16x8xf32> to vector<2x8x8xf32>
    %234 = vector.extract_strided_slice %211 {offsets = [0, 72], sizes = [16, 8], strides = [1, 1]} : vector<16x96xf32> to vector<16x8xf32>
    %235 = vector.shape_cast %234 : vector<16x8xf32> to vector<2x8x8xf32>
    %236 = vector.extract_strided_slice %211 {offsets = [0, 80], sizes = [16, 8], strides = [1, 1]} : vector<16x96xf32> to vector<16x8xf32>
    %237 = vector.shape_cast %236 : vector<16x8xf32> to vector<2x8x8xf32>
    %238 = vector.extract_strided_slice %211 {offsets = [0, 88], sizes = [16, 8], strides = [1, 1]} : vector<16x96xf32> to vector<16x8xf32>
    %239 = vector.shape_cast %238 : vector<16x8xf32> to vector<2x8x8xf32>
    %240 = tpu.concatenate %233, %235, %237, %239 in 0 : vector<2x8x8xf32>, vector<2x8x8xf32>, vector<2x8x8xf32>, vector<2x8x8xf32> -> vector<8x8x8xf32>
    %241 = arith.truncf %240 : vector<8x8x8xf32> to vector<8x8x8xbf16>
    "tpu.trace_start"() <{level = 10 : i32, message = "btd,bsd->bts"}> : () -> ()
    %cst_104 = arith.constant dense<0.000000e+00> : vector<8x8x8xf32>
    %242 = tpu.matmul %221, %231, %cst_104 {dimension_numbers = #tpu.dot_dimension_numbers<[2], [2], [1], [1], [0, 0, 0, 1, 1, 1], [0], [0]>} : vector<8x8x8xbf16>, vector<8x8x8xbf16>, vector<8x8x8xf32> -> vector<8x8x8xf32>
    "tpu.trace_stop"() : () -> ()
    %cst_105 = arith.constant 0.353553385 : f32
    %243 = vector.broadcast %cst_105 : f32 to vector<8x8x8xf32>
    %244 = arith.mulf %242, %243 : vector<8x8x8xf32>
    %245 = vector.shape_cast %7 : vector<8x8xf32> to vector<1x8x8xf32>
    %246 = vector.broadcast %245 : vector<1x8x8xf32> to vector<8x8x8xf32>
    %247 = arith.addf %244, %246 : vector<8x8x8xf32>
    %cst_106 = arith.constant dense<0xFF800000> : vector<8x8xf32>
    %248 = vector.multi_reduction <maximumf>, %247, %cst_106 [2] : vector<8x8x8xf32> to vector<8x8xf32>
    %249 = vector.shape_cast %248 : vector<8x8xf32> to vector<8x8x1xf32>
    %250 = vector.broadcast %249 : vector<8x8x1xf32> to vector<8x8x8xf32>
    %251 = arith.subf %247, %250 : vector<8x8x8xf32>
    %252 = math.exp %251 : vector<8x8x8xf32>
    %cst_107 = arith.constant dense<0.000000e+00> : vector<8x8xf32>
    %253 = vector.multi_reduction <add>, %252, %cst_107 [2] : vector<8x8x8xf32> to vector<8x8xf32>
    %254 = vector.shape_cast %253 : vector<8x8xf32> to vector<8x8x1xf32>
    %255 = tpu.reciprocal %254 {approx = true} : vector<8x8x1xf32> -> vector<8x8x1xf32>
    %256 = vector.broadcast %255 : vector<8x8x1xf32> to vector<8x8x8xf32>
    %257 = arith.mulf %252, %256 : vector<8x8x8xf32>
    %258 = arith.truncf %257 : vector<8x8x8xf32> to vector<8x8x8xbf16>
    "tpu.trace_start"() <{level = 10 : i32, message = "bts,bsd->btd"}> : () -> ()
    %cst_108 = arith.constant dense<0.000000e+00> : vector<8x8x8xf32>
    %259 = tpu.matmul %258, %241, %cst_108 {dimension_numbers = #tpu.dot_dimension_numbers<[2], [1], [1], [2], [0, 0, 0, 1, 1, 2], [0], [0]>} : vector<8x8x8xbf16>, vector<8x8x8xbf16>, vector<8x8x8xf32> -> vector<8x8x8xf32>
    "tpu.trace_stop"() : () -> ()
    %260 = vector.extract_strided_slice %259 {offsets = [0, 0, 0], sizes = [2, 8, 8], strides = [1, 1, 1]} : vector<8x8x8xf32> to vector<2x8x8xf32>
    %261 = vector.extract_strided_slice %259 {offsets = [2, 0, 0], sizes = [2, 8, 8], strides = [1, 1, 1]} : vector<8x8x8xf32> to vector<2x8x8xf32>
    %262 = vector.extract_strided_slice %259 {offsets = [4, 0, 0], sizes = [2, 8, 8], strides = [1, 1, 1]} : vector<8x8x8xf32> to vector<2x8x8xf32>
    %263 = vector.extract_strided_slice %259 {offsets = [6, 0, 0], sizes = [2, 8, 8], strides = [1, 1, 1]} : vector<8x8x8xf32> to vector<2x8x8xf32>
    %264 = tpu.concatenate %260, %261, %262, %263 in 2 : vector<2x8x8xf32>, vector<2x8x8xf32>, vector<2x8x8xf32>, vector<2x8x8xf32> -> vector<2x8x32xf32>
    %265 = vector.shape_cast %264 : vector<2x8x32xf32> to vector<16x32xf32>
    %266 = arith.truncf %265 : vector<16x32xf32> to vector<16x32xbf16>
    %cst_109 = arith.constant dense<0.000000e+00> : vector<16x32xf32>
    %267 = tpu.matmul %266, %171, %cst_109 {dimension_numbers = #tpu.dot_dimension_numbers<[1], [0], [0], [1], [0, 0, 1, 1], [], []>} : vector<16x32xbf16>, vector<32x32xbf16>, vector<16x32xf32> -> vector<16x32xf32>
    %268 = vector.broadcast %173 : vector<1x32xf32> to vector<16x32xf32>
    %269 = arith.addf %267, %268 : vector<16x32xf32>
    %270 = arith.addf %161, %269 : vector<16x32xf32>
    %cst_110 = arith.constant dense<0.000000e+00> : vector<16xf32>
    %271 = vector.multi_reduction <add>, %270, %cst_110 [1] : vector<16x32xf32> to vector<16xf32>
    %272 = vector.shape_cast %271 : vector<16xf32> to vector<16x1xf32>
    %cst_111 = arith.constant 3.200000e+01 : f32
    %273 = vector.broadcast %cst_111 : f32 to vector<16x1xf32>
    %274 = arith.divf %272, %273 : vector<16x1xf32>
    %275 = vector.broadcast %274 : vector<16x1xf32> to vector<16x32xf32>
    %276 = arith.subf %270, %275 : vector<16x32xf32>
    %277 = arith.mulf %276, %276 : vector<16x32xf32>
    %cst_112 = arith.constant dense<0.000000e+00> : vector<16xf32>
    %278 = vector.multi_reduction <add>, %277, %cst_112 [1] : vector<16x32xf32> to vector<16xf32>
    %279 = vector.shape_cast %278 : vector<16xf32> to vector<16x1xf32>
    %cst_113 = arith.constant 3.200000e+01 : f32
    %280 = vector.broadcast %cst_113 : f32 to vector<16x1xf32>
    %281 = arith.divf %279, %280 : vector<16x1xf32>
    %282 = vector.broadcast %274 : vector<16x1xf32> to vector<16x32xf32>
    %283 = arith.subf %270, %282 : vector<16x32xf32>
    %cst_114 = arith.constant 9.99999974E-6 : f32
    %284 = vector.broadcast %cst_114 : f32 to vector<16x1xf32>
    %285 = arith.addf %281, %284 : vector<16x1xf32>
    %286 = math.rsqrt %285 : vector<16x1xf32>
    %287 = vector.broadcast %286 : vector<16x1xf32> to vector<16x32xf32>
    %288 = arith.mulf %283, %287 : vector<16x32xf32>
    %289 = vector.broadcast %175 : vector<1x32xf32> to vector<16x32xf32>
    %290 = arith.mulf %288, %289 : vector<16x32xf32>
    %291 = vector.broadcast %177 : vector<1x32xf32> to vector<16x32xf32>
    %292 = arith.addf %290, %291 : vector<16x32xf32>
    %293 = arith.truncf %292 : vector<16x32xf32> to vector<16x32xbf16>
    %cst_115 = arith.constant dense<0.000000e+00> : vector<16x256xf32>
    %294 = tpu.matmul %293, %179, %cst_115 {dimension_numbers = #tpu.dot_dimension_numbers<[1], [0], [0], [1], [0, 0, 1, 1], [], []>} : vector<16x32xbf16>, vector<32x256xbf16>, vector<16x256xf32> -> vector<16x256xf32>
    %295 = vector.broadcast %181 : vector<1x256xf32> to vector<16x256xf32>
    %296 = arith.addf %294, %295 : vector<16x256xf32>
    %297 = vector.extract_strided_slice %296 {offsets = [0, 0], sizes = [16, 128], strides = [1, 1]} : vector<16x256xf32> to vector<16x128xf32>
    %298 = vector.extract_strided_slice %296 {offsets = [0, 128], sizes = [16, 128], strides = [1, 1]} : vector<16x256xf32> to vector<16x128xf32>
    %cst_116 = arith.constant 5.000000e-01 : f32
    %299 = vector.broadcast %cst_116 : f32 to vector<16x128xf32>
    %300 = arith.mulf %299, %298 : vector<16x128xf32>
    %cst_117 = arith.constant 0.707106769 : f32
    %301 = vector.broadcast %cst_117 : f32 to vector<16x128xf32>
    %302 = arith.mulf %298, %301 : vector<16x128xf32>
    %303 = math.erf %302 : vector<16x128xf32>
    %cst_118 = arith.constant 1.000000e+00 : f32
    %304 = vector.broadcast %cst_118 : f32 to vector<16x128xf32>
    %305 = arith.addf %304, %303 : vector<16x128xf32>
    %306 = arith.mulf %300, %305 : vector<16x128xf32>
    %307 = arith.mulf %306, %297 : vector<16x128xf32>
    %308 = arith.truncf %307 : vector<16x128xf32> to vector<16x128xbf16>
    %cst_119 = arith.constant dense<0.000000e+00> : vector<16x32xf32>
    %309 = tpu.matmul %308, %183, %cst_119 {dimension_numbers = #tpu.dot_dimension_numbers<[1], [0], [0], [1], [0, 0, 1, 1], [], []>} : vector<16x128xbf16>, vector<128x32xbf16>, vector<16x32xf32> -> vector<16x32xf32>
    %310 = vector.broadcast %185 : vector<1x32xf32> to vector<16x32xf32>
    %311 = arith.addf %309, %310 : vector<16x32xf32>
    %312 = arith.addf %270, %311 : vector<16x32xf32>
    %c0_120 = arith.constant 0 : index
    %313 = memref.load %arg14[%c0_120] : memref<2xf32, #tpu.memory_space<smem>>
    %314 = vector.broadcast %313 : f32 to vector<16x32xf32>
    %315 = arith.mulf %314, %312 : vector<16x32xf32>
    %316 = arith.addf %1, %315 : vector<16x32xf32>
    %c1_121 = arith.constant 1 : index
    %c0_122 = arith.constant 0 : index
    %317 = vector.load %arg1[%c1_121, %c0_122] : memref<2x32xf32, #tpu.memory_space<vmem>>, vector<1x32xf32>
    %318 = vector.broadcast %317 : vector<1x32xf32> to vector<16x32xf32>
    %319 = arith.addf %316, %318 : vector<16x32xf32>
    %c0_123 = arith.constant 0 : index
    %c0_124 = arith.constant 0 : index
    %c0_125 = arith.constant 0 : index
    %320 = vector.load %arg2[%c0_123, %c0_124, %c0_125] : memref<2x1x32xf32, #tpu.memory_space<vmem>>, vector<1x1x32xf32>
    %321 = vector.shape_cast %320 : vector<1x1x32xf32> to vector<1x32xf32>
    %c0_126 = arith.constant 0 : index
    %c0_127 = arith.constant 0 : index
    %c0_128 = arith.constant 0 : index
    %322 = vector.load %arg3[%c0_126, %c0_127, %c0_128] : memref<2x1x32xf32, #tpu.memory_space<vmem>>, vector<1x1x32xf32>
    %323 = vector.shape_cast %322 : vector<1x1x32xf32> to vector<1x32xf32>
    %c0_129 = arith.constant 0 : index
    %c0_130 = arith.constant 0 : index
    %c0_131 = arith.constant 0 : index
    %324 = vector.load %arg4[%c0_129, %c0_130, %c0_131] : memref<2x32x96xbf16, #tpu.memory_space<vmem>>, vector<1x32x96xbf16>
    %325 = vector.shape_cast %324 : vector<1x32x96xbf16> to vector<32x96xbf16>
    %c0_132 = arith.constant 0 : index
    %c0_133 = arith.constant 0 : index
    %c0_134 = arith.constant 0 : index
    %326 = vector.load %arg5[%c0_132, %c0_133, %c0_134] : memref<2x1x96xf32, #tpu.memory_space<vmem>>, vector<1x1x96xf32>
    %327 = vector.shape_cast %326 : vector<1x1x96xf32> to vector<1x96xf32>
    %c0_135 = arith.constant 0 : index
    %c0_136 = arith.constant 0 : index
    %c0_137 = arith.constant 0 : index
    %328 = vector.load %arg6[%c0_135, %c0_136, %c0_137] : memref<2x32x32xbf16, #tpu.memory_space<vmem>>, vector<1x32x32xbf16>
    %329 = vector.shape_cast %328 : vector<1x32x32xbf16> to vector<32x32xbf16>
    %c0_138 = arith.constant 0 : index
    %c0_139 = arith.constant 0 : index
    %c0_140 = arith.constant 0 : index
    %330 = vector.load %arg7[%c0_138, %c0_139, %c0_140] : memref<2x1x32xf32, #tpu.memory_space<vmem>>, vector<1x1x32xf32>
    %331 = vector.shape_cast %330 : vector<1x1x32xf32> to vector<1x32xf32>
    %c0_141 = arith.constant 0 : index
    %c0_142 = arith.constant 0 : index
    %c0_143 = arith.constant 0 : index
    %332 = vector.load %arg8[%c0_141, %c0_142, %c0_143] : memref<2x1x32xf32, #tpu.memory_space<vmem>>, vector<1x1x32xf32>
    %333 = vector.shape_cast %332 : vector<1x1x32xf32> to vector<1x32xf32>
    %c0_144 = arith.constant 0 : index
    %c0_145 = arith.constant 0 : index
    %c0_146 = arith.constant 0 : index
    %334 = vector.load %arg9[%c0_144, %c0_145, %c0_146] : memref<2x1x32xf32, #tpu.memory_space<vmem>>, vector<1x1x32xf32>
    %335 = vector.shape_cast %334 : vector<1x1x32xf32> to vector<1x32xf32>
    %c0_147 = arith.constant 0 : index
    %c0_148 = arith.constant 0 : index
    %c0_149 = arith.constant 0 : index
    %336 = vector.load %arg10[%c0_147, %c0_148, %c0_149] : memref<2x32x256xbf16, #tpu.memory_space<vmem>>, vector<1x32x256xbf16>
    %337 = vector.shape_cast %336 : vector<1x32x256xbf16> to vector<32x256xbf16>
    %c0_150 = arith.constant 0 : index
    %c0_151 = arith.constant 0 : index
    %c0_152 = arith.constant 0 : index
    %338 = vector.load %arg11[%c0_150, %c0_151, %c0_152] : memref<2x1x256xf32, #tpu.memory_space<vmem>>, vector<1x1x256xf32>
    %339 = vector.shape_cast %338 : vector<1x1x256xf32> to vector<1x256xf32>
    %c0_153 = arith.constant 0 : index
    %c0_154 = arith.constant 0 : index
    %c0_155 = arith.constant 0 : index
    %340 = vector.load %arg12[%c0_153, %c0_154, %c0_155] : memref<2x128x32xbf16, #tpu.memory_space<vmem>>, vector<1x128x32xbf16>
    %341 = vector.shape_cast %340 : vector<1x128x32xbf16> to vector<128x32xbf16>
    %c0_156 = arith.constant 0 : index
    %c0_157 = arith.constant 0 : index
    %c0_158 = arith.constant 0 : index
    %342 = vector.load %arg13[%c0_156, %c0_157, %c0_158] : memref<2x1x32xf32, #tpu.memory_space<vmem>>, vector<1x1x32xf32>
    %343 = vector.shape_cast %342 : vector<1x1x32xf32> to vector<1x32xf32>
    %cst_159 = arith.constant dense<0.000000e+00> : vector<16xf32>
    %344 = vector.multi_reduction <add>, %319, %cst_159 [1] : vector<16x32xf32> to vector<16xf32>
    %345 = vector.shape_cast %344 : vector<16xf32> to vector<16x1xf32>
    %cst_160 = arith.constant 3.200000e+01 : f32
    %346 = vector.broadcast %cst_160 : f32 to vector<16x1xf32>
    %347 = arith.divf %345, %346 : vector<16x1xf32>
    %348 = vector.broadcast %347 : vector<16x1xf32> to vector<16x32xf32>
    %349 = arith.subf %319, %348 : vector<16x32xf32>
    %350 = arith.mulf %349, %349 : vector<16x32xf32>
    %cst_161 = arith.constant dense<0.000000e+00> : vector<16xf32>
    %351 = vector.multi_reduction <add>, %350, %cst_161 [1] : vector<16x32xf32> to vector<16xf32>
    %352 = vector.shape_cast %351 : vector<16xf32> to vector<16x1xf32>
    %cst_162 = arith.constant 3.200000e+01 : f32
    %353 = vector.broadcast %cst_162 : f32 to vector<16x1xf32>
    %354 = arith.divf %352, %353 : vector<16x1xf32>
    %355 = vector.broadcast %347 : vector<16x1xf32> to vector<16x32xf32>
    %356 = arith.subf %319, %355 : vector<16x32xf32>
    %cst_163 = arith.constant 9.99999974E-6 : f32
    %357 = vector.broadcast %cst_163 : f32 to vector<16x1xf32>
    %358 = arith.addf %354, %357 : vector<16x1xf32>
    %359 = math.rsqrt %358 : vector<16x1xf32>
    %360 = vector.broadcast %359 : vector<16x1xf32> to vector<16x32xf32>
    %361 = arith.mulf %356, %360 : vector<16x32xf32>
    %362 = vector.broadcast %321 : vector<1x32xf32> to vector<16x32xf32>
    %363 = arith.mulf %361, %362 : vector<16x32xf32>
    %364 = vector.broadcast %323 : vector<1x32xf32> to vector<16x32xf32>
    %365 = arith.addf %363, %364 : vector<16x32xf32>
    %366 = arith.truncf %365 : vector<16x32xf32> to vector<16x32xbf16>
    %cst_164 = arith.constant dense<0.000000e+00> : vector<16x96xf32>
    %367 = tpu.matmul %366, %325, %cst_164 {dimension_numbers = #tpu.dot_dimension_numbers<[1], [0], [0], [1], [0, 0, 1, 1], [], []>} : vector<16x32xbf16>, vector<32x96xbf16>, vector<16x96xf32> -> vector<16x96xf32>
    %368 = vector.broadcast %327 : vector<1x96xf32> to vector<16x96xf32>
    %369 = arith.addf %367, %368 : vector<16x96xf32>
    %370 = vector.extract_strided_slice %369 {offsets = [0, 0], sizes = [16, 8], strides = [1, 1]} : vector<16x96xf32> to vector<16x8xf32>
    %371 = vector.shape_cast %370 : vector<16x8xf32> to vector<2x8x8xf32>
    %372 = vector.extract_strided_slice %369 {offsets = [0, 8], sizes = [16, 8], strides = [1, 1]} : vector<16x96xf32> to vector<16x8xf32>
    %373 = vector.shape_cast %372 : vector<16x8xf32> to vector<2x8x8xf32>
    %374 = vector.extract_strided_slice %369 {offsets = [0, 16], sizes = [16, 8], strides = [1, 1]} : vector<16x96xf32> to vector<16x8xf32>
    %375 = vector.shape_cast %374 : vector<16x8xf32> to vector<2x8x8xf32>
    %376 = vector.extract_strided_slice %369 {offsets = [0, 24], sizes = [16, 8], strides = [1, 1]} : vector<16x96xf32> to vector<16x8xf32>
    %377 = vector.shape_cast %376 : vector<16x8xf32> to vector<2x8x8xf32>
    %378 = tpu.concatenate %371, %373, %375, %377 in 0 : vector<2x8x8xf32>, vector<2x8x8xf32>, vector<2x8x8xf32>, vector<2x8x8xf32> -> vector<8x8x8xf32>
    %379 = arith.truncf %378 : vector<8x8x8xf32> to vector<8x8x8xbf16>
    %380 = vector.extract_strided_slice %369 {offsets = [0, 32], sizes = [16, 8], strides = [1, 1]} : vector<16x96xf32> to vector<16x8xf32>
    %381 = vector.shape_cast %380 : vector<16x8xf32> to vector<2x8x8xf32>
    %382 = vector.extract_strided_slice %369 {offsets = [0, 40], sizes = [16, 8], strides = [1, 1]} : vector<16x96xf32> to vector<16x8xf32>
    %383 = vector.shape_cast %382 : vector<16x8xf32> to vector<2x8x8xf32>
    %384 = vector.extract_strided_slice %369 {offsets = [0, 48], sizes = [16, 8], strides = [1, 1]} : vector<16x96xf32> to vector<16x8xf32>
    %385 = vector.shape_cast %384 : vector<16x8xf32> to vector<2x8x8xf32>
    %386 = vector.extract_strided_slice %369 {offsets = [0, 56], sizes = [16, 8], strides = [1, 1]} : vector<16x96xf32> to vector<16x8xf32>
    %387 = vector.shape_cast %386 : vector<16x8xf32> to vector<2x8x8xf32>
    %388 = tpu.concatenate %381, %383, %385, %387 in 0 : vector<2x8x8xf32>, vector<2x8x8xf32>, vector<2x8x8xf32>, vector<2x8x8xf32> -> vector<8x8x8xf32>
    %389 = arith.truncf %388 : vector<8x8x8xf32> to vector<8x8x8xbf16>
    %390 = vector.extract_strided_slice %369 {offsets = [0, 64], sizes = [16, 8], strides = [1, 1]} : vector<16x96xf32> to vector<16x8xf32>
    %391 = vector.shape_cast %390 : vector<16x8xf32> to vector<2x8x8xf32>
    %392 = vector.extract_strided_slice %369 {offsets = [0, 72], sizes = [16, 8], strides = [1, 1]} : vector<16x96xf32> to vector<16x8xf32>
    %393 = vector.shape_cast %392 : vector<16x8xf32> to vector<2x8x8xf32>
    %394 = vector.extract_strided_slice %369 {offsets = [0, 80], sizes = [16, 8], strides = [1, 1]} : vector<16x96xf32> to vector<16x8xf32>
    %395 = vector.shape_cast %394 : vector<16x8xf32> to vector<2x8x8xf32>
    %396 = vector.extract_strided_slice %369 {offsets = [0, 88], sizes = [16, 8], strides = [1, 1]} : vector<16x96xf32> to vector<16x8xf32>
    %397 = vector.shape_cast %396 : vector<16x8xf32> to vector<2x8x8xf32>
    %398 = tpu.concatenate %391, %393, %395, %397 in 0 : vector<2x8x8xf32>, vector<2x8x8xf32>, vector<2x8x8xf32>, vector<2x8x8xf32> -> vector<8x8x8xf32>
    %399 = arith.truncf %398 : vector<8x8x8xf32> to vector<8x8x8xbf16>
    "tpu.trace_start"() <{level = 10 : i32, message = "btd,bsd->bts"}> : () -> ()
    %cst_165 = arith.constant dense<0.000000e+00> : vector<8x8x8xf32>
    %400 = tpu.matmul %379, %389, %cst_165 {dimension_numbers = #tpu.dot_dimension_numbers<[2], [2], [1], [1], [0, 0, 0, 1, 1, 1], [0], [0]>} : vector<8x8x8xbf16>, vector<8x8x8xbf16>, vector<8x8x8xf32> -> vector<8x8x8xf32>
    "tpu.trace_stop"() : () -> ()
    %cst_166 = arith.constant 0.353553385 : f32
    %401 = vector.broadcast %cst_166 : f32 to vector<8x8x8xf32>
    %402 = arith.mulf %400, %401 : vector<8x8x8xf32>
    %403 = vector.shape_cast %7 : vector<8x8xf32> to vector<1x8x8xf32>
    %404 = vector.broadcast %403 : vector<1x8x8xf32> to vector<8x8x8xf32>
    %405 = arith.addf %402, %404 : vector<8x8x8xf32>
    %cst_167 = arith.constant dense<0xFF800000> : vector<8x8xf32>
    %406 = vector.multi_reduction <maximumf>, %405, %cst_167 [2] : vector<8x8x8xf32> to vector<8x8xf32>
    %407 = vector.shape_cast %406 : vector<8x8xf32> to vector<8x8x1xf32>
    %408 = vector.broadcast %407 : vector<8x8x1xf32> to vector<8x8x8xf32>
    %409 = arith.subf %405, %408 : vector<8x8x8xf32>
    %410 = math.exp %409 : vector<8x8x8xf32>
    %cst_168 = arith.constant dense<0.000000e+00> : vector<8x8xf32>
    %411 = vector.multi_reduction <add>, %410, %cst_168 [2] : vector<8x8x8xf32> to vector<8x8xf32>
    %412 = vector.shape_cast %411 : vector<8x8xf32> to vector<8x8x1xf32>
    %413 = tpu.reciprocal %412 {approx = true} : vector<8x8x1xf32> -> vector<8x8x1xf32>
    %414 = vector.broadcast %413 : vector<8x8x1xf32> to vector<8x8x8xf32>
    %415 = arith.mulf %410, %414 : vector<8x8x8xf32>
    %416 = arith.truncf %415 : vector<8x8x8xf32> to vector<8x8x8xbf16>
    "tpu.trace_start"() <{level = 10 : i32, message = "bts,bsd->btd"}> : () -> ()
    %cst_169 = arith.constant dense<0.000000e+00> : vector<8x8x8xf32>
    %417 = tpu.matmul %416, %399, %cst_169 {dimension_numbers = #tpu.dot_dimension_numbers<[2], [1], [1], [2], [0, 0, 0, 1, 1, 2], [0], [0]>} : vector<8x8x8xbf16>, vector<8x8x8xbf16>, vector<8x8x8xf32> -> vector<8x8x8xf32>
    "tpu.trace_stop"() : () -> ()
    %418 = vector.extract_strided_slice %417 {offsets = [0, 0, 0], sizes = [2, 8, 8], strides = [1, 1, 1]} : vector<8x8x8xf32> to vector<2x8x8xf32>
    %419 = vector.extract_strided_slice %417 {offsets = [2, 0, 0], sizes = [2, 8, 8], strides = [1, 1, 1]} : vector<8x8x8xf32> to vector<2x8x8xf32>
    %420 = vector.extract_strided_slice %417 {offsets = [4, 0, 0], sizes = [2, 8, 8], strides = [1, 1, 1]} : vector<8x8x8xf32> to vector<2x8x8xf32>
    %421 = vector.extract_strided_slice %417 {offsets = [6, 0, 0], sizes = [2, 8, 8], strides = [1, 1, 1]} : vector<8x8x8xf32> to vector<2x8x8xf32>
    %422 = tpu.concatenate %418, %419, %420, %421 in 2 : vector<2x8x8xf32>, vector<2x8x8xf32>, vector<2x8x8xf32>, vector<2x8x8xf32> -> vector<2x8x32xf32>
    %423 = vector.shape_cast %422 : vector<2x8x32xf32> to vector<16x32xf32>
    %424 = arith.truncf %423 : vector<16x32xf32> to vector<16x32xbf16>
    %cst_170 = arith.constant dense<0.000000e+00> : vector<16x32xf32>
    %425 = tpu.matmul %424, %329, %cst_170 {dimension_numbers = #tpu.dot_dimension_numbers<[1], [0], [0], [1], [0, 0, 1, 1], [], []>} : vector<16x32xbf16>, vector<32x32xbf16>, vector<16x32xf32> -> vector<16x32xf32>
    %426 = vector.broadcast %331 : vector<1x32xf32> to vector<16x32xf32>
    %427 = arith.addf %425, %426 : vector<16x32xf32>
    %428 = arith.addf %319, %427 : vector<16x32xf32>
    %cst_171 = arith.constant dense<0.000000e+00> : vector<16xf32>
    %429 = vector.multi_reduction <add>, %428, %cst_171 [1] : vector<16x32xf32> to vector<16xf32>
    %430 = vector.shape_cast %429 : vector<16xf32> to vector<16x1xf32>
    %cst_172 = arith.constant 3.200000e+01 : f32
    %431 = vector.broadcast %cst_172 : f32 to vector<16x1xf32>
    %432 = arith.divf %430, %431 : vector<16x1xf32>
    %433 = vector.broadcast %432 : vector<16x1xf32> to vector<16x32xf32>
    %434 = arith.subf %428, %433 : vector<16x32xf32>
    %435 = arith.mulf %434, %434 : vector<16x32xf32>
    %cst_173 = arith.constant dense<0.000000e+00> : vector<16xf32>
    %436 = vector.multi_reduction <add>, %435, %cst_173 [1] : vector<16x32xf32> to vector<16xf32>
    %437 = vector.shape_cast %436 : vector<16xf32> to vector<16x1xf32>
    %cst_174 = arith.constant 3.200000e+01 : f32
    %438 = vector.broadcast %cst_174 : f32 to vector<16x1xf32>
    %439 = arith.divf %437, %438 : vector<16x1xf32>
    %440 = vector.broadcast %432 : vector<16x1xf32> to vector<16x32xf32>
    %441 = arith.subf %428, %440 : vector<16x32xf32>
    %cst_175 = arith.constant 9.99999974E-6 : f32
    %442 = vector.broadcast %cst_175 : f32 to vector<16x1xf32>
    %443 = arith.addf %439, %442 : vector<16x1xf32>
    %444 = math.rsqrt %443 : vector<16x1xf32>
    %445 = vector.broadcast %444 : vector<16x1xf32> to vector<16x32xf32>
    %446 = arith.mulf %441, %445 : vector<16x32xf32>
    %447 = vector.broadcast %333 : vector<1x32xf32> to vector<16x32xf32>
    %448 = arith.mulf %446, %447 : vector<16x32xf32>
    %449 = vector.broadcast %335 : vector<1x32xf32> to vector<16x32xf32>
    %450 = arith.addf %448, %449 : vector<16x32xf32>
    %451 = arith.truncf %450 : vector<16x32xf32> to vector<16x32xbf16>
    %cst_176 = arith.constant dense<0.000000e+00> : vector<16x256xf32>
    %452 = tpu.matmul %451, %337, %cst_176 {dimension_numbers = #tpu.dot_dimension_numbers<[1], [0], [0], [1], [0, 0, 1, 1], [], []>} : vector<16x32xbf16>, vector<32x256xbf16>, vector<16x256xf32> -> vector<16x256xf32>
    %453 = vector.broadcast %339 : vector<1x256xf32> to vector<16x256xf32>
    %454 = arith.addf %452, %453 : vector<16x256xf32>
    %455 = vector.extract_strided_slice %454 {offsets = [0, 0], sizes = [16, 128], strides = [1, 1]} : vector<16x256xf32> to vector<16x128xf32>
    %456 = vector.extract_strided_slice %454 {offsets = [0, 128], sizes = [16, 128], strides = [1, 1]} : vector<16x256xf32> to vector<16x128xf32>
    %cst_177 = arith.constant 5.000000e-01 : f32
    %457 = vector.broadcast %cst_177 : f32 to vector<16x128xf32>
    %458 = arith.mulf %457, %456 : vector<16x128xf32>
    %cst_178 = arith.constant 0.707106769 : f32
    %459 = vector.broadcast %cst_178 : f32 to vector<16x128xf32>
    %460 = arith.mulf %456, %459 : vector<16x128xf32>
    %461 = math.erf %460 : vector<16x128xf32>
    %cst_179 = arith.constant 1.000000e+00 : f32
    %462 = vector.broadcast %cst_179 : f32 to vector<16x128xf32>
    %463 = arith.addf %462, %461 : vector<16x128xf32>
    %464 = arith.mulf %458, %463 : vector<16x128xf32>
    %465 = arith.mulf %464, %455 : vector<16x128xf32>
    %466 = arith.truncf %465 : vector<16x128xf32> to vector<16x128xbf16>
    %cst_180 = arith.constant dense<0.000000e+00> : vector<16x32xf32>
    %467 = tpu.matmul %466, %341, %cst_180 {dimension_numbers = #tpu.dot_dimension_numbers<[1], [0], [0], [1], [0, 0, 1, 1], [], []>} : vector<16x128xbf16>, vector<128x32xbf16>, vector<16x32xf32> -> vector<16x32xf32>
    %468 = vector.broadcast %343 : vector<1x32xf32> to vector<16x32xf32>
    %469 = arith.addf %467, %468 : vector<16x32xf32>
    %470 = arith.addf %428, %469 : vector<16x32xf32>
    %c1_181 = arith.constant 1 : index
    %c0_182 = arith.constant 0 : index
    %c0_183 = arith.constant 0 : index
    %471 = vector.load %arg2[%c1_181, %c0_182, %c0_183] : memref<2x1x32xf32, #tpu.memory_space<vmem>>, vector<1x1x32xf32>
    %472 = vector.shape_cast %471 : vector<1x1x32xf32> to vector<1x32xf32>
    %c1_184 = arith.constant 1 : index
    %c0_185 = arith.constant 0 : index
    %c0_186 = arith.constant 0 : index
    %473 = vector.load %arg3[%c1_184, %c0_185, %c0_186] : memref<2x1x32xf32, #tpu.memory_space<vmem>>, vector<1x1x32xf32>
    %474 = vector.shape_cast %473 : vector<1x1x32xf32> to vector<1x32xf32>
    %c1_187 = arith.constant 1 : index
    %c0_188 = arith.constant 0 : index
    %c0_189 = arith.constant 0 : index
    %475 = vector.load %arg4[%c1_187, %c0_188, %c0_189] : memref<2x32x96xbf16, #tpu.memory_space<vmem>>, vector<1x32x96xbf16>
    %476 = vector.shape_cast %475 : vector<1x32x96xbf16> to vector<32x96xbf16>
    %c1_190 = arith.constant 1 : index
    %c0_191 = arith.constant 0 : index
    %c0_192 = arith.constant 0 : index
    %477 = vector.load %arg5[%c1_190, %c0_191, %c0_192] : memref<2x1x96xf32, #tpu.memory_space<vmem>>, vector<1x1x96xf32>
    %478 = vector.shape_cast %477 : vector<1x1x96xf32> to vector<1x96xf32>
    %c1_193 = arith.constant 1 : index
    %c0_194 = arith.constant 0 : index
    %c0_195 = arith.constant 0 : index
    %479 = vector.load %arg6[%c1_193, %c0_194, %c0_195] : memref<2x32x32xbf16, #tpu.memory_space<vmem>>, vector<1x32x32xbf16>
    %480 = vector.shape_cast %479 : vector<1x32x32xbf16> to vector<32x32xbf16>
    %c1_196 = arith.constant 1 : index
    %c0_197 = arith.constant 0 : index
    %c0_198 = arith.constant 0 : index
    %481 = vector.load %arg7[%c1_196, %c0_197, %c0_198] : memref<2x1x32xf32, #tpu.memory_space<vmem>>, vector<1x1x32xf32>
    %482 = vector.shape_cast %481 : vector<1x1x32xf32> to vector<1x32xf32>
    %c1_199 = arith.constant 1 : index
    %c0_200 = arith.constant 0 : index
    %c0_201 = arith.constant 0 : index
    %483 = vector.load %arg8[%c1_199, %c0_200, %c0_201] : memref<2x1x32xf32, #tpu.memory_space<vmem>>, vector<1x1x32xf32>
    %484 = vector.shape_cast %483 : vector<1x1x32xf32> to vector<1x32xf32>
    %c1_202 = arith.constant 1 : index
    %c0_203 = arith.constant 0 : index
    %c0_204 = arith.constant 0 : index
    %485 = vector.load %arg9[%c1_202, %c0_203, %c0_204] : memref<2x1x32xf32, #tpu.memory_space<vmem>>, vector<1x1x32xf32>
    %486 = vector.shape_cast %485 : vector<1x1x32xf32> to vector<1x32xf32>
    %c1_205 = arith.constant 1 : index
    %c0_206 = arith.constant 0 : index
    %c0_207 = arith.constant 0 : index
    %487 = vector.load %arg10[%c1_205, %c0_206, %c0_207] : memref<2x32x256xbf16, #tpu.memory_space<vmem>>, vector<1x32x256xbf16>
    %488 = vector.shape_cast %487 : vector<1x32x256xbf16> to vector<32x256xbf16>
    %c1_208 = arith.constant 1 : index
    %c0_209 = arith.constant 0 : index
    %c0_210 = arith.constant 0 : index
    %489 = vector.load %arg11[%c1_208, %c0_209, %c0_210] : memref<2x1x256xf32, #tpu.memory_space<vmem>>, vector<1x1x256xf32>
    %490 = vector.shape_cast %489 : vector<1x1x256xf32> to vector<1x256xf32>
    %c1_211 = arith.constant 1 : index
    %c0_212 = arith.constant 0 : index
    %c0_213 = arith.constant 0 : index
    %491 = vector.load %arg12[%c1_211, %c0_212, %c0_213] : memref<2x128x32xbf16, #tpu.memory_space<vmem>>, vector<1x128x32xbf16>
    %492 = vector.shape_cast %491 : vector<1x128x32xbf16> to vector<128x32xbf16>
    %c1_214 = arith.constant 1 : index
    %c0_215 = arith.constant 0 : index
    %c0_216 = arith.constant 0 : index
    %493 = vector.load %arg13[%c1_214, %c0_215, %c0_216] : memref<2x1x32xf32, #tpu.memory_space<vmem>>, vector<1x1x32xf32>
    %494 = vector.shape_cast %493 : vector<1x1x32xf32> to vector<1x32xf32>
    %cst_217 = arith.constant dense<0.000000e+00> : vector<16xf32>
    %495 = vector.multi_reduction <add>, %470, %cst_217 [1] : vector<16x32xf32> to vector<16xf32>
    %496 = vector.shape_cast %495 : vector<16xf32> to vector<16x1xf32>
    %cst_218 = arith.constant 3.200000e+01 : f32
    %497 = vector.broadcast %cst_218 : f32 to vector<16x1xf32>
    %498 = arith.divf %496, %497 : vector<16x1xf32>
    %499 = vector.broadcast %498 : vector<16x1xf32> to vector<16x32xf32>
    %500 = arith.subf %470, %499 : vector<16x32xf32>
    %501 = arith.mulf %500, %500 : vector<16x32xf32>
    %cst_219 = arith.constant dense<0.000000e+00> : vector<16xf32>
    %502 = vector.multi_reduction <add>, %501, %cst_219 [1] : vector<16x32xf32> to vector<16xf32>
    %503 = vector.shape_cast %502 : vector<16xf32> to vector<16x1xf32>
    %cst_220 = arith.constant 3.200000e+01 : f32
    %504 = vector.broadcast %cst_220 : f32 to vector<16x1xf32>
    %505 = arith.divf %503, %504 : vector<16x1xf32>
    %506 = vector.broadcast %498 : vector<16x1xf32> to vector<16x32xf32>
    %507 = arith.subf %470, %506 : vector<16x32xf32>
    %cst_221 = arith.constant 9.99999974E-6 : f32
    %508 = vector.broadcast %cst_221 : f32 to vector<16x1xf32>
    %509 = arith.addf %505, %508 : vector<16x1xf32>
    %510 = math.rsqrt %509 : vector<16x1xf32>
    %511 = vector.broadcast %510 : vector<16x1xf32> to vector<16x32xf32>
    %512 = arith.mulf %507, %511 : vector<16x32xf32>
    %513 = vector.broadcast %472 : vector<1x32xf32> to vector<16x32xf32>
    %514 = arith.mulf %512, %513 : vector<16x32xf32>
    %515 = vector.broadcast %474 : vector<1x32xf32> to vector<16x32xf32>
    %516 = arith.addf %514, %515 : vector<16x32xf32>
    %517 = arith.truncf %516 : vector<16x32xf32> to vector<16x32xbf16>
    %cst_222 = arith.constant dense<0.000000e+00> : vector<16x96xf32>
    %518 = tpu.matmul %517, %476, %cst_222 {dimension_numbers = #tpu.dot_dimension_numbers<[1], [0], [0], [1], [0, 0, 1, 1], [], []>} : vector<16x32xbf16>, vector<32x96xbf16>, vector<16x96xf32> -> vector<16x96xf32>
    %519 = vector.broadcast %478 : vector<1x96xf32> to vector<16x96xf32>
    %520 = arith.addf %518, %519 : vector<16x96xf32>
    %521 = vector.extract_strided_slice %520 {offsets = [0, 0], sizes = [16, 8], strides = [1, 1]} : vector<16x96xf32> to vector<16x8xf32>
    %522 = vector.shape_cast %521 : vector<16x8xf32> to vector<2x8x8xf32>
    %523 = vector.extract_strided_slice %520 {offsets = [0, 8], sizes = [16, 8], strides = [1, 1]} : vector<16x96xf32> to vector<16x8xf32>
    %524 = vector.shape_cast %523 : vector<16x8xf32> to vector<2x8x8xf32>
    %525 = vector.extract_strided_slice %520 {offsets = [0, 16], sizes = [16, 8], strides = [1, 1]} : vector<16x96xf32> to vector<16x8xf32>
    %526 = vector.shape_cast %525 : vector<16x8xf32> to vector<2x8x8xf32>
    %527 = vector.extract_strided_slice %520 {offsets = [0, 24], sizes = [16, 8], strides = [1, 1]} : vector<16x96xf32> to vector<16x8xf32>
    %528 = vector.shape_cast %527 : vector<16x8xf32> to vector<2x8x8xf32>
    %529 = tpu.concatenate %522, %524, %526, %528 in 0 : vector<2x8x8xf32>, vector<2x8x8xf32>, vector<2x8x8xf32>, vector<2x8x8xf32> -> vector<8x8x8xf32>
    %530 = arith.truncf %529 : vector<8x8x8xf32> to vector<8x8x8xbf16>
    %531 = vector.extract_strided_slice %520 {offsets = [0, 32], sizes = [16, 8], strides = [1, 1]} : vector<16x96xf32> to vector<16x8xf32>
    %532 = vector.shape_cast %531 : vector<16x8xf32> to vector<2x8x8xf32>
    %533 = vector.extract_strided_slice %520 {offsets = [0, 40], sizes = [16, 8], strides = [1, 1]} : vector<16x96xf32> to vector<16x8xf32>
    %534 = vector.shape_cast %533 : vector<16x8xf32> to vector<2x8x8xf32>
    %535 = vector.extract_strided_slice %520 {offsets = [0, 48], sizes = [16, 8], strides = [1, 1]} : vector<16x96xf32> to vector<16x8xf32>
    %536 = vector.shape_cast %535 : vector<16x8xf32> to vector<2x8x8xf32>
    %537 = vector.extract_strided_slice %520 {offsets = [0, 56], sizes = [16, 8], strides = [1, 1]} : vector<16x96xf32> to vector<16x8xf32>
    %538 = vector.shape_cast %537 : vector<16x8xf32> to vector<2x8x8xf32>
    %539 = tpu.concatenate %532, %534, %536, %538 in 0 : vector<2x8x8xf32>, vector<2x8x8xf32>, vector<2x8x8xf32>, vector<2x8x8xf32> -> vector<8x8x8xf32>
    %540 = arith.truncf %539 : vector<8x8x8xf32> to vector<8x8x8xbf16>
    %541 = vector.extract_strided_slice %520 {offsets = [0, 64], sizes = [16, 8], strides = [1, 1]} : vector<16x96xf32> to vector<16x8xf32>
    %542 = vector.shape_cast %541 : vector<16x8xf32> to vector<2x8x8xf32>
    %543 = vector.extract_strided_slice %520 {offsets = [0, 72], sizes = [16, 8], strides = [1, 1]} : vector<16x96xf32> to vector<16x8xf32>
    %544 = vector.shape_cast %543 : vector<16x8xf32> to vector<2x8x8xf32>
    %545 = vector.extract_strided_slice %520 {offsets = [0, 80], sizes = [16, 8], strides = [1, 1]} : vector<16x96xf32> to vector<16x8xf32>
    %546 = vector.shape_cast %545 : vector<16x8xf32> to vector<2x8x8xf32>
    %547 = vector.extract_strided_slice %520 {offsets = [0, 88], sizes = [16, 8], strides = [1, 1]} : vector<16x96xf32> to vector<16x8xf32>
    %548 = vector.shape_cast %547 : vector<16x8xf32> to vector<2x8x8xf32>
    %549 = tpu.concatenate %542, %544, %546, %548 in 0 : vector<2x8x8xf32>, vector<2x8x8xf32>, vector<2x8x8xf32>, vector<2x8x8xf32> -> vector<8x8x8xf32>
    %550 = arith.truncf %549 : vector<8x8x8xf32> to vector<8x8x8xbf16>
    "tpu.trace_start"() <{level = 10 : i32, message = "btd,bsd->bts"}> : () -> ()
    %cst_223 = arith.constant dense<0.000000e+00> : vector<8x8x8xf32>
    %551 = tpu.matmul %530, %540, %cst_223 {dimension_numbers = #tpu.dot_dimension_numbers<[2], [2], [1], [1], [0, 0, 0, 1, 1, 1], [0], [0]>} : vector<8x8x8xbf16>, vector<8x8x8xbf16>, vector<8x8x8xf32> -> vector<8x8x8xf32>
    "tpu.trace_stop"() : () -> ()
    %cst_224 = arith.constant 0.353553385 : f32
    %552 = vector.broadcast %cst_224 : f32 to vector<8x8x8xf32>
    %553 = arith.mulf %551, %552 : vector<8x8x8xf32>
    %554 = vector.shape_cast %7 : vector<8x8xf32> to vector<1x8x8xf32>
    %555 = vector.broadcast %554 : vector<1x8x8xf32> to vector<8x8x8xf32>
    %556 = arith.addf %553, %555 : vector<8x8x8xf32>
    %cst_225 = arith.constant dense<0xFF800000> : vector<8x8xf32>
    %557 = vector.multi_reduction <maximumf>, %556, %cst_225 [2] : vector<8x8x8xf32> to vector<8x8xf32>
    %558 = vector.shape_cast %557 : vector<8x8xf32> to vector<8x8x1xf32>
    %559 = vector.broadcast %558 : vector<8x8x1xf32> to vector<8x8x8xf32>
    %560 = arith.subf %556, %559 : vector<8x8x8xf32>
    %561 = math.exp %560 : vector<8x8x8xf32>
    %cst_226 = arith.constant dense<0.000000e+00> : vector<8x8xf32>
    %562 = vector.multi_reduction <add>, %561, %cst_226 [2] : vector<8x8x8xf32> to vector<8x8xf32>
    %563 = vector.shape_cast %562 : vector<8x8xf32> to vector<8x8x1xf32>
    %564 = tpu.reciprocal %563 {approx = true} : vector<8x8x1xf32> -> vector<8x8x1xf32>
    %565 = vector.broadcast %564 : vector<8x8x1xf32> to vector<8x8x8xf32>
    %566 = arith.mulf %561, %565 : vector<8x8x8xf32>
    %567 = arith.truncf %566 : vector<8x8x8xf32> to vector<8x8x8xbf16>
    "tpu.trace_start"() <{level = 10 : i32, message = "bts,bsd->btd"}> : () -> ()
    %cst_227 = arith.constant dense<0.000000e+00> : vector<8x8x8xf32>
    %568 = tpu.matmul %567, %550, %cst_227 {dimension_numbers = #tpu.dot_dimension_numbers<[2], [1], [1], [2], [0, 0, 0, 1, 1, 2], [0], [0]>} : vector<8x8x8xbf16>, vector<8x8x8xbf16>, vector<8x8x8xf32> -> vector<8x8x8xf32>
    "tpu.trace_stop"() : () -> ()
    %569 = vector.extract_strided_slice %568 {offsets = [0, 0, 0], sizes = [2, 8, 8], strides = [1, 1, 1]} : vector<8x8x8xf32> to vector<2x8x8xf32>
    %570 = vector.extract_strided_slice %568 {offsets = [2, 0, 0], sizes = [2, 8, 8], strides = [1, 1, 1]} : vector<8x8x8xf32> to vector<2x8x8xf32>
    %571 = vector.extract_strided_slice %568 {offsets = [4, 0, 0], sizes = [2, 8, 8], strides = [1, 1, 1]} : vector<8x8x8xf32> to vector<2x8x8xf32>
    %572 = vector.extract_strided_slice %568 {offsets = [6, 0, 0], sizes = [2, 8, 8], strides = [1, 1, 1]} : vector<8x8x8xf32> to vector<2x8x8xf32>
    %573 = tpu.concatenate %569, %570, %571, %572 in 2 : vector<2x8x8xf32>, vector<2x8x8xf32>, vector<2x8x8xf32>, vector<2x8x8xf32> -> vector<2x8x32xf32>
    %574 = vector.shape_cast %573 : vector<2x8x32xf32> to vector<16x32xf32>
    %575 = arith.truncf %574 : vector<16x32xf32> to vector<16x32xbf16>
    %cst_228 = arith.constant dense<0.000000e+00> : vector<16x32xf32>
    %576 = tpu.matmul %575, %480, %cst_228 {dimension_numbers = #tpu.dot_dimension_numbers<[1], [0], [0], [1], [0, 0, 1, 1], [], []>} : vector<16x32xbf16>, vector<32x32xbf16>, vector<16x32xf32> -> vector<16x32xf32>
    %577 = vector.broadcast %482 : vector<1x32xf32> to vector<16x32xf32>
    %578 = arith.addf %576, %577 : vector<16x32xf32>
    %579 = arith.addf %470, %578 : vector<16x32xf32>
    %cst_229 = arith.constant dense<0.000000e+00> : vector<16xf32>
    %580 = vector.multi_reduction <add>, %579, %cst_229 [1] : vector<16x32xf32> to vector<16xf32>
    %581 = vector.shape_cast %580 : vector<16xf32> to vector<16x1xf32>
    %cst_230 = arith.constant 3.200000e+01 : f32
    %582 = vector.broadcast %cst_230 : f32 to vector<16x1xf32>
    %583 = arith.divf %581, %582 : vector<16x1xf32>
    %584 = vector.broadcast %583 : vector<16x1xf32> to vector<16x32xf32>
    %585 = arith.subf %579, %584 : vector<16x32xf32>
    %586 = arith.mulf %585, %585 : vector<16x32xf32>
    %cst_231 = arith.constant dense<0.000000e+00> : vector<16xf32>
    %587 = vector.multi_reduction <add>, %586, %cst_231 [1] : vector<16x32xf32> to vector<16xf32>
    %588 = vector.shape_cast %587 : vector<16xf32> to vector<16x1xf32>
    %cst_232 = arith.constant 3.200000e+01 : f32
    %589 = vector.broadcast %cst_232 : f32 to vector<16x1xf32>
    %590 = arith.divf %588, %589 : vector<16x1xf32>
    %591 = vector.broadcast %583 : vector<16x1xf32> to vector<16x32xf32>
    %592 = arith.subf %579, %591 : vector<16x32xf32>
    %cst_233 = arith.constant 9.99999974E-6 : f32
    %593 = vector.broadcast %cst_233 : f32 to vector<16x1xf32>
    %594 = arith.addf %590, %593 : vector<16x1xf32>
    %595 = math.rsqrt %594 : vector<16x1xf32>
    %596 = vector.broadcast %595 : vector<16x1xf32> to vector<16x32xf32>
    %597 = arith.mulf %592, %596 : vector<16x32xf32>
    %598 = vector.broadcast %484 : vector<1x32xf32> to vector<16x32xf32>
    %599 = arith.mulf %597, %598 : vector<16x32xf32>
    %600 = vector.broadcast %486 : vector<1x32xf32> to vector<16x32xf32>
    %601 = arith.addf %599, %600 : vector<16x32xf32>
    %602 = arith.truncf %601 : vector<16x32xf32> to vector<16x32xbf16>
    %cst_234 = arith.constant dense<0.000000e+00> : vector<16x256xf32>
    %603 = tpu.matmul %602, %488, %cst_234 {dimension_numbers = #tpu.dot_dimension_numbers<[1], [0], [0], [1], [0, 0, 1, 1], [], []>} : vector<16x32xbf16>, vector<32x256xbf16>, vector<16x256xf32> -> vector<16x256xf32>
    %604 = vector.broadcast %490 : vector<1x256xf32> to vector<16x256xf32>
    %605 = arith.addf %603, %604 : vector<16x256xf32>
    %606 = vector.extract_strided_slice %605 {offsets = [0, 0], sizes = [16, 128], strides = [1, 1]} : vector<16x256xf32> to vector<16x128xf32>
    %607 = vector.extract_strided_slice %605 {offsets = [0, 128], sizes = [16, 128], strides = [1, 1]} : vector<16x256xf32> to vector<16x128xf32>
    %cst_235 = arith.constant 5.000000e-01 : f32
    %608 = vector.broadcast %cst_235 : f32 to vector<16x128xf32>
    %609 = arith.mulf %608, %607 : vector<16x128xf32>
    %cst_236 = arith.constant 0.707106769 : f32
    %610 = vector.broadcast %cst_236 : f32 to vector<16x128xf32>
    %611 = arith.mulf %607, %610 : vector<16x128xf32>
    %612 = math.erf %611 : vector<16x128xf32>
    %cst_237 = arith.constant 1.000000e+00 : f32
    %613 = vector.broadcast %cst_237 : f32 to vector<16x128xf32>
    %614 = arith.addf %613, %612 : vector<16x128xf32>
    %615 = arith.mulf %609, %614 : vector<16x128xf32>
    %616 = arith.mulf %615, %606 : vector<16x128xf32>
    %617 = arith.truncf %616 : vector<16x128xf32> to vector<16x128xbf16>
    %cst_238 = arith.constant dense<0.000000e+00> : vector<16x32xf32>
    %618 = tpu.matmul %617, %492, %cst_238 {dimension_numbers = #tpu.dot_dimension_numbers<[1], [0], [0], [1], [0, 0, 1, 1], [], []>} : vector<16x128xbf16>, vector<128x32xbf16>, vector<16x32xf32> -> vector<16x32xf32>
    %619 = vector.broadcast %494 : vector<1x32xf32> to vector<16x32xf32>
    %620 = arith.addf %618, %619 : vector<16x32xf32>
    %621 = arith.addf %579, %620 : vector<16x32xf32>
    %c1_239 = arith.constant 1 : index
    %622 = memref.load %arg14[%c1_239] : memref<2xf32, #tpu.memory_space<smem>>
    %623 = vector.broadcast %622 : f32 to vector<16x32xf32>
    %624 = arith.mulf %623, %621 : vector<16x32xf32>
    %625 = arith.addf %316, %624 : vector<16x32xf32>
    %626 = vector.shape_cast %625 : vector<16x32xf32> to vector<2x8x32xf32>
    %c0_240 = arith.constant 0 : index
    %c0_241 = arith.constant 0 : index
    %c0_242 = arith.constant 0 : index
    %627 = vector.load %arg15[%c0_240, %c0_241, %c0_242] : memref<2x8x32xf32, #tpu.memory_space<vmem>>, vector<2x8x32xf32>
    tpu.vector_store %arg15[%c0_240, %c0_241, %c0_242], %626 {strides = array<i32>} : memref<2x8x32xf32, #tpu.memory_space<vmem>>, vector<2x8x32xf32>,
    return
  }
}

</mosaic_0001>

<llo_original>
// kernel: tpu_custom_call.1
$region0: #{tpu_custom_call.1}
  #allocation0 [shape = 'u32[]', space=smem, size = 0x4, offset = 0x4, fixed_abs, tag = 'smem constant byte address 0x4 - core index']
  #allocation1 [shape = 'u32[72,128]{1,0:T(1,128)}', space=vmem, size = 0x9000, scoped, tag = 'internal scratch']
  %s0 = inlined_call_operand.vmem [shape: f32[2,8,32], index: 0, kind: input, shape index: {}]
  %s1 = inlined_call_operand.vmem [shape: f32[2,32], index: 1, kind: input, shape index: {}]
  %s2 = inlined_call_operand.vmem [shape: f32[2,1,32], index: 2, kind: input, shape index: {}]
  %s3 = inlined_call_operand.vmem [shape: f32[2,1,32], index: 3, kind: input, shape index: {}]
  %s4 = inlined_call_operand.vmem [shape: bf16[2,32,96], index: 4, kind: input, shape index: {}]
  %s5 = inlined_call_operand.vmem [shape: f32[2,1,96], index: 5, kind: input, shape index: {}]
  %s6 = inlined_call_operand.vmem [shape: bf16[2,32,32], index: 6, kind: input, shape index: {}]
  %s7 = inlined_call_operand.vmem [shape: f32[2,1,32], index: 7, kind: input, shape index: {}]
  %s8 = inlined_call_operand.vmem [shape: f32[2,1,32], index: 8, kind: input, shape index: {}]
  %s9 = inlined_call_operand.vmem [shape: f32[2,1,32], index: 9, kind: input, shape index: {}]
  %s10 = inlined_call_operand.vmem [shape: bf16[2,32,256], index: 10, kind: input, shape index: {}]
  %s11 = inlined_call_operand.vmem [shape: f32[2,1,256], index: 11, kind: input, shape index: {}]
  %s12 = inlined_call_operand.vmem [shape: bf16[2,128,32], index: 12, kind: input, shape index: {}]
  %s13 = inlined_call_operand.vmem [shape: f32[2,1,32], index: 13, kind: input, shape index: {}]
  %s14 = inlined_call_operand.vmem [shape: f32[2], index: 14, kind: input, shape index: {}]
  %s15 = inlined_call_operand.hbm [shape: f32[2,8,32], index: 15, kind: output, shape index: {}]
  %s16 = sld [smem:[#allocation0]]
  $region74: #{tpu_custom_call.1} parent=0
    _
  %s18 = ssub.s32 1, %s16
  %s19 = scalar_select 0, %s18, %s16
  $region1: #{tpu_custom_call.1} parent=0
    #allocation2 [shape = 'u8[512]{0}', space=smem, size = 0x200, scoped, tag = 'input window, operand 14, single buffered']
    #allocation3 [shape = 's32[1]{0}', space=sflag, size = 0x4, scoped, tag = 'scoped memory for tpu_custom_call.1']
    #allocation4 [shape = 's32[1]{0}', space=sflag, size = 0x4, scoped, tag = 'scoped memory for tpu_custom_call.1']
    #allocation5 [shape = 'u8[8192]{0}', space=vmem, size = 0x2000, scoped, tag = 'output window, operand 0, single buffered']
    %20 = vsyncpa [#allocation4], 0
    %21 = vsyncpa [#allocation3], 0
    // Predicated region
    $region2: #{tpu_custom_call.1} parent=1 // pred_check
      _
    $region3: #{tpu_custom_call.1} parent=1 // pred_check_branch
      %23 = sbr.rel (0) target = $region5
    $region4: #{tpu_custom_call.1} parent=1 // pred_region
      _
    $region5: #{tpu_custom_call.1} parent=1 // pred_fallthru
      _
    // Predicated region
    $region6: #{tpu_custom_call.1} parent=1 // pred_check
      _
    $region7: #{tpu_custom_call.1} parent=1 // pred_check_branch
      %25 = sbr.rel (0) target = $region9
    $region8: #{tpu_custom_call.1} parent=1 // pred_region
      _
    $region9: #{tpu_custom_call.1} parent=1 // pred_fallthru
      _
    // Predicated region
    $region10: #{tpu_custom_call.1} parent=1 // pred_check
      _
    $region11: #{tpu_custom_call.1} parent=1 // pred_check_branch
      %27 = sbr.rel (0) target = $region13
    $region12: #{tpu_custom_call.1} parent=1 // pred_region
      _
    $region13: #{tpu_custom_call.1} parent=1 // pred_fallthru
      _
    // Predicated region
    $region14: #{tpu_custom_call.1} parent=1 // pred_check
      _
    $region15: #{tpu_custom_call.1} parent=1 // pred_check_branch
      %29 = sbr.rel (0) target = $region17
    $region16: #{tpu_custom_call.1} parent=1 // pred_region
      _
    $region17: #{tpu_custom_call.1} parent=1 // pred_fallthru
      _
    // Predicated region
    $region18: #{tpu_custom_call.1} parent=1 // pred_check
      _
    $region19: #{tpu_custom_call.1} parent=1 // pred_check_branch
      %31 = sbr.rel (0) target = $region21
    $region20: #{tpu_custom_call.1} parent=1 // pred_region
      _
    $region21: #{tpu_custom_call.1} parent=1 // pred_fallthru
      _
    // Predicated region
    $region22: #{tpu_custom_call.1} parent=1 // pred_check
      _
    $region23: #{tpu_custom_call.1} parent=1 // pred_check_branch
      %33 = sbr.rel (0) target = $region25
    $region24: #{tpu_custom_call.1} parent=1 // pred_region
      _
    $region25: #{tpu_custom_call.1} parent=1 // pred_fallthru
      _
    // Predicated region
    $region26: #{tpu_custom_call.1} parent=1 // pred_check
      _
    $region27: #{tpu_custom_call.1} parent=1 // pred_check_branch
      %35 = sbr.rel (0) target = $region29
    $region28: #{tpu_custom_call.1} parent=1 // pred_region
      _
    $region29: #{tpu_custom_call.1} parent=1 // pred_fallthru
      _
    // Predicated region
    $region30: #{tpu_custom_call.1} parent=1 // pred_check
      _
    $region31: #{tpu_custom_call.1} parent=1 // pred_check_branch
      %37 = sbr.rel (0) target = $region33
    $region32: #{tpu_custom_call.1} parent=1 // pred_region
      _
    $region33: #{tpu_custom_call.1} parent=1 // pred_fallthru
      _
    // Predicated region
    $region34: #{tpu_custom_call.1} parent=1 // pred_check
      _
    $region35: #{tpu_custom_call.1} parent=1 // pred_check_branch
      %39 = sbr.rel (0) target = $region37
    $region36: #{tpu_custom_call.1} parent=1 // pred_region
      _
    $region37: #{tpu_custom_call.1} parent=1 // pred_fallthru
      _
    // Predicated region
    $region38: #{tpu_custom_call.1} parent=1 // pred_check
      _
    $region39: #{tpu_custom_call.1} parent=1 // pred_check_branch
      %41 = sbr.rel (0) target = $region41
    $region40: #{tpu_custom_call.1} parent=1 // pred_region
      _
    $region41: #{tpu_custom_call.1} parent=1 // pred_fallthru
      _
    // Predicated region
    $region42: #{tpu_custom_call.1} parent=1 // pred_check
      _
    $region43: #{tpu_custom_call.1} parent=1 // pred_check_branch
      %43 = sbr.rel (0) target = $region45
    $region44: #{tpu_custom_call.1} parent=1 // pred_region
      _
    $region45: #{tpu_custom_call.1} parent=1 // pred_fallthru
      _
    // Predicated region
    $region46: #{tpu_custom_call.1} parent=1 // pred_check
      _
    $region47: #{tpu_custom_call.1} parent=1 // pred_check_branch
      %45 = sbr.rel (0) target = $region49
    $region48: #{tpu_custom_call.1} parent=1 // pred_region
      _
    $region49: #{tpu_custom_call.1} parent=1 // pred_fallthru
      _
    // Predicated region
    $region50: #{tpu_custom_call.1} parent=1 // pred_check
      _
    $region51: #{tpu_custom_call.1} parent=1 // pred_check_branch
      %47 = sbr.rel (0) target = $region53
    $region52: #{tpu_custom_call.1} parent=1 // pred_region
      _
    $region53: #{tpu_custom_call.1} parent=1 // pred_fallthru
      _
    // Predicated region
    $region54: #{tpu_custom_call.1} parent=1 // pred_check
      _
    $region55: #{tpu_custom_call.1} parent=1 // pred_check_branch
      %49 = sbr.rel (0) target = $region57
    $region56: #{tpu_custom_call.1} parent=1 // pred_region
      _
    $region57: #{tpu_custom_call.1} parent=1 // pred_fallthru
      _
    // Predicated region
    $region58: #{tpu_custom_call.1} parent=1 // pred_check
      _
    $region59: #{tpu_custom_call.1} parent=1 // pred_check_branch
      %51 = sbr.rel (0) target = $region61
    $region60: #{tpu_custom_call.1} parent=1 // pred_region
      %53 = vsyncadd [#allocation4], 0
      %s55 = sshll.u32 %s14, 4
      %s56 = int_to_ptr.vmem [resolvable:$true] %s55
      %58 = dma.vmem_to_smem %s56, 16, [#allocation2], [#allocation4]
    $region61: #{tpu_custom_call.1} parent=1 // pred_fallthru
      _
    // Predicated region
    $region62: #{tpu_custom_call.1} parent=1 // pred_check
      _
    $region63: #{tpu_custom_call.1} parent=1 // pred_check_branch
      %60 = sbr.rel (0) target = $region65
    $region64: #{tpu_custom_call.1} parent=1 // pred_region
      %62 = dma.done [#allocation4], 16
    $region65: #{tpu_custom_call.1} parent=1 // pred_fallthru
      _
    %63 = sfence
    %v65 = vld [vmem:[%s0] sm:$0xff]
    %v66 = vld [vmem:[%s0 + $0x8] sm:$0xff]
    %v67 = vlaneseq
    %v68 = vshrl.u32 %v67, 7
    %v69 = vlaneseq
    %v70 = vand.u32 %v69, 127
    %vm71 = vcmp.le.s32.totalorder %v70, %v68
    %v72 = vsel %vm71, 0.0, -1e+30
    %v73 = vld [vmem:[%s1] sm:$0x1]
    %v74 = vperm.slane %v73, 0
    %v75 = vadd.f32 %v65, %v74
    %v76 = vadd.f32 %v66, %v74
    %v77 = vld [vmem:[%s2] sm:$0x1]
    %v78 = vld [vmem:[%s3] sm:$0x1]
    %v79 = vld [vmem:[%s4] sm:$0xf]
    %v80 = vld [vmem:[%s4 + $0x4] sm:$0xf]
    %v81 = vld [vmem:[%s4 + $0x8] sm:$0xf]
    %v82 = vld [vmem:[%s4 + $0xc] sm:$0xf]
    %v83 = vld [vmem:[%s5] sm:$0x1]
    %v84 = vld [vmem:[%s6] sm:$0xf]
    %v85 = vld [vmem:[%s6 + $0x4] sm:$0xf]
    %v86 = vld [vmem:[%s6 + $0x8] sm:$0xf]
    %v87 = vld [vmem:[%s6 + $0xc] sm:$0xf]
    %v88 = vld [vmem:[%s7] sm:$0x1]
    %v89 = vld [vmem:[%s8] sm:$0x1]
    %v90 = vld [vmem:[%s9] sm:$0x1]
    %v91 = vld [vmem:[%s10] sm:$0xff]
    %v92 = vld [vmem:[%s10 + $0x8] sm:$0xff]
    %v93 = vld [vmem:[%s10 + $0x10] sm:$0xff]
    %v94 = vld [vmem:[%s10 + $0x18] sm:$0xff]
    %v95 = vld [vmem:[%s11] sm:$0x3]
    %v96 = vld [vmem:[%s12] sm:$0xf]
    %v97 = vld [vmem:[%s12 + $0x4] sm:$0xf]
    %v98 = vld [vmem:[%s12 + $0x8] sm:$0xf]
    %v99 = vld [vmem:[%s12 + $0xc] sm:$0xf]
    %v100 = vld [vmem:[%s12 + $0x10] sm:$0xf]
    %v101 = vld [vmem:[%s12 + $0x14] sm:$0xf]
    %v102 = vld [vmem:[%s12 + $0x18] sm:$0xf]
    %v103 = vld [vmem:[%s12 + $0x1c] sm:$0xf]
    %v104 = vld [vmem:[%s12 + $0x20] sm:$0xf]
    %v105 = vld [vmem:[%s12 + $0x24] sm:$0xf]
    %v106 = vld [vmem:[%s12 + $0x28] sm:$0xf]
    %v107 = vld [vmem:[%s12 + $0x2c] sm:$0xf]
    %v108 = vld [vmem:[%s12 + $0x30] sm:$0xf]
    %v109 = vld [vmem:[%s12 + $0x34] sm:$0xf]
    %v110 = vld [vmem:[%s12 + $0x38] sm:$0xf]
    %v111 = vld [vmem:[%s12 + $0x3c] sm:$0xf]
    %v112 = vld [vmem:[%s13] sm:$0x1]
    %vm113 = vcmask 261120
    %v114 = vsel %vm113, %v75, 0.0
    %115 = vadd.xlane.f32.xlu0 %v114
    %v116 = vpop.xlane.xlu0 %115
    %v117 = vsel %vm113, %v76, 0.0
    %118 = vadd.xlane.f32.xlu0 %v117
    %v119 = vpop.xlane.xlu0 %118
    %v120 = vrcp.pop 32.0
    %v121 = vmul.f32 32.0, %v120
    %v122 = vsub.f32 1.0, %v121
    %v123 = vmul.f32 %v120, %v122
    %v124 = vadd.f32 %v120, %v123
    %vm125 = vweird.f32 %v120
    %v126 = vsel %vm125, %v120, %v124
    %v127 = vmul.f32 %v116, %v126
    %v128 = vmul.f32 %v119, %v126
    %v129 = vsub.f32 %v75, %v127
    %v130 = vsub.f32 %v76, %v128
    %v131 = vmul.f32 %v129, %v129
    %v132 = vmul.f32 %v130, %v130
    %v133 = vsel %vm113, %v131, 0.0
    %134 = vadd.xlane.f32.xlu0 %v133
    %v135 = vpop.xlane.xlu0 %134
    %v136 = vsel %vm113, %v132, 0.0
    %137 = vadd.xlane.f32.xlu0 %v136
    %v138 = vpop.xlane.xlu0 %137
    %v139 = vmul.f32 %v135, %v126
    %v140 = vmul.f32 %v138, %v126
    %v141 = vadd.f32 %v139, 1e-05
    %v142 = vadd.f32 %v140, 1e-05
    %v143 = vrsqrt.pop %v141
    %v144 = vmul.f32 %v143, %v141
    %v145 = vmul.f32 %v144, %v143
    %v146 = vmul.f32 0.5, %v145
    %v147 = vsub.f32 1.5, %v146
    %v148 = vmul.f32 %v143, %v147
    %vm149 = vweird.f32 %v141
    %vm150 = vweird.f32 %v143
    %vm151 = vmor %vm149, %vm150
    %v152 = vsel %vm151, %v143, %v148
    %v153 = vrsqrt.pop %v142
    %v154 = vmul.f32 %v153, %v142
    %v155 = vmul.f32 %v154, %v153
    %v156 = vmul.f32 0.5, %v155
    %v157 = vsub.f32 1.5, %v156
    %v158 = vmul.f32 %v153, %v157
    %vm159 = vweird.f32 %v142
    %vm160 = vweird.f32 %v153
    %vm161 = vmor %vm159, %vm160
    %v162 = vsel %vm161, %v153, %v158
    %v163 = vmul.f32 %v129, %v152
    %v164 = vmul.f32 %v130, %v162
    %v166 = vperm.slane %v77, 0
    %v168 = vmul.f32 %v163, %v166
    %v169 = vmul.f32 %v164, %v166
    %v171 = vperm.slane %v78, 0
    %v173 = vadd.f32 %v168, %v171
    %v174 = vadd.f32 %v169, %v171
    %v175 = vpack.c.bf16 %v174, %v173
    %v177 = vperm.slane %v83, 0
    %v183 = vunpack.c.l.b16 %v79
    %v184 = vunpack.c.l.b16 %v80
    %v185 = vunpack.c.l.b16 %v81
    %v186 = vunpack.c.l.b16 %v82
    %v187 = vpack.c.b16 %v184, %v183
    %v188 = vpack.c.b16 %v186, %v185
    %v192 = vsel %vm113, %v175, 0
    %194 = vmatpush.bf16.msra.mxu0 0
    %195 = vmatpush.bf16.msra.mxu0 0
    %196 = vmatpush.bf16.msra.mxu0 0
    %197 = vmatpush.bf16.msra.mxu0 0
    %198 = vmatpush.bf16.msra.mxu0 0
    %199 = vmatpush.bf16.msra.mxu0 0
    %200 = vmatpush.bf16.msra.mxu0 %v188
    %201 = vmatpush.bf16.msra.mxu0 %v187
    %202 = vmatmul.bf16.gmra.mxu0 %v192
    %v203 = vpop.f32.mrf.mxu0
    %v204 = vadd.f32 %v177, %v203
    %v205 = vpop.f32.mrf.mxu0
    %v206 = vadd.f32 %v177, %v205
    %207 = vdwg.mxu0
    %210 = vrot.lane.b32.xlu0 %v204, 120
    %v211 = vpop.permute.xlu0 %210
    %212 = vrot.lane.b32.xlu0 %v206, 120
    %v213 = vpop.permute.xlu0 %212
    %216 = vrot.lane.b32.xlu0 %v204, 112
    %v217 = vpop.permute.xlu0 %216
    %218 = vrot.lane.b32.xlu0 %v206, 112
    %v219 = vpop.permute.xlu0 %218
    %222 = vrot.lane.b32.xlu0 %v204, 104
    %v223 = vpop.permute.xlu0 %222
    %224 = vrot.lane.b32.xlu0 %v206, 104
    %v225 = vpop.permute.xlu0 %224
    %v228 = vpack.c.bf16 %v204, %v204
    %v229 = vpack.c.bf16 %v206, %v206
    %v230 = vpack.c.bf16 %v211, %v211
    %v231 = vpack.c.bf16 %v213, %v213
    %v232 = vpack.c.bf16 %v217, %v217
    %v233 = vpack.c.bf16 %v219, %v219
    %v234 = vpack.c.bf16 %v223, %v223
    %v235 = vpack.c.bf16 %v225, %v225
    %v237 = vunpack.c.l.b16 %v228
    %v238 = vpack.c.b16 %v237, %v237
    %239 = vrot.lane.b32.xlu0 %v238, 96
    %v240 = vpop.permute.xlu0 %239
    %vm241 = vcmask 64512
    %v243 = vsel %vm241, %v228, 0
    %v246 = vsel %vm241, %v240, 0
    %248 = vmatpush.bf16.xpose.msra.mxu0 0
    %249 = vmatpush.bf16.xpose.msra.mxu0 0
    %250 = vmatpush.bf16.xpose.msra.mxu0 0
    %251 = vmatpush.bf16.xpose.msra.mxu0 0
    %252 = vmatpush.bf16.xpose.msra.mxu0 0
    %253 = vmatpush.bf16.xpose.msra.mxu0 0
    %254 = vmatpush.bf16.xpose.msra.mxu0 0
    %255 = vmatpush.bf16.xpose.msra.mxu0 %v246
    %256 = vmatmul.bf16.gmra.mxu0 %v243
    %v257 = vpop.f32.mrf.mxu0
    %v258 = vadd.f32 0.0, %v257
    %v259 = vpop.f32.mrf.mxu0
    %260 = vdwg.mxu0
    %v262 = vunpack.c.l.b16 %v229
    %v263 = vpack.c.b16 %v262, %v262
    %264 = vrot.lane.b32.xlu0 %v263, 96
    %v265 = vpop.permute.xlu0 %264
    %v267 = vsel %vm241, %v229, 0
    %v270 = vsel %vm241, %v265, 0
    %272 = vmatpush.bf16.xpose.msra.mxu0 0
    %273 = vmatpush.bf16.xpose.msra.mxu0 0
    %274 = vmatpush.bf16.xpose.msra.mxu0 0
    %275 = vmatpush.bf16.xpose.msra.mxu0 0
    %276 = vmatpush.bf16.xpose.msra.mxu0 0
    %277 = vmatpush.bf16.xpose.msra.mxu0 0
    %278 = vmatpush.bf16.xpose.msra.mxu0 0
    %279 = vmatpush.bf16.xpose.msra.mxu0 %v270
    %280 = vmatmul.bf16.gmra.mxu0 %v267
    %v281 = vpop.f32.mrf.mxu0
    %v282 = vadd.f32 0.0, %v281
    %v283 = vpop.f32.mrf.mxu0
    %284 = vdwg.mxu0
    %v286 = vunpack.c.l.b16 %v230
    %v287 = vpack.c.b16 %v286, %v286
    %288 = vrot.lane.b32.xlu0 %v287, 96
    %v289 = vpop.permute.xlu0 %288
    %v291 = vsel %vm241, %v230, 0
    %v294 = vsel %vm241, %v289, 0
    %296 = vmatpush.bf16.xpose.msra.mxu0 0
    %297 = vmatpush.bf16.xpose.msra.mxu0 0
    %298 = vmatpush.bf16.xpose.msra.mxu0 0
    %299 = vmatpush.bf16.xpose.msra.mxu0 0
    %300 = vmatpush.bf16.xpose.msra.mxu0 0
    %301 = vmatpush.bf16.xpose.msra.mxu0 0
    %302 = vmatpush.bf16.xpose.msra.mxu0 0
    %303 = vmatpush.bf16.xpose.msra.mxu0 %v294
    %304 = vmatmul.bf16.gmra.mxu0 %v291
    %v305 = vpop.f32.mrf.mxu0
    %v306 = vadd.f32 0.0, %v305
    %v307 = vpop.f32.mrf.mxu0
    %308 = vdwg.mxu0
    %v310 = vunpack.c.l.b16 %v231
    %v311 = vpack.c.b16 %v310, %v310
    %312 = vrot.lane.b32.xlu0 %v311, 96
    %v313 = vpop.permute.xlu0 %312
    %v315 = vsel %vm241, %v231, 0
    %v318 = vsel %vm241, %v313, 0
    %320 = vmatpush.bf16.xpose.msra.mxu0 0
    %321 = vmatpush.bf16.xpose.msra.mxu0 0
    %322 = vmatpush.bf16.xpose.msra.mxu0 0
    %323 = vmatpush.bf16.xpose.msra.mxu0 0
    %324 = vmatpush.bf16.xpose.msra.mxu0 0
    %325 = vmatpush.bf16.xpose.msra.mxu0 0
    %326 = vmatpush.bf16.xpose.msra.mxu0 0
    %327 = vmatpush.bf16.xpose.msra.mxu0 %v318
    %328 = vmatmul.bf16.gmra.mxu0 %v315
    %v329 = vpop.f32.mrf.mxu0
    %v330 = vadd.f32 0.0, %v329
    %v331 = vpop.f32.mrf.mxu0
    %332 = vdwg.mxu0
    %v334 = vunpack.c.l.b16 %v232
    %v335 = vpack.c.b16 %v334, %v334
    %336 = vrot.lane.b32.xlu0 %v335, 96
    %v337 = vpop.permute.xlu0 %336
    %v339 = vsel %vm241, %v232, 0
    %v342 = vsel %vm241, %v337, 0
    %344 = vmatpush.bf16.xpose.msra.mxu0 0
    %345 = vmatpush.bf16.xpose.msra.mxu0 0
    %346 = vmatpush.bf16.xpose.msra.mxu0 0
    %347 = vmatpush.bf16.xpose.msra.mxu0 0
    %348 = vmatpush.bf16.xpose.msra.mxu0 0
    %349 = vmatpush.bf16.xpose.msra.mxu0 0
    %350 = vmatpush.bf16.xpose.msra.mxu0 0
    %351 = vmatpush.bf16.xpose.msra.mxu0 %v342
    %352 = vmatmul.bf16.gmra.mxu0 %v339
    %v353 = vpop.f32.mrf.mxu0
    %v354 = vadd.f32 0.0, %v353
    %v355 = vpop.f32.mrf.mxu0
    %356 = vdwg.mxu0
    %v358 = vunpack.c.l.b16 %v233
    %v359 = vpack.c.b16 %v358, %v358
    %360 = vrot.lane.b32.xlu0 %v359, 96
    %v361 = vpop.permute.xlu0 %360
    %v363 = vsel %vm241, %v233, 0
    %v366 = vsel %vm241, %v361, 0
    %368 = vmatpush.bf16.xpose.msra.mxu0 0
    %369 = vmatpush.bf16.xpose.msra.mxu0 0
    %370 = vmatpush.bf16.xpose.msra.mxu0 0
    %371 = vmatpush.bf16.xpose.msra.mxu0 0
    %372 = vmatpush.bf16.xpose.msra.mxu0 0
    %373 = vmatpush.bf16.xpose.msra.mxu0 0
    %374 = vmatpush.bf16.xpose.msra.mxu0 0
    %375 = vmatpush.bf16.xpose.msra.mxu0 %v366
    %376 = vmatmul.bf16.gmra.mxu0 %v363
    %v377 = vpop.f32.mrf.mxu0
    %v378 = vadd.f32 0.0, %v377
    %v379 = vpop.f32.mrf.mxu0
    %380 = vdwg.mxu0
    %v382 = vunpack.c.l.b16 %v234
    %v383 = vpack.c.b16 %v382, %v382
    %384 = vrot.lane.b32.xlu0 %v383, 96
    %v385 = vpop.permute.xlu0 %384
    %v387 = vsel %vm241, %v234, 0
    %v390 = vsel %vm241, %v385, 0
    %392 = vmatpush.bf16.xpose.msra.mxu0 0
    %393 = vmatpush.bf16.xpose.msra.mxu0 0
    %394 = vmatpush.bf16.xpose.msra.mxu0 0
    %395 = vmatpush.bf16.xpose.msra.mxu0 0
    %396 = vmatpush.bf16.xpose.msra.mxu0 0
    %397 = vmatpush.bf16.xpose.msra.mxu0 0
    %398 = vmatpush.bf16.xpose.msra.mxu0 0
    %399 = vmatpush.bf16.xpose.msra.mxu0 %v390
    %400 = vmatmul.bf16.gmra.mxu0 %v387
    %v401 = vpop.f32.mrf.mxu0
    %v402 = vadd.f32 0.0, %v401
    %v403 = vpop.f32.mrf.mxu0
    %404 = vdwg.mxu0
    %v406 = vunpack.c.l.b16 %v235
    %v407 = vpack.c.b16 %v406, %v406
    %408 = vrot.lane.b32.xlu0 %v407, 96
    %v409 = vpop.permute.xlu0 %408
    %v411 = vsel %vm241, %v235, 0
    %v414 = vsel %vm241, %v409, 0
    %416 = vmatpush.bf16.xpose.msra.mxu0 0
    %417 = vmatpush.bf16.xpose.msra.mxu0 0
    %418 = vmatpush.bf16.xpose.msra.mxu0 0
    %419 = vmatpush.bf16.xpose.msra.mxu0 0
    %420 = vmatpush.bf16.xpose.msra.mxu0 0
    %421 = vmatpush.bf16.xpose.msra.mxu0 0
    %422 = vmatpush.bf16.xpose.msra.mxu0 0
    %423 = vmatpush.bf16.xpose.msra.mxu0 %v414
    %424 = vmatmul.bf16.gmra.mxu0 %v411
    %v425 = vpop.f32.mrf.mxu0
    %v426 = vadd.f32 0.0, %v425
    %v427 = vpop.f32.mrf.mxu0
    %428 = vdwg.mxu0
    %v429 = vmul.f32 %v258, 0.35355338
    %v430 = vmul.f32 %v282, 0.35355338
    %v431 = vmul.f32 %v306, 0.35355338
    %v432 = vmul.f32 %v330, 0.35355338
    %v433 = vmul.f32 %v354, 0.35355338
    %v434 = vmul.f32 %v378, 0.35355338
    %v435 = vmul.f32 %v402, 0.35355338
    %v436 = vmul.f32 %v426, 0.35355338
    %v437 = vadd.f32 %v429, %v72
    %v438 = vadd.f32 %v430, %v72
    %v439 = vadd.f32 %v431, %v72
    %v440 = vadd.f32 %v432, %v72
    %v441 = vadd.f32 %v433, %v72
    %v442 = vadd.f32 %v434, %v72
    %v443 = vadd.f32 %v435, %v72
    %v444 = vadd.f32 %v436, %v72
    %v445 = vsel %vm241, %v437, -inf
    %446 = vmax.xlane.f32.xlu0 %v445
    %v447 = vpop.xlane.xlu0 %446
    %v448 = vsel %vm241, %v438, -inf
    %449 = vmax.xlane.f32.xlu0 %v448
    %v450 = vpop.xlane.xlu0 %449
    %v451 = vsel %vm241, %v439, -inf
    %452 = vmax.xlane.f32.xlu0 %v451
    %v453 = vpop.xlane.xlu0 %452
    %v454 = vsel %vm241, %v440, -inf
    %455 = vmax.xlane.f32.xlu0 %v454
    %v456 = vpop.xlane.xlu0 %455
    %v457 = vsel %vm241, %v441, -inf
    %458 = vmax.xlane.f32.xlu0 %v457
    %v459 = vpop.xlane.xlu0 %458
    %v460 = vsel %vm241, %v442, -inf
    %461 = vmax.xlane.f32.xlu0 %v460
    %v462 = vpop.xlane.xlu0 %461
    %v463 = vsel %vm241, %v443, -inf
    %464 = vmax.xlane.f32.xlu0 %v463
    %v465 = vpop.xlane.xlu0 %464
    %v466 = vsel %vm241, %v444, -inf
    %467 = vmax.xlane.f32.xlu0 %v466
    %v468 = vpop.xlane.xlu0 %467
    %v469 = vsub.f32 %v437, %v447
    %v470 = vsub.f32 %v438, %v450
    %v471 = vsub.f32 %v439, %v453
    %v472 = vsub.f32 %v440, %v456
    %v473 = vsub.f32 %v441, %v459
    %v474 = vsub.f32 %v442, %v462
    %v475 = vsub.f32 %v443, %v465
    %v476 = vsub.f32 %v444, %v468
    %v477 = vmul.f32 %v469, 1.442695
    %v478 = vpow.pop %v477
    %v479 = vmul.f32 %v470, 1.442695
    %v480 = vpow.pop %v479
    %v481 = vmul.f32 %v471, 1.442695
    %v482 = vpow.pop %v481
    %v483 = vmul.f32 %v472, 1.442695
    %v484 = vpow.pop %v483
    %v485 = vmul.f32 %v473, 1.442695
    %v486 = vpow.pop %v485
    %v487 = vmul.f32 %v474, 1.442695
    %v488 = vpow.pop %v487
    %v489 = vmul.f32 %v475, 1.442695
    %v490 = vpow.pop %v489
    %v491 = vmul.f32 %v476, 1.442695
    %v492 = vpow.pop %v491
    %v493 = vsel %vm241, %v478, 0.0
    %494 = vadd.xlane.f32.xlu0 %v493
    %v495 = vpop.xlane.xlu0 %494
    %v496 = vsel %vm241, %v480, 0.0
    %497 = vadd.xlane.f32.xlu0 %v496
    %v498 = vpop.xlane.xlu0 %497
    %v499 = vsel %vm241, %v482, 0.0
    %500 = vadd.xlane.f32.xlu0 %v499
    %v501 = vpop.xlane.xlu0 %500
    %v502 = vsel %vm241, %v484, 0.0
    %503 = vadd.xlane.f32.xlu0 %v502
    %v504 = vpop.xlane.xlu0 %503
    %v505 = vsel %vm241, %v486, 0.0
    %506 = vadd.xlane.f32.xlu0 %v505
    %v507 = vpop.xlane.xlu0 %506
    %v508 = vsel %vm241, %v488, 0.0
    %509 = vadd.xlane.f32.xlu0 %v508
    %v510 = vpop.xlane.xlu0 %509
    %v511 = vsel %vm241, %v490, 0.0
    %512 = vadd.xlane.f32.xlu0 %v511
    %v513 = vpop.xlane.xlu0 %512
    %v514 = vsel %vm241, %v492, 0.0
    %515 = vadd.xlane.f32.xlu0 %v514
    %v516 = vpop.xlane.xlu0 %515
    %v517 = vrcp.pop %v495
    %v518 = vrcp.pop %v498
    %v519 = vrcp.pop %v501
    %v520 = vrcp.pop %v504
    %v521 = vrcp.pop %v507
    %v522 = vrcp.pop %v510
    %v523 = vrcp.pop %v513
    %v524 = vrcp.pop %v516
    %v525 = vmul.f32 %v478, %v517
    %v526 = vmul.f32 %v480, %v518
    %v527 = vmul.f32 %v482, %v519
    %v528 = vmul.f32 %v484, %v520
    %v529 = vmul.f32 %v486, %v521
    %v530 = vmul.f32 %v488, %v522
    %v531 = vmul.f32 %v490, %v523
    %v532 = vmul.f32 %v492, %v524
    %v533 = vpack.c.bf16 %v525, %v525
    %v534 = vpack.c.bf16 %v526, %v526
    %v535 = vpack.c.bf16 %v527, %v527
    %v536 = vpack.c.bf16 %v528, %v528
    %v537 = vpack.c.bf16 %v529, %v529
    %v538 = vpack.c.bf16 %v530, %v530
    %v539 = vpack.c.bf16 %v531, %v531
    %v540 = vpack.c.bf16 %v532, %v532
    %541 = vrot.lane.b32.xlu0 %v238, 64
    %v542 = vpop.permute.xlu0 %541
    %v544 = vsel %vm241, %v533, 0
    %vm546 = vcmask 1043456
    %v548 = vsel %vm546, %v542, 0
    %550 = vmatpush.bf16.msra.mxu0 0
    %551 = vmatpush.bf16.msra.mxu0 0
    %552 = vmatpush.bf16.msra.mxu0 0
    %553 = vmatpush.bf16.msra.mxu0 0
    %554 = vmatpush.bf16.msra.mxu0 0
    %555 = vmatpush.bf16.msra.mxu0 0
    %556 = vmatpush.bf16.msra.mxu0 0
    %557 = vmatpush.bf16.msra.mxu0 %v548
    %558 = vmatmul.bf16.gmra.mxu0 %v544
    %v559 = vpop.f32.mrf.mxu0
    %v560 = vadd.f32 0.0, %v559
    %v561 = vpop.f32.mrf.mxu0
    %562 = vdwg.mxu0
    %563 = vrot.lane.b32.xlu0 %v263, 64
    %v564 = vpop.permute.xlu0 %563
    %v566 = vsel %vm241, %v534, 0
    %v569 = vsel %vm546, %v564, 0
    %571 = vmatpush.bf16.msra.mxu0 0
    %572 = vmatpush.bf16.msra.mxu0 0
    %573 = vmatpush.bf16.msra.mxu0 0
    %574 = vmatpush.bf16.msra.mxu0 0
    %575 = vmatpush.bf16.msra.mxu0 0
    %576 = vmatpush.bf16.msra.mxu0 0
    %577 = vmatpush.bf16.msra.mxu0 0
    %578 = vmatpush.bf16.msra.mxu0 %v569
    %579 = vmatmul.bf16.gmra.mxu0 %v566
    %v580 = vpop.f32.mrf.mxu0
    %v581 = vadd.f32 0.0, %v580
    %v582 = vpop.f32.mrf.mxu0
    %583 = vdwg.mxu0
    %584 = vrot.lane.b32.xlu0 %v287, 64
    %v585 = vpop.permute.xlu0 %584
    %v587 = vsel %vm241, %v535, 0
    %v590 = vsel %vm546, %v585, 0
    %592 = vmatpush.bf16.msra.mxu0 0
    %593 = vmatpush.bf16.msra.mxu0 0
    %594 = vmatpush.bf16.msra.mxu0 0
    %595 = vmatpush.bf16.msra.mxu0 0
    %596 = vmatpush.bf16.msra.mxu0 0
    %597 = vmatpush.bf16.msra.mxu0 0
    %598 = vmatpush.bf16.msra.mxu0 0
    %599 = vmatpush.bf16.msra.mxu0 %v590
    %600 = vmatmul.bf16.gmra.mxu0 %v587
    %v601 = vpop.f32.mrf.mxu0
    %v602 = vadd.f32 0.0, %v601
    %v603 = vpop.f32.mrf.mxu0
    %604 = vdwg.mxu0
    %605 = vrot.lane.b32.xlu0 %v311, 64
    %v606 = vpop.permute.xlu0 %605
    %v608 = vsel %vm241, %v536, 0
    %v611 = vsel %vm546, %v606, 0
    %613 = vmatpush.bf16.msra.mxu0 0
    %614 = vmatpush.bf16.msra.mxu0 0
    %615 = vmatpush.bf16.msra.mxu0 0
    %616 = vmatpush.bf16.msra.mxu0 0
    %617 = vmatpush.bf16.msra.mxu0 0
    %618 = vmatpush.bf16.msra.mxu0 0
    %619 = vmatpush.bf16.msra.mxu0 0
    %620 = vmatpush.bf16.msra.mxu0 %v611
    %621 = vmatmul.bf16.gmra.mxu0 %v608
    %v622 = vpop.f32.mrf.mxu0
    %v623 = vadd.f32 0.0, %v622
    %v624 = vpop.f32.mrf.mxu0
    %625 = vdwg.mxu0
    %626 = vrot.lane.b32.xlu0 %v335, 64
    %v627 = vpop.permute.xlu0 %626
    %v629 = vsel %vm241, %v537, 0
    %v632 = vsel %vm546, %v627, 0
    %634 = vmatpush.bf16.msra.mxu0 0
    %635 = vmatpush.bf16.msra.mxu0 0
    %636 = vmatpush.bf16.msra.mxu0 0
    %637 = vmatpush.bf16.msra.mxu0 0
    %638 = vmatpush.bf16.msra.mxu0 0
    %639 = vmatpush.bf16.msra.mxu0 0
    %640 = vmatpush.bf16.msra.mxu0 0
    %641 = vmatpush.bf16.msra.mxu0 %v632
    %642 = vmatmul.bf16.gmra.mxu0 %v629
    %v643 = vpop.f32.mrf.mxu0
    %v644 = vadd.f32 0.0, %v643
    %v645 = vpop.f32.mrf.mxu0
    %646 = vdwg.mxu0
    %647 = vrot.lane.b32.xlu0 %v359, 64
    %v648 = vpop.permute.xlu0 %647
    %v650 = vsel %vm241, %v538, 0
    %v653 = vsel %vm546, %v648, 0
    %655 = vmatpush.bf16.msra.mxu0 0
    %656 = vmatpush.bf16.msra.mxu0 0
    %657 = vmatpush.bf16.msra.mxu0 0
    %658 = vmatpush.bf16.msra.mxu0 0
    %659 = vmatpush.bf16.msra.mxu0 0
    %660 = vmatpush.bf16.msra.mxu0 0
    %661 = vmatpush.bf16.msra.mxu0 0
    %662 = vmatpush.bf16.msra.mxu0 %v653
    %663 = vmatmul.bf16.gmra.mxu0 %v650
    %v664 = vpop.f32.mrf.mxu0
    %v665 = vadd.f32 0.0, %v664
    %v666 = vpop.f32.mrf.mxu0
    %667 = vdwg.mxu0
    %668 = vrot.lane.b32.xlu0 %v383, 64
    %v669 = vpop.permute.xlu0 %668
    %v671 = vsel %vm241, %v539, 0
    %v674 = vsel %vm546, %v669, 0
    %676 = vmatpush.bf16.msra.mxu0 0
    %677 = vmatpush.bf16.msra.mxu0 0
    %678 = vmatpush.bf16.msra.mxu0 0
    %679 = vmatpush.bf16.msra.mxu0 0
    %680 = vmatpush.bf16.msra.mxu0 0
    %681 = vmatpush.bf16.msra.mxu0 0
    %682 = vmatpush.bf16.msra.mxu0 0
    %683 = vmatpush.bf16.msra.mxu0 %v674
    %684 = vmatmul.bf16.gmra.mxu0 %v671
    %v685 = vpop.f32.mrf.mxu0
    %v686 = vadd.f32 0.0, %v685
    %v687 = vpop.f32.mrf.mxu0
    %688 = vdwg.mxu0
    %689 = vrot.lane.b32.xlu0 %v407, 64
    %v690 = vpop.permute.xlu0 %689
    %v692 = vsel %vm241, %v540, 0
    %v695 = vsel %vm546, %v690, 0
    %697 = vmatpush.bf16.msra.mxu0 0
    %698 = vmatpush.bf16.msra.mxu0 0
    %699 = vmatpush.bf16.msra.mxu0 0
    %700 = vmatpush.bf16.msra.mxu0 0
    %701 = vmatpush.bf16.msra.mxu0 0
    %702 = vmatpush.bf16.msra.mxu0 0
    %703 = vmatpush.bf16.msra.mxu0 0
    %704 = vmatpush.bf16.msra.mxu0 %v695
    %705 = vmatmul.bf16.gmra.mxu0 %v692
    %v706 = vpop.f32.mrf.mxu0
    %v707 = vadd.f32 0.0, %v706
    %v708 = vpop.f32.mrf.mxu0
    %709 = vdwg.mxu0
    %712 = vrot.lane.b32.xlu0 %v602, 8
    %v713 = vpop.permute.xlu0 %712
    %714 = vrot.lane.b32.xlu0 %v623, 8
    %v715 = vpop.permute.xlu0 %714
    %720 = vrot.lane.b32.xlu0 %v644, 16
    %v721 = vpop.permute.xlu0 %720
    %722 = vrot.lane.b32.xlu0 %v665, 16
    %v723 = vpop.permute.xlu0 %722
    %728 = vrot.lane.b32.xlu0 %v686, 24
    %v729 = vpop.permute.xlu0 %728
    %730 = vrot.lane.b32.xlu0 %v707, 24
    %v731 = vpop.permute.xlu0 %730
    %v734 = vsel %vm241, %v560, %v713
    %v735 = vsel %vm241, %v581, %v715
    %vm736 = vcmask 130048
    %v737 = vsel %vm736, %v734, %v721
    %v738 = vsel %vm736, %v735, %v723
    %vm739 = vcmask 195584
    %v740 = vsel %vm739, %v737, %v729
    %v741 = vsel %vm739, %v738, %v731
    %v742 = vpack.c.bf16 %v741, %v740
    %v744 = vperm.slane %v88, 0
    %v750 = vunpack.c.l.b16 %v84
    %v751 = vunpack.c.l.b16 %v85
    %v752 = vunpack.c.l.b16 %v86
    %v753 = vunpack.c.l.b16 %v87
    %v754 = vpack.c.b16 %v751, %v750
    %v755 = vpack.c.b16 %v753, %v752
    %v759 = vsel %vm113, %v742, 0
    %761 = vmatpush.bf16.msra.mxu0 0
    %762 = vmatpush.bf16.msra.mxu0 0
    %763 = vmatpush.bf16.msra.mxu0 0
    %764 = vmatpush.bf16.msra.mxu0 0
    %765 = vmatpush.bf16.msra.mxu0 0
    %766 = vmatpush.bf16.msra.mxu0 0
    %767 = vmatpush.bf16.msra.mxu0 %v755
    %768 = vmatpush.bf16.msra.mxu0 %v754
    %769 = vmatmul.bf16.gmra.mxu0 %v759
    %v770 = vpop.f32.mrf.mxu0
    %v771 = vadd.f32 %v744, %v770
    %v772 = vpop.f32.mrf.mxu0
    %v773 = vadd.f32 %v744, %v772
    %774 = vdwg.mxu0
    %v775 = vadd.f32 %v75, %v771
    %v776 = vadd.f32 %v76, %v773
    %v777 = vsel %vm113, %v775, 0.0
    %778 = vadd.xlane.f32.xlu0 %v777
    %v779 = vpop.xlane.xlu0 %778
    %v780 = vsel %vm113, %v776, 0.0
    %781 = vadd.xlane.f32.xlu0 %v780
    %v782 = vpop.xlane.xlu0 %781
    %v783 = vmul.f32 %v779, %v126
    %v784 = vmul.f32 %v782, %v126
    %v785 = vsub.f32 %v775, %v783
    %v786 = vsub.f32 %v776, %v784
    %v787 = vmul.f32 %v785, %v785
    %v788 = vmul.f32 %v786, %v786
    %v789 = vsel %vm113, %v787, 0.0
    %790 = vadd.xlane.f32.xlu0 %v789
    %v791 = vpop.xlane.xlu0 %790
    %v792 = vsel %vm113, %v788, 0.0
    %793 = vadd.xlane.f32.xlu0 %v792
    %v794 = vpop.xlane.xlu0 %793
    %v795 = vmul.f32 %v791, %v126
    %v796 = vmul.f32 %v794, %v126
    %v797 = vadd.f32 %v795, 1e-05
    %v798 = vadd.f32 %v796, 1e-05
    %v799 = vrsqrt.pop %v797
    %v800 = vmul.f32 %v799, %v797
    %v801 = vmul.f32 %v800, %v799
    %v802 = vmul.f32 0.5, %v801
    %v803 = vsub.f32 1.5, %v802
    %v804 = vmul.f32 %v799, %v803
    %vm805 = vweird.f32 %v797
    %vm806 = vweird.f32 %v799
    %vm807 = vmor %vm805, %vm806
    %v808 = vsel %vm807, %v799, %v804
    %v809 = vrsqrt.pop %v798
    %v810 = vmul.f32 %v809, %v798
    %v811 = vmul.f32 %v810, %v809
    %v812 = vmul.f32 0.5, %v811
    %v813 = vsub.f32 1.5, %v812
    %v814 = vmul.f32 %v809, %v813
    %vm815 = vweird.f32 %v798
    %vm816 = vweird.f32 %v809
    %vm817 = vmor %vm815, %vm816
    %v818 = vsel %vm817, %v809, %v814
    %v819 = vmul.f32 %v785, %v808
    %v820 = vmul.f32 %v786, %v818
    %v822 = vperm.slane %v89, 0
    %v824 = vmul.f32 %v819, %v822
    %v825 = vmul.f32 %v820, %v822
    %v827 = vperm.slane %v90, 0
    %v829 = vadd.f32 %v824, %v827
    %v830 = vadd.f32 %v825, %v827
    %v831 = vpack.c.bf16 %v830, %v829
    %v833 = vperm.slane %v95, 0
    %v834 = vperm.slane %v95, 1
    %v841 = vunpack.c.l.b16 %v91
    %v842 = vunpack.c.h.b16 %v91
    %v843 = vunpack.c.l.b16 %v92
    %v844 = vunpack.c.h.b16 %v92
    %v845 = vunpack.c.l.b16 %v93
    %v846 = vunpack.c.h.b16 %v93
    %v847 = vunpack.c.l.b16 %v94
    %v848 = vunpack.c.h.b16 %v94
    %v849 = vpack.c.b16 %v843, %v841
    %v850 = vpack.c.b16 %v844, %v842
    %v851 = vpack.c.b16 %v847, %v845
    %v852 = vpack.c.b16 %v848, %v846
    %v858 = vsel %vm113, %v831, 0
    %860 = vmatpush.bf16.msra.mxu0 0
    %861 = vmatpush.bf16.msra.mxu0 0
    %862 = vmatpush.bf16.msra.mxu0 0
    %863 = vmatpush.bf16.msra.mxu0 0
    %864 = vmatpush.bf16.msra.mxu0 0
    %865 = vmatpush.bf16.msra.mxu0 0
    %866 = vmatpush.bf16.msra.mxu0 %v851
    %867 = vmatpush.bf16.msra.mxu0 %v849
    %868 = vmatmul.bf16.gmra.mxu0 %v858
    %v869 = vpop.f32.mrf.mxu0
    %v870 = vadd.f32 %v833, %v869
    %v871 = vpop.f32.mrf.mxu0
    %v872 = vadd.f32 %v833, %v871
    %873 = vdwg.mxu0
    %874 = vmatpush.bf16.msra.mxu0 0
    %875 = vmatpush.bf16.msra.mxu0 0
    %876 = vmatpush.bf16.msra.mxu0 0
    %877 = vmatpush.bf16.msra.mxu0 0
    %878 = vmatpush.bf16.msra.mxu0 0
    %879 = vmatpush.bf16.msra.mxu0 0
    %880 = vmatpush.bf16.msra.mxu0 %v852
    %881 = vmatpush.bf16.msra.mxu0 %v850
    %882 = vmatmul.bf16.gmra.mxu0 %v858
    %v883 = vpop.f32.mrf.mxu0
    %v884 = vadd.f32 %v834, %v883
    %v885 = vpop.f32.mrf.mxu0
    %v886 = vadd.f32 %v834, %v885
    %887 = vdwg.mxu0
    %v888 = vmul.f32 %v884, 0.5
    %v889 = vmul.f32 %v886, 0.5
    %v890 = vmul.f32 %v884, 0.70710677
    %v891 = vmul.f32 %v886, 0.70710677
    %v892 = vmul.f32 %v890, %v890
    %v893 = vmin.f32 16.0, %v892
    %v894 = vmul.f32 %v893, 2.1237322e-06
    %v895 = vadd.f32 %v894, 0.00028619796
    %v896 = vmul.f32 %v893, %v895
    %v897 = vadd.f32 %v896, 0.0036580483
    %v898 = vmul.f32 %v893, %v897
    %v899 = vadd.f32 %v898, 0.05243302
    %v900 = vmul.f32 %v893, %v899
    %v901 = vadd.f32 %v900, 0.18741608
    %v902 = vmul.f32 %v893, %v901
    %v903 = vadd.f32 %v902, 1.1283791
    %v904 = vmul.f32 %v890, %v903
    %v905 = vmul.f32 %v893, 3.8918573e-05
    %v906 = vadd.f32 %v905, 0.001143296
    %v907 = vmul.f32 %v893, %v906
    %v908 = vadd.f32 %v907, 0.014752088
    %v909 = vmul.f32 %v893, %v908
    %v910 = vadd.f32 %v909, 0.112945676
    %v911 = vmul.f32 %v893, %v910
    %v912 = vadd.f32 %v911, 0.4994258
    %v913 = vmul.f32 %v893, %v912
    %v914 = vadd.f32 %v913, 1.0
    %v915 = vrcp.pop %v914
    %v916 = vmul.f32 %v914, %v915
    %v917 = vsub.f32 1.0, %v916
    %v918 = vmul.f32 %v915, %v917
    %v919 = vadd.f32 %v915, %v918
    %vm920 = vweird.f32 %v914
    %vm921 = vweird.f32 %v915
    %vm922 = vmor %vm920, %vm921
    %v923 = vsel %vm922, %v915, %v919
    %v924 = vand.u32 2147483647, %v914
    %vm925 = vcmp.eq.f32.partialorder %v924, 8.507059e+37
    %v926 = vand.u32 %v914, 2147483648
    %v927 = vor.u32 1.1754944e-38, %v926
    %v928 = vsel %vm925, %v927, %v923
    %v929 = vmul.f32 %v904, %v928
    %v930 = vmin.f32 %v929, 1.0
    %v931 = vmax.f32 %v930, -1.0
    %v932 = vmul.f32 %v891, %v891
    %v933 = vmin.f32 16.0, %v932
    %v934 = vmul.f32 %v933, 2.1237322e-06
    %v935 = vadd.f32 %v934, 0.00028619796
    %v936 = vmul.f32 %v933, %v935
    %v937 = vadd.f32 %v936, 0.0036580483
    %v938 = vmul.f32 %v933, %v937
    %v939 = vadd.f32 %v938, 0.05243302
    %v940 = vmul.f32 %v933, %v939
    %v941 = vadd.f32 %v940, 0.18741608
    %v942 = vmul.f32 %v933, %v941
    %v943 = vadd.f32 %v942, 1.1283791
    %v944 = vmul.f32 %v891, %v943
    %v945 = vmul.f32 %v933, 3.8918573e-05
    %v946 = vadd.f32 %v945, 0.001143296
    %v947 = vmul.f32 %v933, %v946
    %v948 = vadd.f32 %v947, 0.014752088
    %v949 = vmul.f32 %v933, %v948
    %v950 = vadd.f32 %v949, 0.112945676
    %v951 = vmul.f32 %v933, %v950
    %v952 = vadd.f32 %v951, 0.4994258
    %v953 = vmul.f32 %v933, %v952
    %v954 = vadd.f32 %v953, 1.0
    %v955 = vrcp.pop %v954
    %v956 = vmul.f32 %v954, %v955
    %v957 = vsub.f32 1.0, %v956
    %v958 = vmul.f32 %v955, %v957
    %v959 = vadd.f32 %v955, %v958
    %vm960 = vweird.f32 %v954
    %vm961 = vweird.f32 %v955
    %vm962 = vmor %vm960, %vm961
    %v963 = vsel %vm962, %v955, %v959
    %v964 = vand.u32 2147483647, %v954
    %vm965 = vcmp.eq.f32.partialorder %v964, 8.507059e+37
    %v966 = vand.u32 %v954, 2147483648
    %v967 = vor.u32 1.1754944e-38, %v966
    %v968 = vsel %vm965, %v967, %v963
    %v969 = vmul.f32 %v944, %v968
    %v970 = vmin.f32 %v969, 1.0
    %v971 = vmax.f32 %v970, -1.0
    %v972 = vadd.f32 %v931, 1.0
    %v973 = vadd.f32 %v971, 1.0
    %v974 = vmul.f32 %v888, %v972
    %v975 = vmul.f32 %v889, %v973
    %v976 = vmul.f32 %v974, %v870
    %v977 = vmul.f32 %v975, %v872
    %v978 = vpack.c.bf16 %v977, %v976
    %v980 = vperm.slane %v112, 0
    %v998 = vunpack.c.l.b16 %v96
    %v999 = vunpack.c.l.b16 %v97
    %v1000 = vunpack.c.l.b16 %v98
    %v1001 = vunpack.c.l.b16 %v99
    %v1002 = vunpack.c.l.b16 %v100
    %v1003 = vunpack.c.l.b16 %v101
    %v1004 = vunpack.c.l.b16 %v102
    %v1005 = vunpack.c.l.b16 %v103
    %v1006 = vunpack.c.l.b16 %v104
    %v1007 = vunpack.c.l.b16 %v105
    %v1008 = vunpack.c.l.b16 %v106
    %v1009 = vunpack.c.l.b16 %v107
    %v1010 = vunpack.c.l.b16 %v108
    %v1011 = vunpack.c.l.b16 %v109
    %v1012 = vunpack.c.l.b16 %v110
    %v1013 = vunpack.c.l.b16 %v111
    %v1014 = vpack.c.b16 %v999, %v998
    %v1015 = vpack.c.b16 %v1001, %v1000
    %v1016 = vpack.c.b16 %v1003, %v1002
    %v1017 = vpack.c.b16 %v1005, %v1004
    %v1018 = vpack.c.b16 %v1007, %v1006
    %v1019 = vpack.c.b16 %v1009, %v1008
    %v1020 = vpack.c.b16 %v1011, %v1010
    %v1021 = vpack.c.b16 %v1013, %v1012
    %1030 = vmatpush.bf16.msra.mxu0 %v1021
    %1031 = vmatpush.bf16.msra.mxu0 %v1020
    %1032 = vmatpush.bf16.msra.mxu0 %v1019
    %1033 = vmatpush.bf16.msra.mxu0 %v1018
    %1034 = vmatpush.bf16.msra.mxu0 %v1017
    %1035 = vmatpush.bf16.msra.mxu0 %v1016
    %1036 = vmatpush.bf16.msra.mxu0 %v1015
    %1037 = vmatpush.bf16.msra.mxu0 %v1014
    %1038 = vmatmul.bf16.gmra.mxu0 %v978
    %v1039 = vpop.f32.mrf.mxu0
    %v1040 = vadd.f32 %v980, %v1039
    %v1041 = vpop.f32.mrf.mxu0
    %v1042 = vadd.f32 %v980, %v1041
    %1043 = vdwg.mxu0
    %v1044 = vadd.f32 %v775, %v1040
    %v1045 = vadd.f32 %v776, %v1042
    %s1046 = scalar_lea.vmem %s2, 1
    %v1047 = vld [vmem:[%s1046] sm:$0x1]
    %s1048 = scalar_lea.vmem %s3, 1
    %v1049 = vld [vmem:[%s1048] sm:$0x1]
    %s1050 = scalar_lea.vmem %s4, 16
    %v1051 = vld [vmem:[%s1050] sm:$0xf]
    %v1052 = vld [vmem:[%s1050 + $0x4] sm:$0xf]
    %v1053 = vld [vmem:[%s1050 + $0x8] sm:$0xf]
    %v1054 = vld [vmem:[%s1050 + $0xc] sm:$0xf]
    %s1055 = scalar_lea.vmem %s5, 1
    %v1056 = vld [vmem:[%s1055] sm:$0x1]
    %s1057 = scalar_lea.vmem %s6, 16
    %v1058 = vld [vmem:[%s1057] sm:$0xf]
    %v1059 = vld [vmem:[%s1057 + $0x4] sm:$0xf]
    %v1060 = vld [vmem:[%s1057 + $0x8] sm:$0xf]
    %v1061 = vld [vmem:[%s1057 + $0xc] sm:$0xf]
    %s1062 = scalar_lea.vmem %s7, 1
    %v1063 = vld [vmem:[%s1062] sm:$0x1]
    %s1064 = scalar_lea.vmem %s8, 1
    %v1065 = vld [vmem:[%s1064] sm:$0x1]
    %s1066 = scalar_lea.vmem %s9, 1
    %v1067 = vld [vmem:[%s1066] sm:$0x1]
    %s1068 = scalar_lea.vmem %s10, 32
    %v1069 = vld [vmem:[%s1068] sm:$0xff]
    %v1070 = vld [vmem:[%s1068 + $0x8] sm:$0xff]
    %v1071 = vld [vmem:[%s1068 + $0x10] sm:$0xff]
    %v1072 = vld [vmem:[%s1068 + $0x18] sm:$0xff]
    %s1073 = scalar_lea.vmem %s11, 2
    %v1074 = vld [vmem:[%s1073] sm:$0x3]
    %s1075 = scalar_lea.vmem %s12, 64
    %v1076 = vld [vmem:[%s1075] sm:$0xf]
    %v1077 = vld [vmem:[%s1075 + $0x4] sm:$0xf]
    %v1078 = vld [vmem:[%s1075 + $0x8] sm:$0xf]
    %v1079 = vld [vmem:[%s1075 + $0xc] sm:$0xf]
    %v1080 = vld [vmem:[%s1075 + $0x10] sm:$0xf]
    %v1081 = vld [vmem:[%s1075 + $0x14] sm:$0xf]
    %v1082 = vld [vmem:[%s1075 + $0x18] sm:$0xf]
    %v1083 = vld [vmem:[%s1075 + $0x1c] sm:$0xf]
    %v1084 = vld [vmem:[%s1075 + $0x20] sm:$0xf]
    %v1085 = vld [vmem:[%s1075 + $0x24] sm:$0xf]
    %v1086 = vld [vmem:[%s1075 + $0x28] sm:$0xf]
    %v1087 = vld [vmem:[%s1075 + $0x2c] sm:$0xf]
    %v1088 = vld [vmem:[%s1075 + $0x30] sm:$0xf]
    %v1089 = vld [vmem:[%s1075 + $0x34] sm:$0xf]
    %v1090 = vld [vmem:[%s1075 + $0x38] sm:$0xf]
    %v1091 = vld [vmem:[%s1075 + $0x3c] sm:$0xf]
    %s1092 = scalar_lea.vmem %s13, 1
    %v1093 = vld [vmem:[%s1092] sm:$0x1]
    %v1094 = vsel %vm113, %v1044, 0.0
    %1095 = vadd.xlane.f32.xlu0 %v1094
    %v1096 = vpop.xlane.xlu0 %1095
    %v1097 = vsel %vm113, %v1045, 0.0
    %1098 = vadd.xlane.f32.xlu0 %v1097
    %v1099 = vpop.xlane.xlu0 %1098
    %v1100 = vmul.f32 %v1096, %v126
    %v1101 = vmul.f32 %v1099, %v126
    %v1102 = vsub.f32 %v1044, %v1100
    %v1103 = vsub.f32 %v1045, %v1101
    %v1104 = vmul.f32 %v1102, %v1102
    %v1105 = vmul.f32 %v1103, %v1103
    %v1106 = vsel %vm113, %v1104, 0.0
    %1107 = vadd.xlane.f32.xlu0 %v1106
    %v1108 = vpop.xlane.xlu0 %1107
    %v1109 = vsel %vm113, %v1105, 0.0
    %1110 = vadd.xlane.f32.xlu0 %v1109
    %v1111 = vpop.xlane.xlu0 %1110
    %v1112 = vmul.f32 %v1108, %v126
    %v1113 = vmul.f32 %v1111, %v126
    %v1114 = vadd.f32 %v1112, 1e-05
    %v1115 = vadd.f32 %v1113, 1e-05
    %v1116 = vrsqrt.pop %v1114
    %v1117 = vmul.f32 %v1116, %v1114
    %v1118 = vmul.f32 %v1117, %v1116
    %v1119 = vmul.f32 0.5, %v1118
    %v1120 = vsub.f32 1.5, %v1119
    %v1121 = vmul.f32 %v1116, %v1120
    %vm1122 = vweird.f32 %v1114
    %vm1123 = vweird.f32 %v1116
    %vm1124 = vmor %vm1122, %vm1123
    %v1125 = vsel %vm1124, %v1116, %v1121
    %v1126 = vrsqrt.pop %v1115
    %v1127 = vmul.f32 %v1126, %v1115
    %v1128 = vmul.f32 %v1127, %v1126
    %v1129 = vmul.f32 0.5, %v1128
    %v1130 = vsub.f32 1.5, %v1129
    %v1131 = vmul.f32 %v1126, %v1130
    %vm1132 = vweird.f32 %v1115
    %vm1133 = vweird.f32 %v1126
    %vm1134 = vmor %vm1132, %vm1133
    %v1135 = vsel %vm1134, %v1126, %v1131
    %v1136 = vmul.f32 %v1102, %v1125
    %v1137 = vmul.f32 %v1103, %v1135
    %v1139 = vperm.slane %v1047, 0
    %v1141 = vmul.f32 %v1136, %v1139
    %v1142 = vmul.f32 %v1137, %v1139
    %v1144 = vperm.slane %v1049, 0
    %v1146 = vadd.f32 %v1141, %v1144
    %v1147 = vadd.f32 %v1142, %v1144
    %v1148 = vpack.c.bf16 %v1147, %v1146
    %v1150 = vperm.slane %v1056, 0
    %v1156 = vunpack.c.l.b16 %v1051
    %v1157 = vunpack.c.l.b16 %v1052
    %v1158 = vunpack.c.l.b16 %v1053
    %v1159 = vunpack.c.l.b16 %v1054
    %v1160 = vpack.c.b16 %v1157, %v1156
    %v1161 = vpack.c.b16 %v1159, %v1158
    %v1165 = vsel %vm113, %v1148, 0
    %1167 = vmatpush.bf16.msra.mxu0 0
    %1168 = vmatpush.bf16.msra.mxu0 0
    %1169 = vmatpush.bf16.msra.mxu0 0
    %1170 = vmatpush.bf16.msra.mxu0 0
    %1171 = vmatpush.bf16.msra.mxu0 0
    %1172 = vmatpush.bf16.msra.mxu0 0
    %1173 = vmatpush.bf16.msra.mxu0 %v1161
    %1174 = vmatpush.bf16.msra.mxu0 %v1160
    %1175 = vmatmul.bf16.gmra.mxu0 %v1165
    %v1176 = vpop.f32.mrf.mxu0
    %v1177 = vadd.f32 %v1150, %v1176
    %v1178 = vpop.f32.mrf.mxu0
    %v1179 = vadd.f32 %v1150, %v1178
    %1180 = vdwg.mxu0
    %1183 = vrot.lane.b32.xlu0 %v1177, 120
    %v1184 = vpop.permute.xlu0 %1183
    %1185 = vrot.lane.b32.xlu0 %v1179, 120
    %v1186 = vpop.permute.xlu0 %1185
    %1189 = vrot.lane.b32.xlu0 %v1177, 112
    %v1190 = vpop.permute.xlu0 %1189
    %1191 = vrot.lane.b32.xlu0 %v1179, 112
    %v1192 = vpop.permute.xlu0 %1191
    %1195 = vrot.lane.b32.xlu0 %v1177, 104
    %v1196 = vpop.permute.xlu0 %1195
    %1197 = vrot.lane.b32.xlu0 %v1179, 104
    %v1198 = vpop.permute.xlu0 %1197
    %v1201 = vpack.c.bf16 %v1177, %v1177
    %v1202 = vpack.c.bf16 %v1179, %v1179
    %v1203 = vpack.c.bf16 %v1184, %v1184
    %v1204 = vpack.c.bf16 %v1186, %v1186
    %v1205 = vpack.c.bf16 %v1190, %v1190
    %v1206 = vpack.c.bf16 %v1192, %v1192
    %v1207 = vpack.c.bf16 %v1196, %v1196
    %v1208 = vpack.c.bf16 %v1198, %v1198
    %v1210 = vunpack.c.l.b16 %v1201
    %v1211 = vpack.c.b16 %v1210, %v1210
    %1212 = vrot.lane.b32.xlu0 %v1211, 96
    %v1213 = vpop.permute.xlu0 %1212
    %v1215 = vsel %vm241, %v1201, 0
    %v1218 = vsel %vm241, %v1213, 0
    %1220 = vmatpush.bf16.xpose.msra.mxu0 0
    %1221 = vmatpush.bf16.xpose.msra.mxu0 0
    %1222 = vmatpush.bf16.xpose.msra.mxu0 0
    %1223 = vmatpush.bf16.xpose.msra.mxu0 0
    %1224 = vmatpush.bf16.xpose.msra.mxu0 0
    %1225 = vmatpush.bf16.xpose.msra.mxu0 0
    %1226 = vmatpush.bf16.xpose.msra.mxu0 0
    %1227 = vmatpush.bf16.xpose.msra.mxu0 %v1218
    %1228 = vmatmul.bf16.gmra.mxu0 %v1215
    %v1229 = vpop.f32.mrf.mxu0
    %v1230 = vadd.f32 0.0, %v1229
    %v1231 = vpop.f32.mrf.mxu0
    %1232 = vdwg.mxu0
    %v1234 = vunpack.c.l.b16 %v1202
    %v1235 = vpack.c.b16 %v1234, %v1234
    %1236 = vrot.lane.b32.xlu0 %v1235, 96
    %v1237 = vpop.permute.xlu0 %1236
    %v1239 = vsel %vm241, %v1202, 0
    %v1242 = vsel %vm241, %v1237, 0
    %1244 = vmatpush.bf16.xpose.msra.mxu0 0
    %1245 = vmatpush.bf16.xpose.msra.mxu0 0
    %1246 = vmatpush.bf16.xpose.msra.mxu0 0
    %1247 = vmatpush.bf16.xpose.msra.mxu0 0
    %1248 = vmatpush.bf16.xpose.msra.mxu0 0
    %1249 = vmatpush.bf16.xpose.msra.mxu0 0
    %1250 = vmatpush.bf16.xpose.msra.mxu0 0
    %1251 = vmatpush.bf16.xpose.msra.mxu0 %v1242
    %1252 = vmatmul.bf16.gmra.mxu0 %v1239
    %v1253 = vpop.f32.mrf.mxu0
    %v1254 = vadd.f32 0.0, %v1253
    %v1255 = vpop.f32.mrf.mxu0
    %1256 = vdwg.mxu0
    %v1258 = vunpack.c.l.b16 %v1203
    %v1259 = vpack.c.b16 %v1258, %v1258
    %1260 = vrot.lane.b32.xlu0 %v1259, 96
    %v1261 = vpop.permute.xlu0 %1260
    %v1263 = vsel %vm241, %v1203, 0
    %v1266 = vsel %vm241, %v1261, 0
    %1268 = vmatpush.bf16.xpose.msra.mxu0 0
    %1269 = vmatpush.bf16.xpose.msra.mxu0 0
    %1270 = vmatpush.bf16.xpose.msra.mxu0 0
    %1271 = vmatpush.bf16.xpose.msra.mxu0 0
    %1272 = vmatpush.bf16.xpose.msra.mxu0 0
    %1273 = vmatpush.bf16.xpose.msra.mxu0 0
    %1274 = vmatpush.bf16.xpose.msra.mxu0 0
    %1275 = vmatpush.bf16.xpose.msra.mxu0 %v1266
    %1276 = vmatmul.bf16.gmra.mxu0 %v1263
    %v1277 = vpop.f32.mrf.mxu0
    %v1278 = vadd.f32 0.0, %v1277
    %v1279 = vpop.f32.mrf.mxu0
    %1280 = vdwg.mxu0
    %v1282 = vunpack.c.l.b16 %v1204
    %v1283 = vpack.c.b16 %v1282, %v1282
    %1284 = vrot.lane.b32.xlu0 %v1283, 96
    %v1285 = vpop.permute.xlu0 %1284
    %v1287 = vsel %vm241, %v1204, 0
    %v1290 = vsel %vm241, %v1285, 0
    %1292 = vmatpush.bf16.xpose.msra.mxu0 0
    %1293 = vmatpush.bf16.xpose.msra.mxu0 0
    %1294 = vmatpush.bf16.xpose.msra.mxu0 0
    %1295 = vmatpush.bf16.xpose.msra.mxu0 0
    %1296 = vmatpush.bf16.xpose.msra.mxu0 0
    %1297 = vmatpush.bf16.xpose.msra.mxu0 0
    %1298 = vmatpush.bf16.xpose.msra.mxu0 0
    %1299 = vmatpush.bf16.xpose.msra.mxu0 %v1290
    %1300 = vmatmul.bf16.gmra.mxu0 %v1287
    %v1301 = vpop.f32.mrf.mxu0
    %v1302 = vadd.f32 0.0, %v1301
    %v1303 = vpop.f32.mrf.mxu0
    %1304 = vdwg.mxu0
    %v1306 = vunpack.c.l.b16 %v1205
    %v1307 = vpack.c.b16 %v1306, %v1306
    %1308 = vrot.lane.b32.xlu0 %v1307, 96
    %v1309 = vpop.permute.xlu0 %1308
    %v1311 = vsel %vm241, %v1205, 0
    %v1314 = vsel %vm241, %v1309, 0
    %1316 = vmatpush.bf16.xpose.msra.mxu0 0
    %1317 = vmatpush.bf16.xpose.msra.mxu0 0
    %1318 = vmatpush.bf16.xpose.msra.mxu0 0
    %1319 = vmatpush.bf16.xpose.msra.mxu0 0
    %1320 = vmatpush.bf16.xpose.msra.mxu0 0
    %1321 = vmatpush.bf16.xpose.msra.mxu0 0
    %1322 = vmatpush.bf16.xpose.msra.mxu0 0
    %1323 = vmatpush.bf16.xpose.msra.mxu0 %v1314
    %1324 = vmatmul.bf16.gmra.mxu0 %v1311
    %v1325 = vpop.f32.mrf.mxu0
    %v1326 = vadd.f32 0.0, %v1325
    %v1327 = vpop.f32.mrf.mxu0
    %1328 = vdwg.mxu0
    %v1330 = vunpack.c.l.b16 %v1206
    %v1331 = vpack.c.b16 %v1330, %v1330
    %1332 = vrot.lane.b32.xlu0 %v1331, 96
    %v1333 = vpop.permute.xlu0 %1332
    %v1335 = vsel %vm241, %v1206, 0
    %v1338 = vsel %vm241, %v1333, 0
    %1340 = vmatpush.bf16.xpose.msra.mxu0 0
    %1341 = vmatpush.bf16.xpose.msra.mxu0 0
    %1342 = vmatpush.bf16.xpose.msra.mxu0 0
    %1343 = vmatpush.bf16.xpose.msra.mxu0 0
    %1344 = vmatpush.bf16.xpose.msra.mxu0 0
    %1345 = vmatpush.bf16.xpose.msra.mxu0 0
    %1346 = vmatpush.bf16.xpose.msra.mxu0 0
    %1347 = vmatpush.bf16.xpose.msra.mxu0 %v1338
    %1348 = vmatmul.bf16.gmra.mxu0 %v1335
    %v1349 = vpop.f32.mrf.mxu0
    %v1350 = vadd.f32 0.0, %v1349
    %v1351 = vpop.f32.mrf.mxu0
    %1352 = vdwg.mxu0
    %v1354 = vunpack.c.l.b16 %v1207
    %v1355 = vpack.c.b16 %v1354, %v1354
    %1356 = vrot.lane.b32.xlu0 %v1355, 96
    %v1357 = vpop.permute.xlu0 %1356
    %v1359 = vsel %vm241, %v1207, 0
    %v1362 = vsel %vm241, %v1357, 0
    %1364 = vmatpush.bf16.xpose.msra.mxu0 0
    %1365 = vmatpush.bf16.xpose.msra.mxu0 0
    %1366 = vmatpush.bf16.xpose.msra.mxu0 0
    %1367 = vmatpush.bf16.xpose.msra.mxu0 0
    %1368 = vmatpush.bf16.xpose.msra.mxu0 0
    %1369 = vmatpush.bf16.xpose.msra.mxu0 0
    %1370 = vmatpush.bf16.xpose.msra.mxu0 0
    %1371 = vmatpush.bf16.xpose.msra.mxu0 %v1362
    %1372 = vmatmul.bf16.gmra.mxu0 %v1359
    %v1373 = vpop.f32.mrf.mxu0
    %v1374 = vadd.f32 0.0, %v1373
    %v1375 = vpop.f32.mrf.mxu0
    %1376 = vdwg.mxu0
    %v1378 = vunpack.c.l.b16 %v1208
    %v1379 = vpack.c.b16 %v1378, %v1378
    %1380 = vrot.lane.b32.xlu0 %v1379, 96
    %v1381 = vpop.permute.xlu0 %1380
    %v1383 = vsel %vm241, %v1208, 0
    %v1386 = vsel %vm241, %v1381, 0
    %1388 = vmatpush.bf16.xpose.msra.mxu0 0
    %1389 = vmatpush.bf16.xpose.msra.mxu0 0
    %1390 = vmatpush.bf16.xpose.msra.mxu0 0
    %1391 = vmatpush.bf16.xpose.msra.mxu0 0
    %1392 = vmatpush.bf16.xpose.msra.mxu0 0
    %1393 = vmatpush.bf16.xpose.msra.mxu0 0
    %1394 = vmatpush.bf16.xpose.msra.mxu0 0
    %1395 = vmatpush.bf16.xpose.msra.mxu0 %v1386
    %1396 = vmatmul.bf16.gmra.mxu0 %v1383
    %v1397 = vpop.f32.mrf.mxu0
    %v1398 = vadd.f32 0.0, %v1397
    %v1399 = vpop.f32.mrf.mxu0
    %1400 = vdwg.mxu0
    %v1401 = vmul.f32 %v1230, 0.35355338
    %v1402 = vmul.f32 %v1254, 0.35355338
    %v1403 = vmul.f32 %v1278, 0.35355338
    %v1404 = vmul.f32 %v1302, 0.35355338
    %v1405 = vmul.f32 %v1326, 0.35355338
    %v1406 = vmul.f32 %v1350, 0.35355338
    %v1407 = vmul.f32 %v1374, 0.35355338
    %v1408 = vmul.f32 %v1398, 0.35355338
    %v1409 = vadd.f32 %v1401, %v72
    %v1410 = vadd.f32 %v1402, %v72
    %v1411 = vadd.f32 %v1403, %v72
    %v1412 = vadd.f32 %v1404, %v72
    %v1413 = vadd.f32 %v1405, %v72
    %v1414 = vadd.f32 %v1406, %v72
    %v1415 = vadd.f32 %v1407, %v72
    %v1416 = vadd.f32 %v1408, %v72
    %v1417 = vsel %vm241, %v1409, -inf
    %1418 = vmax.xlane.f32.xlu0 %v1417
    %v1419 = vpop.xlane.xlu0 %1418
    %v1420 = vsel %vm241, %v1410, -inf
    %1421 = vmax.xlane.f32.xlu0 %v1420
    %v1422 = vpop.xlane.xlu0 %1421
    %v1423 = vsel %vm241, %v1411, -inf
    %1424 = vmax.xlane.f32.xlu0 %v1423
    %v1425 = vpop.xlane.xlu0 %1424
    %v1426 = vsel %vm241, %v1412, -inf
    %1427 = vmax.xlane.f32.xlu0 %v1426
    %v1428 = vpop.xlane.xlu0 %1427
    %v1429 = vsel %vm241, %v1413, -inf
    %1430 = vmax.xlane.f32.xlu0 %v1429
    %v1431 = vpop.xlane.xlu0 %1430
    %v1432 = vsel %vm241, %v1414, -inf
    %1433 = vmax.xlane.f32.xlu0 %v1432
    %v1434 = vpop.xlane.xlu0 %1433
    %v1435 = vsel %vm241, %v1415, -inf
    %1436 = vmax.xlane.f32.xlu0 %v1435
    %v1437 = vpop.xlane.xlu0 %1436
    %v1438 = vsel %vm241, %v1416, -inf
    %1439 = vmax.xlane.f32.xlu0 %v1438
    %v1440 = vpop.xlane.xlu0 %1439
    %v1441 = vsub.f32 %v1409, %v1419
    %v1442 = vsub.f32 %v1410, %v1422
    %v1443 = vsub.f32 %v1411, %v1425
    %v1444 = vsub.f32 %v1412, %v1428
    %v1445 = vsub.f32 %v1413, %v1431
    %v1446 = vsub.f32 %v1414, %v1434
    %v1447 = vsub.f32 %v1415, %v1437
    %v1448 = vsub.f32 %v1416, %v1440
    %v1449 = vmul.f32 %v1441, 1.442695
    %v1450 = vpow.pop %v1449
    %v1451 = vmul.f32 %v1442, 1.442695
    %v1452 = vpow.pop %v1451
    %v1453 = vmul.f32 %v1443, 1.442695
    %v1454 = vpow.pop %v1453
    %v1455 = vmul.f32 %v1444, 1.442695
    %v1456 = vpow.pop %v1455
    %v1457 = vmul.f32 %v1445, 1.442695
    %v1458 = vpow.pop %v1457
    %v1459 = vmul.f32 %v1446, 1.442695
    %v1460 = vpow.pop %v1459
    %v1461 = vmul.f32 %v1447, 1.442695
    %v1462 = vpow.pop %v1461
    %v1463 = vmul.f32 %v1448, 1.442695
    %v1464 = vpow.pop %v1463
    %v1465 = vsel %vm241, %v1450, 0.0
    %1466 = vadd.xlane.f32.xlu0 %v1465
    %v1467 = vpop.xlane.xlu0 %1466
    %v1468 = vsel %vm241, %v1452, 0.0
    %1469 = vadd.xlane.f32.xlu0 %v1468
    %v1470 = vpop.xlane.xlu0 %1469
    %v1471 = vsel %vm241, %v1454, 0.0
    %1472 = vadd.xlane.f32.xlu0 %v1471
    %v1473 = vpop.xlane.xlu0 %1472
    %v1474 = vsel %vm241, %v1456, 0.0
    %1475 = vadd.xlane.f32.xlu0 %v1474
    %v1476 = vpop.xlane.xlu0 %1475
    %v1477 = vsel %vm241, %v1458, 0.0
    %1478 = vadd.xlane.f32.xlu0 %v1477
    %v1479 = vpop.xlane.xlu0 %1478
    %v1480 = vsel %vm241, %v1460, 0.0
    %1481 = vadd.xlane.f32.xlu0 %v1480
    %v1482 = vpop.xlane.xlu0 %1481
    %v1483 = vsel %vm241, %v1462, 0.0
    %1484 = vadd.xlane.f32.xlu0 %v1483
    %v1485 = vpop.xlane.xlu0 %1484
    %v1486 = vsel %vm241, %v1464, 0.0
    %1487 = vadd.xlane.f32.xlu0 %v1486
    %v1488 = vpop.xlane.xlu0 %1487
    %v1489 = vrcp.pop %v1467
    %v1490 = vrcp.pop %v1470
    %v1491 = vrcp.pop %v1473
    %v1492 = vrcp.pop %v1476
    %v1493 = vrcp.pop %v1479
    %v1494 = vrcp.pop %v1482
    %v1495 = vrcp.pop %v1485
    %v1496 = vrcp.pop %v1488
    %v1497 = vmul.f32 %v1450, %v1489
    %v1498 = vmul.f32 %v1452, %v1490
    %v1499 = vmul.f32 %v1454, %v1491
    %v1500 = vmul.f32 %v1456, %v1492
    %v1501 = vmul.f32 %v1458, %v1493
    %v1502 = vmul.f32 %v1460, %v1494
    %v1503 = vmul.f32 %v1462, %v1495
    %v1504 = vmul.f32 %v1464, %v1496
    %v1505 = vpack.c.bf16 %v1497, %v1497
    %v1506 = vpack.c.bf16 %v1498, %v1498
    %v1507 = vpack.c.bf16 %v1499, %v1499
    %v1508 = vpack.c.bf16 %v1500, %v1500
    %v1509 = vpack.c.bf16 %v1501, %v1501
    %v1510 = vpack.c.bf16 %v1502, %v1502
    %v1511 = vpack.c.bf16 %v1503, %v1503
    %v1512 = vpack.c.bf16 %v1504, %v1504
    %1513 = vrot.lane.b32.xlu0 %v1211, 64
    %v1514 = vpop.permute.xlu0 %1513
    %v1516 = vsel %vm241, %v1505, 0
    %v1519 = vsel %vm546, %v1514, 0
    %1521 = vmatpush.bf16.msra.mxu0 0
    %1522 = vmatpush.bf16.msra.mxu0 0
    %1523 = vmatpush.bf16.msra.mxu0 0
    %1524 = vmatpush.bf16.msra.mxu0 0
    %1525 = vmatpush.bf16.msra.mxu0 0
    %1526 = vmatpush.bf16.msra.mxu0 0
    %1527 = vmatpush.bf16.msra.mxu0 0
    %1528 = vmatpush.bf16.msra.mxu0 %v1519
    %1529 = vmatmul.bf16.gmra.mxu0 %v1516
    %v1530 = vpop.f32.mrf.mxu0
    %v1531 = vadd.f32 0.0, %v1530
    %v1532 = vpop.f32.mrf.mxu0
    %1533 = vdwg.mxu0
    %1534 = vrot.lane.b32.xlu0 %v1235, 64
    %v1535 = vpop.permute.xlu0 %1534
    %v1537 = vsel %vm241, %v1506, 0
    %v1540 = vsel %vm546, %v1535, 0
    %1542 = vmatpush.bf16.msra.mxu0 0
    %1543 = vmatpush.bf16.msra.mxu0 0
    %1544 = vmatpush.bf16.msra.mxu0 0
    %1545 = vmatpush.bf16.msra.mxu0 0
    %1546 = vmatpush.bf16.msra.mxu0 0
    %1547 = vmatpush.bf16.msra.mxu0 0
    %1548 = vmatpush.bf16.msra.mxu0 0
    %1549 = vmatpush.bf16.msra.mxu0 %v1540
    %1550 = vmatmul.bf16.gmra.mxu0 %v1537
    %v1551 = vpop.f32.mrf.mxu0
    %v1552 = vadd.f32 0.0, %v1551
    %v1553 = vpop.f32.mrf.mxu0
    %1554 = vdwg.mxu0
    %1555 = vrot.lane.b32.xlu0 %v1259, 64
    %v1556 = vpop.permute.xlu0 %1555
    %v1558 = vsel %vm241, %v1507, 0
    %v1561 = vsel %vm546, %v1556, 0
    %1563 = vmatpush.bf16.msra.mxu0 0
    %1564 = vmatpush.bf16.msra.mxu0 0
    %1565 = vmatpush.bf16.msra.mxu0 0
    %1566 = vmatpush.bf16.msra.mxu0 0
    %1567 = vmatpush.bf16.msra.mxu0 0
    %1568 = vmatpush.bf16.msra.mxu0 0
    %1569 = vmatpush.bf16.msra.mxu0 0
    %1570 = vmatpush.bf16.msra.mxu0 %v1561
    %1571 = vmatmul.bf16.gmra.mxu0 %v1558
    %v1572 = vpop.f32.mrf.mxu0
    %v1573 = vadd.f32 0.0, %v1572
    %v1574 = vpop.f32.mrf.mxu0
    %1575 = vdwg.mxu0
    %1576 = vrot.lane.b32.xlu0 %v1283, 64
    %v1577 = vpop.permute.xlu0 %1576
    %v1579 = vsel %vm241, %v1508, 0
    %v1582 = vsel %vm546, %v1577, 0
    %1584 = vmatpush.bf16.msra.mxu0 0
    %1585 = vmatpush.bf16.msra.mxu0 0
    %1586 = vmatpush.bf16.msra.mxu0 0
    %1587 = vmatpush.bf16.msra.mxu0 0
    %1588 = vmatpush.bf16.msra.mxu0 0
    %1589 = vmatpush.bf16.msra.mxu0 0
    %1590 = vmatpush.bf16.msra.mxu0 0
    %1591 = vmatpush.bf16.msra.mxu0 %v1582
    %1592 = vmatmul.bf16.gmra.mxu0 %v1579
    %v1593 = vpop.f32.mrf.mxu0
    %v1594 = vadd.f32 0.0, %v1593
    %v1595 = vpop.f32.mrf.mxu0
    %1596 = vdwg.mxu0
    %1597 = vrot.lane.b32.xlu0 %v1307, 64
    %v1598 = vpop.permute.xlu0 %1597
    %v1600 = vsel %vm241, %v1509, 0
    %v1603 = vsel %vm546, %v1598, 0
    %1605 = vmatpush.bf16.msra.mxu0 0
    %1606 = vmatpush.bf16.msra.mxu0 0
    %1607 = vmatpush.bf16.msra.mxu0 0
    %1608 = vmatpush.bf16.msra.mxu0 0
    %1609 = vmatpush.bf16.msra.mxu0 0
    %1610 = vmatpush.bf16.msra.mxu0 0
    %1611 = vmatpush.bf16.msra.mxu0 0
    %1612 = vmatpush.bf16.msra.mxu0 %v1603
    %1613 = vmatmul.bf16.gmra.mxu0 %v1600
    %v1614 = vpop.f32.mrf.mxu0
    %v1615 = vadd.f32 0.0, %v1614
    %v1616 = vpop.f32.mrf.mxu0
    %1617 = vdwg.mxu0
    %1618 = vrot.lane.b32.xlu0 %v1331, 64
    %v1619 = vpop.permute.xlu0 %1618
    %v1621 = vsel %vm241, %v1510, 0
    %v1624 = vsel %vm546, %v1619, 0
    %1626 = vmatpush.bf16.msra.mxu0 0
    %1627 = vmatpush.bf16.msra.mxu0 0
    %1628 = vmatpush.bf16.msra.mxu0 0
    %1629 = vmatpush.bf16.msra.mxu0 0
    %1630 = vmatpush.bf16.msra.mxu0 0
    %1631 = vmatpush.bf16.msra.mxu0 0
    %1632 = vmatpush.bf16.msra.mxu0 0
    %1633 = vmatpush.bf16.msra.mxu0 %v1624
    %1634 = vmatmul.bf16.gmra.mxu0 %v1621
    %v1635 = vpop.f32.mrf.mxu0
    %v1636 = vadd.f32 0.0, %v1635
    %v1637 = vpop.f32.mrf.mxu0
    %1638 = vdwg.mxu0
    %1639 = vrot.lane.b32.xlu0 %v1355, 64
    %v1640 = vpop.permute.xlu0 %1639
    %v1642 = vsel %vm241, %v1511, 0
    %v1645 = vsel %vm546, %v1640, 0
    %1647 = vmatpush.bf16.msra.mxu0 0
    %1648 = vmatpush.bf16.msra.mxu0 0
    %1649 = vmatpush.bf16.msra.mxu0 0
    %1650 = vmatpush.bf16.msra.mxu0 0
    %1651 = vmatpush.bf16.msra.mxu0 0
    %1652 = vmatpush.bf16.msra.mxu0 0
    %1653 = vmatpush.bf16.msra.mxu0 0
    %1654 = vmatpush.bf16.msra.mxu0 %v1645
    %1655 = vmatmul.bf16.gmra.mxu0 %v1642
    %v1656 = vpop.f32.mrf.mxu0
    %v1657 = vadd.f32 0.0, %v1656
    %v1658 = vpop.f32.mrf.mxu0
    %1659 = vdwg.mxu0
    %1660 = vrot.lane.b32.xlu0 %v1379, 64
    %v1661 = vpop.permute.xlu0 %1660
    %v1663 = vsel %vm241, %v1512, 0
    %v1666 = vsel %vm546, %v1661, 0
    %1668 = vmatpush.bf16.msra.mxu0 0
    %1669 = vmatpush.bf16.msra.mxu0 0
    %1670 = vmatpush.bf16.msra.mxu0 0
    %1671 = vmatpush.bf16.msra.mxu0 0
    %1672 = vmatpush.bf16.msra.mxu0 0
    %1673 = vmatpush.bf16.msra.mxu0 0
    %1674 = vmatpush.bf16.msra.mxu0 0
    %1675 = vmatpush.bf16.msra.mxu0 %v1666
    %1676 = vmatmul.bf16.gmra.mxu0 %v1663
    %v1677 = vpop.f32.mrf.mxu0
    %v1678 = vadd.f32 0.0, %v1677
    %v1679 = vpop.f32.mrf.mxu0
    %1680 = vdwg.mxu0
    %1683 = vrot.lane.b32.xlu0 %v1573, 8
    %v1684 = vpop.permute.xlu0 %1683
    %1685 = vrot.lane.b32.xlu0 %v1594, 8
    %v1686 = vpop.permute.xlu0 %1685
    %1691 = vrot.lane.b32.xlu0 %v1615, 16
    %v1692 = vpop.permute.xlu0 %1691
    %1693 = vrot.lane.b32.xlu0 %v1636, 16
    %v1694 = vpop.permute.xlu0 %1693
    %1699 = vrot.lane.b32.xlu0 %v1657, 24
    %v1700 = vpop.permute.xlu0 %1699
    %1701 = vrot.lane.b32.xlu0 %v1678, 24
    %v1702 = vpop.permute.xlu0 %1701
    %v1705 = vsel %vm241, %v1531, %v1684
    %v1706 = vsel %vm241, %v1552, %v1686
    %v1707 = vsel %vm736, %v1705, %v1692
    %v1708 = vsel %vm736, %v1706, %v1694
    %v1709 = vsel %vm739, %v1707, %v1700
    %v1710 = vsel %vm739, %v1708, %v1702
    %v1711 = vpack.c.bf16 %v1710, %v1709
    %v1713 = vperm.slane %v1063, 0
    %v1719 = vunpack.c.l.b16 %v1058
    %v1720 = vunpack.c.l.b16 %v1059
    %v1721 = vunpack.c.l.b16 %v1060
    %v1722 = vunpack.c.l.b16 %v1061
    %v1723 = vpack.c.b16 %v1720, %v1719
    %v1724 = vpack.c.b16 %v1722, %v1721
    %v1728 = vsel %vm113, %v1711, 0
    %1730 = vmatpush.bf16.msra.mxu0 0
    %1731 = vmatpush.bf16.msra.mxu0 0
    %1732 = vmatpush.bf16.msra.mxu0 0
    %1733 = vmatpush.bf16.msra.mxu0 0
    %1734 = vmatpush.bf16.msra.mxu0 0
    %1735 = vmatpush.bf16.msra.mxu0 0
    %1736 = vmatpush.bf16.msra.mxu0 %v1724
    %1737 = vmatpush.bf16.msra.mxu0 %v1723
    %1738 = vmatmul.bf16.gmra.mxu0 %v1728
    %v1739 = vpop.f32.mrf.mxu0
    %v1740 = vadd.f32 %v1713, %v1739
    %v1741 = vpop.f32.mrf.mxu0
    %v1742 = vadd.f32 %v1713, %v1741
    %1743 = vdwg.mxu0
    %v1744 = vadd.f32 %v1044, %v1740
    %v1745 = vadd.f32 %v1045, %v1742
    %v1746 = vsel %vm113, %v1744, 0.0
    %1747 = vadd.xlane.f32.xlu0 %v1746
    %v1748 = vpop.xlane.xlu0 %1747
    %v1749 = vsel %vm113, %v1745, 0.0
    %1750 = vadd.xlane.f32.xlu0 %v1749
    %v1751 = vpop.xlane.xlu0 %1750
    %v1752 = vmul.f32 %v1748, %v126
    %v1753 = vmul.f32 %v1751, %v126
    %v1754 = vsub.f32 %v1744, %v1752
    %v1755 = vsub.f32 %v1745, %v1753
    %v1756 = vmul.f32 %v1754, %v1754
    %v1757 = vmul.f32 %v1755, %v1755
    %v1758 = vsel %vm113, %v1756, 0.0
    %1759 = vadd.xlane.f32.xlu0 %v1758
    %v1760 = vpop.xlane.xlu0 %1759
    %v1761 = vsel %vm113, %v1757, 0.0
    %1762 = vadd.xlane.f32.xlu0 %v1761
    %v1763 = vpop.xlane.xlu0 %1762
    %v1764 = vmul.f32 %v1760, %v126
    %v1765 = vmul.f32 %v1763, %v126
    %v1766 = vadd.f32 %v1764, 1e-05
    %v1767 = vadd.f32 %v1765, 1e-05
    %v1768 = vrsqrt.pop %v1766
    %v1769 = vmul.f32 %v1768, %v1766
    %v1770 = vmul.f32 %v1769, %v1768
    %v1771 = vmul.f32 0.5, %v1770
    %v1772 = vsub.f32 1.5, %v1771
    %v1773 = vmul.f32 %v1768, %v1772
    %vm1774 = vweird.f32 %v1766
    %vm1775 = vweird.f32 %v1768
    %vm1776 = vmor %vm1774, %vm1775
    %v1777 = vsel %vm1776, %v1768, %v1773
    %v1778 = vrsqrt.pop %v1767
    %v1779 = vmul.f32 %v1778, %v1767
    %v1780 = vmul.f32 %v1779, %v1778
    %v1781 = vmul.f32 0.5, %v1780
    %v1782 = vsub.f32 1.5, %v1781
    %v1783 = vmul.f32 %v1778, %v1782
    %vm1784 = vweird.f32 %v1767
    %vm1785 = vweird.f32 %v1778
    %vm1786 = vmor %vm1784, %vm1785
    %v1787 = vsel %vm1786, %v1778, %v1783
    %v1788 = vmul.f32 %v1754, %v1777
    %v1789 = vmul.f32 %v1755, %v1787
    %v1791 = vperm.slane %v1065, 0
    %v1793 = vmul.f32 %v1788, %v1791
    %v1794 = vmul.f32 %v1789, %v1791
    %v1796 = vperm.slane %v1067, 0
    %v1798 = vadd.f32 %v1793, %v1796
    %v1799 = vadd.f32 %v1794, %v1796
    %v1800 = vpack.c.bf16 %v1799, %v1798
    %v1802 = vperm.slane %v1074, 0
    %v1803 = vperm.slane %v1074, 1
    %v1810 = vunpack.c.l.b16 %v1069
    %v1811 = vunpack.c.h.b16 %v1069
    %v1812 = vunpack.c.l.b16 %v1070
    %v1813 = vunpack.c.h.b16 %v1070
    %v1814 = vunpack.c.l.b16 %v1071
    %v1815 = vunpack.c.h.b16 %v1071
    %v1816 = vunpack.c.l.b16 %v1072
    %v1817 = vunpack.c.h.b16 %v1072
    %v1818 = vpack.c.b16 %v1812, %v1810
    %v1819 = vpack.c.b16 %v1813, %v1811
    %v1820 = vpack.c.b16 %v1816, %v1814
    %v1821 = vpack.c.b16 %v1817, %v1815
    %v1827 = vsel %vm113, %v1800, 0
    %1829 = vmatpush.bf16.msra.mxu0 0
    %1830 = vmatpush.bf16.msra.mxu0 0
    %1831 = vmatpush.bf16.msra.mxu0 0
    %1832 = vmatpush.bf16.msra.mxu0 0
    %1833 = vmatpush.bf16.msra.mxu0 0
    %1834 = vmatpush.bf16.msra.mxu0 0
    %1835 = vmatpush.bf16.msra.mxu0 %v1820
    %1836 = vmatpush.bf16.msra.mxu0 %v1818
    %1837 = vmatmul.bf16.gmra.mxu0 %v1827
    %v1838 = vpop.f32.mrf.mxu0
    %v1839 = vadd.f32 %v1802, %v1838
    %v1840 = vpop.f32.mrf.mxu0
    %v1841 = vadd.f32 %v1802, %v1840
    %1842 = vdwg.mxu0
    %1843 = vmatpush.bf16.msra.mxu0 0
    %1844 = vmatpush.bf16.msra.mxu0 0
    %1845 = vmatpush.bf16.msra.mxu0 0
    %1846 = vmatpush.bf16.msra.mxu0 0
    %1847 = vmatpush.bf16.msra.mxu0 0
    %1848 = vmatpush.bf16.msra.mxu0 0
    %1849 = vmatpush.bf16.msra.mxu0 %v1821
    %1850 = vmatpush.bf16.msra.mxu0 %v1819
    %1851 = vmatmul.bf16.gmra.mxu0 %v1827
    %v1852 = vpop.f32.mrf.mxu0
    %v1853 = vadd.f32 %v1803, %v1852
    %v1854 = vpop.f32.mrf.mxu0
    %v1855 = vadd.f32 %v1803, %v1854
    %1856 = vdwg.mxu0
    %v1857 = vmul.f32 %v1853, 0.5
    %v1858 = vmul.f32 %v1855, 0.5
    %v1859 = vmul.f32 %v1853, 0.70710677
    %v1860 = vmul.f32 %v1855, 0.70710677
    %v1861 = vmul.f32 %v1859, %v1859
    %v1862 = vmin.f32 16.0, %v1861
    %v1863 = vmul.f32 %v1862, 2.1237322e-06
    %v1864 = vadd.f32 %v1863, 0.00028619796
    %v1865 = vmul.f32 %v1862, %v1864
    %v1866 = vadd.f32 %v1865, 0.0036580483
    %v1867 = vmul.f32 %v1862, %v1866
    %v1868 = vadd.f32 %v1867, 0.05243302
    %v1869 = vmul.f32 %v1862, %v1868
    %v1870 = vadd.f32 %v1869, 0.18741608
    %v1871 = vmul.f32 %v1862, %v1870
    %v1872 = vadd.f32 %v1871, 1.1283791
    %v1873 = vmul.f32 %v1859, %v1872
    %v1874 = vmul.f32 %v1862, 3.8918573e-05
    %v1875 = vadd.f32 %v1874, 0.001143296
    %v1876 = vmul.f32 %v1862, %v1875
    %v1877 = vadd.f32 %v1876, 0.014752088
    %v1878 = vmul.f32 %v1862, %v1877
    %v1879 = vadd.f32 %v1878, 0.112945676
    %v1880 = vmul.f32 %v1862, %v1879
    %v1881 = vadd.f32 %v1880, 0.4994258
    %v1882 = vmul.f32 %v1862, %v1881
    %v1883 = vadd.f32 %v1882, 1.0
    %v1884 = vrcp.pop %v1883
    %v1885 = vmul.f32 %v1883, %v1884
    %v1886 = vsub.f32 1.0, %v1885
    %v1887 = vmul.f32 %v1884, %v1886
    %v1888 = vadd.f32 %v1884, %v1887
    %vm1889 = vweird.f32 %v1883
    %vm1890 = vweird.f32 %v1884
    %vm1891 = vmor %vm1889, %vm1890
    %v1892 = vsel %vm1891, %v1884, %v1888
    %v1893 = vand.u32 2147483647, %v1883
    %vm1894 = vcmp.eq.f32.partialorder %v1893, 8.507059e+37
    %v1895 = vand.u32 %v1883, 2147483648
    %v1896 = vor.u32 1.1754944e-38, %v1895
    %v1897 = vsel %vm1894, %v1896, %v1892
    %v1898 = vmul.f32 %v1873, %v1897
    %v1899 = vmin.f32 %v1898, 1.0
    %v1900 = vmax.f32 %v1899, -1.0
    %v1901 = vmul.f32 %v1860, %v1860
    %v1902 = vmin.f32 16.0, %v1901
    %v1903 = vmul.f32 %v1902, 2.1237322e-06
    %v1904 = vadd.f32 %v1903, 0.00028619796
    %v1905 = vmul.f32 %v1902, %v1904
    %v1906 = vadd.f32 %v1905, 0.0036580483
    %v1907 = vmul.f32 %v1902, %v1906
    %v1908 = vadd.f32 %v1907, 0.05243302
    %v1909 = vmul.f32 %v1902, %v1908
    %v1910 = vadd.f32 %v1909, 0.18741608
    %v1911 = vmul.f32 %v1902, %v1910
    %v1912 = vadd.f32 %v1911, 1.1283791
    %v1913 = vmul.f32 %v1860, %v1912
    %v1914 = vmul.f32 %v1902, 3.8918573e-05
    %v1915 = vadd.f32 %v1914, 0.001143296
    %v1916 = vmul.f32 %v1902, %v1915
    %v1917 = vadd.f32 %v1916, 0.014752088
    %v1918 = vmul.f32 %v1902, %v1917
    %v1919 = vadd.f32 %v1918, 0.112945676
    %v1920 = vmul.f32 %v1902, %v1919
    %v1921 = vadd.f32 %v1920, 0.4994258
    %v1922 = vmul.f32 %v1902, %v1921
    %v1923 = vadd.f32 %v1922, 1.0
    %v1924 = vrcp.pop %v1923
    %v1925 = vmul.f32 %v1923, %v1924
    %v1926 = vsub.f32 1.0, %v1925
    %v1927 = vmul.f32 %v1924, %v1926
    %v1928 = vadd.f32 %v1924, %v1927
    %vm1929 = vweird.f32 %v1923
    %vm1930 = vweird.f32 %v1924
    %vm1931 = vmor %vm1929, %vm1930
    %v1932 = vsel %vm1931, %v1924, %v1928
    %v1933 = vand.u32 2147483647, %v1923
    %vm1934 = vcmp.eq.f32.partialorder %v1933, 8.507059e+37
    %v1935 = vand.u32 %v1923, 2147483648
    %v1936 = vor.u32 1.1754944e-38, %v1935
    %v1937 = vsel %vm1934, %v1936, %v1932
    %v1938 = vmul.f32 %v1913, %v1937
    %v1939 = vmin.f32 %v1938, 1.0
    %v1940 = vmax.f32 %v1939, -1.0
    %v1941 = vadd.f32 %v1900, 1.0
    %v1942 = vadd.f32 %v1940, 1.0
    %v1943 = vmul.f32 %v1857, %v1941
    %v1944 = vmul.f32 %v1858, %v1942
    %v1945 = vmul.f32 %v1943, %v1839
    %v1946 = vmul.f32 %v1944, %v1841
    %v1947 = vpack.c.bf16 %v1946, %v1945
    %v1949 = vperm.slane %v1093, 0
    %v1967 = vunpack.c.l.b16 %v1076
    %v1968 = vunpack.c.l.b16 %v1077
    %v1969 = vunpack.c.l.b16 %v1078
    %v1970 = vunpack.c.l.b16 %v1079
    %v1971 = vunpack.c.l.b16 %v1080
    %v1972 = vunpack.c.l.b16 %v1081
    %v1973 = vunpack.c.l.b16 %v1082
    %v1974 = vunpack.c.l.b16 %v1083
    %v1975 = vunpack.c.l.b16 %v1084
    %v1976 = vunpack.c.l.b16 %v1085
    %v1977 = vunpack.c.l.b16 %v1086
    %v1978 = vunpack.c.l.b16 %v1087
    %v1979 = vunpack.c.l.b16 %v1088
    %v1980 = vunpack.c.l.b16 %v1089
    %v1981 = vunpack.c.l.b16 %v1090
    %v1982 = vunpack.c.l.b16 %v1091
    %v1983 = vpack.c.b16 %v1968, %v1967
    %v1984 = vpack.c.b16 %v1970, %v1969
    %v1985 = vpack.c.b16 %v1972, %v1971
    %v1986 = vpack.c.b16 %v1974, %v1973
    %v1987 = vpack.c.b16 %v1976, %v1975
    %v1988 = vpack.c.b16 %v1978, %v1977
    %v1989 = vpack.c.b16 %v1980, %v1979
    %v1990 = vpack.c.b16 %v1982, %v1981
    %1999 = vmatpush.bf16.msra.mxu0 %v1990
    %2000 = vmatpush.bf16.msra.mxu0 %v1989
    %2001 = vmatpush.bf16.msra.mxu0 %v1988
    %2002 = vmatpush.bf16.msra.mxu0 %v1987
    %2003 = vmatpush.bf16.msra.mxu0 %v1986
    %2004 = vmatpush.bf16.msra.mxu0 %v1985
    %2005 = vmatpush.bf16.msra.mxu0 %v1984
    %2006 = vmatpush.bf16.msra.mxu0 %v1983
    %2007 = vmatmul.bf16.gmra.mxu0 %v1947
    %v2008 = vpop.f32.mrf.mxu0
    %v2009 = vadd.f32 %v1949, %v2008
    %v2010 = vpop.f32.mrf.mxu0
    %v2011 = vadd.f32 %v1949, %v2010
    %2012 = vdwg.mxu0
    %v2013 = vadd.f32 %v1744, %v2009
    %v2014 = vadd.f32 %v1745, %v2011
    %s2015 = sld [smem:[#allocation2]]
    %v2016 = vstv %s2015
    %v2017 = vmul.f32 %v2016, %v2013
    %v2018 = vmul.f32 %v2016, %v2014
    %v2019 = vadd.f32 %v65, %v2017
    %v2020 = vadd.f32 %v66, %v2018
    %v2021 = vld [vmem:[%s1 + $0x1] sm:$0x1]
    %v2022 = vperm.slane %v2021, 0
    %v2023 = vadd.f32 %v2019, %v2022
    %v2024 = vadd.f32 %v2020, %v2022
    %v2025 = vld [vmem:[%s2] sm:$0x1]
    %v2026 = vld [vmem:[%s3] sm:$0x1]
    %v2027 = vld [vmem:[%s4] sm:$0xf]
    %v2028 = vld [vmem:[%s4 + $0x4] sm:$0xf]
    %v2029 = vld [vmem:[%s4 + $0x8] sm:$0xf]
    %v2030 = vld [vmem:[%s4 + $0xc] sm:$0xf]
    %v2031 = vld [vmem:[%s5] sm:$0x1]
    %v2032 = vld [vmem:[%s6] sm:$0xf]
    %v2033 = vld [vmem:[%s6 + $0x4] sm:$0xf]
    %v2034 = vld [vmem:[%s6 + $0x8] sm:$0xf]
    %v2035 = vld [vmem:[%s6 + $0xc] sm:$0xf]
    %v2036 = vld [vmem:[%s7] sm:$0x1]
    %v2037 = vld [vmem:[%s8] sm:$0x1]
    %v2038 = vld [vmem:[%s9] sm:$0x1]
    %v2039 = vld [vmem:[%s10] sm:$0xff]
    %v2040 = vld [vmem:[%s10 + $0x8] sm:$0xff]
    %v2041 = vld [vmem:[%s10 + $0x10] sm:$0xff]
    %v2042 = vld [vmem:[%s10 + $0x18] sm:$0xff]
    %v2043 = vld [vmem:[%s11] sm:$0x3]
    %v2044 = vld [vmem:[%s12] sm:$0xf]
    %v2045 = vld [vmem:[%s12 + $0x4] sm:$0xf]
    %v2046 = vld [vmem:[%s12 + $0x8] sm:$0xf]
    %v2047 = vld [vmem:[%s12 + $0xc] sm:$0xf]
    %v2048 = vld [vmem:[%s12 + $0x10] sm:$0xf]
    %v2049 = vld [vmem:[%s12 + $0x14] sm:$0xf]
    %v2050 = vld [vmem:[%s12 + $0x18] sm:$0xf]
    %v2051 = vld [vmem:[%s12 + $0x1c] sm:$0xf]
    %v2052 = vld [vmem:[%s12 + $0x20] sm:$0xf]
    %v2053 = vld [vmem:[%s12 + $0x24] sm:$0xf]
    %v2054 = vld [vmem:[%s12 + $0x28] sm:$0xf]
    %v2055 = vld [vmem:[%s12 + $0x2c] sm:$0xf]
    %v2056 = vld [vmem:[%s12 + $0x30] sm:$0xf]
    %v2057 = vld [vmem:[%s12 + $0x34] sm:$0xf]
    %v2058 = vld [vmem:[%s12 + $0x38] sm:$0xf]
    %v2059 = vld [vmem:[%s12 + $0x3c] sm:$0xf]
    %v2060 = vld [vmem:[%s13] sm:$0x1]
    %v2061 = vsel %vm113, %v2023, 0.0
    %2062 = vadd.xlane.f32.xlu0 %v2061
    %v2063 = vpop.xlane.xlu0 %2062
    %v2064 = vsel %vm113, %v2024, 0.0
    %2065 = vadd.xlane.f32.xlu0 %v2064
    %v2066 = vpop.xlane.xlu0 %2065
    %v2067 = vmul.f32 %v2063, %v126
    %v2068 = vmul.f32 %v2066, %v126
    %v2069 = vsub.f32 %v2023, %v2067
    %v2070 = vsub.f32 %v2024, %v2068
    %v2071 = vmul.f32 %v2069, %v2069
    %v2072 = vmul.f32 %v2070, %v2070
    %v2073 = vsel %vm113, %v2071, 0.0
    %2074 = vadd.xlane.f32.xlu0 %v2073
    %v2075 = vpop.xlane.xlu0 %2074
    %v2076 = vsel %vm113, %v2072, 0.0
    %2077 = vadd.xlane.f32.xlu0 %v2076
    %v2078 = vpop.xlane.xlu0 %2077
    %v2079 = vmul.f32 %v2075, %v126
    %v2080 = vmul.f32 %v2078, %v126
    %v2081 = vadd.f32 %v2079, 1e-05
    %v2082 = vadd.f32 %v2080, 1e-05
    %v2083 = vrsqrt.pop %v2081
    %v2084 = vmul.f32 %v2083, %v2081
    %v2085 = vmul.f32 %v2084, %v2083
    %v2086 = vmul.f32 0.5, %v2085
    %v2087 = vsub.f32 1.5, %v2086
    %v2088 = vmul.f32 %v2083, %v2087
    %vm2089 = vweird.f32 %v2081
    %vm2090 = vweird.f32 %v2083
    %vm2091 = vmor %vm2089, %vm2090
    %v2092 = vsel %vm2091, %v2083, %v2088
    %v2093 = vrsqrt.pop %v2082
    %v2094 = vmul.f32 %v2093, %v2082
    %v2095 = vmul.f32 %v2094, %v2093
    %v2096 = vmul.f32 0.5, %v2095
    %v2097 = vsub.f32 1.5, %v2096
    %v2098 = vmul.f32 %v2093, %v2097
    %vm2099 = vweird.f32 %v2082
    %vm2100 = vweird.f32 %v2093
    %vm2101 = vmor %vm2099, %vm2100
    %v2102 = vsel %vm2101, %v2093, %v2098
    %v2103 = vmul.f32 %v2069, %v2092
    %v2104 = vmul.f32 %v2070, %v2102
    %v2106 = vperm.slane %v2025, 0
    %v2108 = vmul.f32 %v2103, %v2106
    %v2109 = vmul.f32 %v2104, %v2106
    %v2111 = vperm.slane %v2026, 0
    %v2113 = vadd.f32 %v2108, %v2111
    %v2114 = vadd.f32 %v2109, %v2111
    %v2115 = vpack.c.bf16 %v2114, %v2113
    %v2117 = vperm.slane %v2031, 0
    %v2123 = vunpack.c.l.b16 %v2027
    %v2124 = vunpack.c.l.b16 %v2028
    %v2125 = vunpack.c.l.b16 %v2029
    %v2126 = vunpack.c.l.b16 %v2030
    %v2127 = vpack.c.b16 %v2124, %v2123
    %v2128 = vpack.c.b16 %v2126, %v2125
    %v2132 = vsel %vm113, %v2115, 0
    %2134 = vmatpush.bf16.msra.mxu0 0
    %2135 = vmatpush.bf16.msra.mxu0 0
    %2136 = vmatpush.bf16.msra.mxu0 0
    %2137 = vmatpush.bf16.msra.mxu0 0
    %2138 = vmatpush.bf16.msra.mxu0 0
    %2139 = vmatpush.bf16.msra.mxu0 0
    %2140 = vmatpush.bf16.msra.mxu0 %v2128
    %2141 = vmatpush.bf16.msra.mxu0 %v2127
    %2142 = vmatmul.bf16.gmra.mxu0 %v2132
    %v2143 = vpop.f32.mrf.mxu0
    %v2144 = vadd.f32 %v2117, %v2143
    %v2145 = vpop.f32.mrf.mxu0
    %v2146 = vadd.f32 %v2117, %v2145
    %2147 = vdwg.mxu0
    %2150 = vrot.lane.b32.xlu0 %v2144, 120
    %v2151 = vpop.permute.xlu0 %2150
    %2152 = vrot.lane.b32.xlu0 %v2146, 120
    %v2153 = vpop.permute.xlu0 %2152
    %2156 = vrot.lane.b32.xlu0 %v2144, 112
    %v2157 = vpop.permute.xlu0 %2156
    %2158 = vrot.lane.b32.xlu0 %v2146, 112
    %v2159 = vpop.permute.xlu0 %2158
    %2162 = vrot.lane.b32.xlu0 %v2144, 104
    %v2163 = vpop.permute.xlu0 %2162
    %2164 = vrot.lane.b32.xlu0 %v2146, 104
    %v2165 = vpop.permute.xlu0 %2164
    %v2168 = vpack.c.bf16 %v2144, %v2144
    %v2169 = vpack.c.bf16 %v2146, %v2146
    %v2170 = vpack.c.bf16 %v2151, %v2151
    %v2171 = vpack.c.bf16 %v2153, %v2153
    %v2172 = vpack.c.bf16 %v2157, %v2157
    %v2173 = vpack.c.bf16 %v2159, %v2159
    %v2174 = vpack.c.bf16 %v2163, %v2163
    %v2175 = vpack.c.bf16 %v2165, %v2165
    %v2177 = vunpack.c.l.b16 %v2168
    %v2178 = vpack.c.b16 %v2177, %v2177
    %2179 = vrot.lane.b32.xlu0 %v2178, 96
    %v2180 = vpop.permute.xlu0 %2179
    %v2182 = vsel %vm241, %v2168, 0
    %v2185 = vsel %vm241, %v2180, 0
    %2187 = vmatpush.bf16.xpose.msra.mxu0 0
    %2188 = vmatpush.bf16.xpose.msra.mxu0 0
    %2189 = vmatpush.bf16.xpose.msra.mxu0 0
    %2190 = vmatpush.bf16.xpose.msra.mxu0 0
    %2191 = vmatpush.bf16.xpose.msra.mxu0 0
    %2192 = vmatpush.bf16.xpose.msra.mxu0 0
    %2193 = vmatpush.bf16.xpose.msra.mxu0 0
    %2194 = vmatpush.bf16.xpose.msra.mxu0 %v2185
    %2195 = vmatmul.bf16.gmra.mxu0 %v2182
    %v2196 = vpop.f32.mrf.mxu0
    %v2197 = vadd.f32 0.0, %v2196
    %v2198 = vpop.f32.mrf.mxu0
    %2199 = vdwg.mxu0
    %v2201 = vunpack.c.l.b16 %v2169
    %v2202 = vpack.c.b16 %v2201, %v2201
    %2203 = vrot.lane.b32.xlu0 %v2202, 96
    %v2204 = vpop.permute.xlu0 %2203
    %v2206 = vsel %vm241, %v2169, 0
    %v2209 = vsel %vm241, %v2204, 0
    %2211 = vmatpush.bf16.xpose.msra.mxu0 0
    %2212 = vmatpush.bf16.xpose.msra.mxu0 0
    %2213 = vmatpush.bf16.xpose.msra.mxu0 0
    %2214 = vmatpush.bf16.xpose.msra.mxu0 0
    %2215 = vmatpush.bf16.xpose.msra.mxu0 0
    %2216 = vmatpush.bf16.xpose.msra.mxu0 0
    %2217 = vmatpush.bf16.xpose.msra.mxu0 0
    %2218 = vmatpush.bf16.xpose.msra.mxu0 %v2209
    %2219 = vmatmul.bf16.gmra.mxu0 %v2206
    %v2220 = vpop.f32.mrf.mxu0
    %v2221 = vadd.f32 0.0, %v2220
    %v2222 = vpop.f32.mrf.mxu0
    %2223 = vdwg.mxu0
    %v2225 = vunpack.c.l.b16 %v2170
    %v2226 = vpack.c.b16 %v2225, %v2225
    %2227 = vrot.lane.b32.xlu0 %v2226, 96
    %v2228 = vpop.permute.xlu0 %2227
    %v2230 = vsel %vm241, %v2170, 0
    %v2233 = vsel %vm241, %v2228, 0
    %2235 = vmatpush.bf16.xpose.msra.mxu0 0
    %2236 = vmatpush.bf16.xpose.msra.mxu0 0
    %2237 = vmatpush.bf16.xpose.msra.mxu0 0
    %2238 = vmatpush.bf16.xpose.msra.mxu0 0
    %2239 = vmatpush.bf16.xpose.msra.mxu0 0
    %2240 = vmatpush.bf16.xpose.msra.mxu0 0
    %2241 = vmatpush.bf16.xpose.msra.mxu0 0
    %2242 = vmatpush.bf16.xpose.msra.mxu0 %v2233
    %2243 = vmatmul.bf16.gmra.mxu0 %v2230
    %v2244 = vpop.f32.mrf.mxu0
    %v2245 = vadd.f32 0.0, %v2244
    %v2246 = vpop.f32.mrf.mxu0
    %2247 = vdwg.mxu0
    %v2249 = vunpack.c.l.b16 %v2171
    %v2250 = vpack.c.b16 %v2249, %v2249
    %2251 = vrot.lane.b32.xlu0 %v2250, 96
    %v2252 = vpop.permute.xlu0 %2251
    %v2254 = vsel %vm241, %v2171, 0
    %v2257 = vsel %vm241, %v2252, 0
    %2259 = vmatpush.bf16.xpose.msra.mxu0 0
    %2260 = vmatpush.bf16.xpose.msra.mxu0 0
    %2261 = vmatpush.bf16.xpose.msra.mxu0 0
    %2262 = vmatpush.bf16.xpose.msra.mxu0 0
    %2263 = vmatpush.bf16.xpose.msra.mxu0 0
    %2264 = vmatpush.bf16.xpose.msra.mxu0 0
    %2265 = vmatpush.bf16.xpose.msra.mxu0 0
    %2266 = vmatpush.bf16.xpose.msra.mxu0 %v2257
    %2267 = vmatmul.bf16.gmra.mxu0 %v2254
    %v2268 = vpop.f32.mrf.mxu0
    %v2269 = vadd.f32 0.0, %v2268
    %v2270 = vpop.f32.mrf.mxu0
    %2271 = vdwg.mxu0
    %v2273 = vunpack.c.l.b16 %v2172
    %v2274 = vpack.c.b16 %v2273, %v2273
    %2275 = vrot.lane.b32.xlu0 %v2274, 96
    %v2276 = vpop.permute.xlu0 %2275
    %v2278 = vsel %vm241, %v2172, 0
    %v2281 = vsel %vm241, %v2276, 0
    %2283 = vmatpush.bf16.xpose.msra.mxu0 0
    %2284 = vmatpush.bf16.xpose.msra.mxu0 0
    %2285 = vmatpush.bf16.xpose.msra.mxu0 0
    %2286 = vmatpush.bf16.xpose.msra.mxu0 0
    %2287 = vmatpush.bf16.xpose.msra.mxu0 0
    %2288 = vmatpush.bf16.xpose.msra.mxu0 0
    %2289 = vmatpush.bf16.xpose.msra.mxu0 0
    %2290 = vmatpush.bf16.xpose.msra.mxu0 %v2281
    %2291 = vmatmul.bf16.gmra.mxu0 %v2278
    %v2292 = vpop.f32.mrf.mxu0
    %v2293 = vadd.f32 0.0, %v2292
    %v2294 = vpop.f32.mrf.mxu0
    %2295 = vdwg.mxu0
    %v2297 = vunpack.c.l.b16 %v2173
    %v2298 = vpack.c.b16 %v2297, %v2297
    %2299 = vrot.lane.b32.xlu0 %v2298, 96
    %v2300 = vpop.permute.xlu0 %2299
    %v2302 = vsel %vm241, %v2173, 0
    %v2305 = vsel %vm241, %v2300, 0
    %2307 = vmatpush.bf16.xpose.msra.mxu0 0
    %2308 = vmatpush.bf16.xpose.msra.mxu0 0
    %2309 = vmatpush.bf16.xpose.msra.mxu0 0
    %2310 = vmatpush.bf16.xpose.msra.mxu0 0
    %2311 = vmatpush.bf16.xpose.msra.mxu0 0
    %2312 = vmatpush.bf16.xpose.msra.mxu0 0
    %2313 = vmatpush.bf16.xpose.msra.mxu0 0
    %2314 = vmatpush.bf16.xpose.msra.mxu0 %v2305
    %2315 = vmatmul.bf16.gmra.mxu0 %v2302
    %v2316 = vpop.f32.mrf.mxu0
    %v2317 = vadd.f32 0.0, %v2316
    %v2318 = vpop.f32.mrf.mxu0
    %2319 = vdwg.mxu0
    %v2321 = vunpack.c.l.b16 %v2174
    %v2322 = vpack.c.b16 %v2321, %v2321
    %2323 = vrot.lane.b32.xlu0 %v2322, 96
    %v2324 = vpop.permute.xlu0 %2323
    %v2326 = vsel %vm241, %v2174, 0
    %v2329 = vsel %vm241, %v2324, 0
    %2331 = vmatpush.bf16.xpose.msra.mxu0 0
    %2332 = vmatpush.bf16.xpose.msra.mxu0 0
    %2333 = vmatpush.bf16.xpose.msra.mxu0 0
    %2334 = vmatpush.bf16.xpose.msra.mxu0 0
    %2335 = vmatpush.bf16.xpose.msra.mxu0 0
    %2336 = vmatpush.bf16.xpose.msra.mxu0 0
    %2337 = vmatpush.bf16.xpose.msra.mxu0 0
    %2338 = vmatpush.bf16.xpose.msra.mxu0 %v2329
    %2339 = vmatmul.bf16.gmra.mxu0 %v2326
    %v2340 = vpop.f32.mrf.mxu0
    %v2341 = vadd.f32 0.0, %v2340
    %v2342 = vpop.f32.mrf.mxu0
    %2343 = vdwg.mxu0
    %v2345 = vunpack.c.l.b16 %v2175
    %v2346 = vpack.c.b16 %v2345, %v2345
    %2347 = vrot.lane.b32.xlu0 %v2346, 96
    %v2348 = vpop.permute.xlu0 %2347
    %v2350 = vsel %vm241, %v2175, 0
    %v2353 = vsel %vm241, %v2348, 0
    %2355 = vmatpush.bf16.xpose.msra.mxu0 0
    %2356 = vmatpush.bf16.xpose.msra.mxu0 0
    %2357 = vmatpush.bf16.xpose.msra.mxu0 0
    %2358 = vmatpush.bf16.xpose.msra.mxu0 0
    %2359 = vmatpush.bf16.xpose.msra.mxu0 0
    %2360 = vmatpush.bf16.xpose.msra.mxu0 0
    %2361 = vmatpush.bf16.xpose.msra.mxu0 0
    %2362 = vmatpush.bf16.xpose.msra.mxu0 %v2353
    %2363 = vmatmul.bf16.gmra.mxu0 %v2350
    %v2364 = vpop.f32.mrf.mxu0
    %v2365 = vadd.f32 0.0, %v2364
    %v2366 = vpop.f32.mrf.mxu0
    %2367 = vdwg.mxu0
    %v2368 = vmul.f32 %v2197, 0.35355338
    %v2369 = vmul.f32 %v2221, 0.35355338
    %v2370 = vmul.f32 %v2245, 0.35355338
    %v2371 = vmul.f32 %v2269, 0.35355338
    %v2372 = vmul.f32 %v2293, 0.35355338
    %v2373 = vmul.f32 %v2317, 0.35355338
    %v2374 = vmul.f32 %v2341, 0.35355338
    %v2375 = vmul.f32 %v2365, 0.35355338
    %v2376 = vadd.f32 %v2368, %v72
    %v2377 = vadd.f32 %v2369, %v72
    %v2378 = vadd.f32 %v2370, %v72
    %v2379 = vadd.f32 %v2371, %v72
    %v2380 = vadd.f32 %v2372, %v72
    %v2381 = vadd.f32 %v2373, %v72
    %v2382 = vadd.f32 %v2374, %v72
    %v2383 = vadd.f32 %v2375, %v72
    %v2384 = vsel %vm241, %v2376, -inf
    %2385 = vmax.xlane.f32.xlu0 %v2384
    %v2386 = vpop.xlane.xlu0 %2385
    %v2387 = vsel %vm241, %v2377, -inf
    %2388 = vmax.xlane.f32.xlu0 %v2387
    %v2389 = vpop.xlane.xlu0 %2388
    %v2390 = vsel %vm241, %v2378, -inf
    %2391 = vmax.xlane.f32.xlu0 %v2390
    %v2392 = vpop.xlane.xlu0 %2391
    %v2393 = vsel %vm241, %v2379, -inf
    %2394 = vmax.xlane.f32.xlu0 %v2393
    %v2395 = vpop.xlane.xlu0 %2394
    %v2396 = vsel %vm241, %v2380, -inf
    %2397 = vmax.xlane.f32.xlu0 %v2396
    %v2398 = vpop.xlane.xlu0 %2397
    %v2399 = vsel %vm241, %v2381, -inf
    %2400 = vmax.xlane.f32.xlu0 %v2399
    %v2401 = vpop.xlane.xlu0 %2400
    %v2402 = vsel %vm241, %v2382, -inf
    %2403 = vmax.xlane.f32.xlu0 %v2402
    %v2404 = vpop.xlane.xlu0 %2403
    %v2405 = vsel %vm241, %v2383, -inf
    %2406 = vmax.xlane.f32.xlu0 %v2405
    %v2407 = vpop.xlane.xlu0 %2406
    %v2408 = vsub.f32 %v2376, %v2386
    %v2409 = vsub.f32 %v2377, %v2389
    %v2410 = vsub.f32 %v2378, %v2392
    %v2411 = vsub.f32 %v2379, %v2395
    %v2412 = vsub.f32 %v2380, %v2398
    %v2413 = vsub.f32 %v2381, %v2401
    %v2414 = vsub.f32 %v2382, %v2404
    %v2415 = vsub.f32 %v2383, %v2407
    %v2416 = vmul.f32 %v2408, 1.442695
    %v2417 = vpow.pop %v2416
    %v2418 = vmul.f32 %v2409, 1.442695
    %v2419 = vpow.pop %v2418
    %v2420 = vmul.f32 %v2410, 1.442695
    %v2421 = vpow.pop %v2420
    %v2422 = vmul.f32 %v2411, 1.442695
    %v2423 = vpow.pop %v2422
    %v2424 = vmul.f32 %v2412, 1.442695
    %v2425 = vpow.pop %v2424
    %v2426 = vmul.f32 %v2413, 1.442695
    %v2427 = vpow.pop %v2426
    %v2428 = vmul.f32 %v2414, 1.442695
    %v2429 = vpow.pop %v2428
    %v2430 = vmul.f32 %v2415, 1.442695
    %v2431 = vpow.pop %v2430
    %v2432 = vsel %vm241, %v2417, 0.0
    %2433 = vadd.xlane.f32.xlu0 %v2432
    %v2434 = vpop.xlane.xlu0 %2433
    %v2435 = vsel %vm241, %v2419, 0.0
    %2436 = vadd.xlane.f32.xlu0 %v2435
    %v2437 = vpop.xlane.xlu0 %2436
    %v2438 = vsel %vm241, %v2421, 0.0
    %2439 = vadd.xlane.f32.xlu0 %v2438
    %v2440 = vpop.xlane.xlu0 %2439
    %v2441 = vsel %vm241, %v2423, 0.0
    %2442 = vadd.xlane.f32.xlu0 %v2441
    %v2443 = vpop.xlane.xlu0 %2442
    %v2444 = vsel %vm241, %v2425, 0.0
    %2445 = vadd.xlane.f32.xlu0 %v2444
    %v2446 = vpop.xlane.xlu0 %2445
    %v2447 = vsel %vm241, %v2427, 0.0
    %2448 = vadd.xlane.f32.xlu0 %v2447
    %v2449 = vpop.xlane.xlu0 %2448
    %v2450 = vsel %vm241, %v2429, 0.0
    %2451 = vadd.xlane.f32.xlu0 %v2450
    %v2452 = vpop.xlane.xlu0 %2451
    %v2453 = vsel %vm241, %v2431, 0.0
    %2454 = vadd.xlane.f32.xlu0 %v2453
    %v2455 = vpop.xlane.xlu0 %2454
    %v2456 = vrcp.pop %v2434
    %v2457 = vrcp.pop %v2437
    %v2458 = vrcp.pop %v2440
    %v2459 = vrcp.pop %v2443
    %v2460 = vrcp.pop %v2446
    %v2461 = vrcp.pop %v2449
    %v2462 = vrcp.pop %v2452
    %v2463 = vrcp.pop %v2455
    %v2464 = vmul.f32 %v2417, %v2456
    %v2465 = vmul.f32 %v2419, %v2457
    %v2466 = vmul.f32 %v2421, %v2458
    %v2467 = vmul.f32 %v2423, %v2459
    %v2468 = vmul.f32 %v2425, %v2460
    %v2469 = vmul.f32 %v2427, %v2461
    %v2470 = vmul.f32 %v2429, %v2462
    %v2471 = vmul.f32 %v2431, %v2463
    %v2472 = vpack.c.bf16 %v2464, %v2464
    %v2473 = vpack.c.bf16 %v2465, %v2465
    %v2474 = vpack.c.bf16 %v2466, %v2466
    %v2475 = vpack.c.bf16 %v2467, %v2467
    %v2476 = vpack.c.bf16 %v2468, %v2468
    %v2477 = vpack.c.bf16 %v2469, %v2469
    %v2478 = vpack.c.bf16 %v2470, %v2470
    %v2479 = vpack.c.bf16 %v2471, %v2471
    %2480 = vrot.lane.b32.xlu0 %v2178, 64
    %v2481 = vpop.permute.xlu0 %2480
    %v2483 = vsel %vm241, %v2472, 0
    %v2486 = vsel %vm546, %v2481, 0
    %2488 = vmatpush.bf16.msra.mxu0 0
    %2489 = vmatpush.bf16.msra.mxu0 0
    %2490 = vmatpush.bf16.msra.mxu0 0
    %2491 = vmatpush.bf16.msra.mxu0 0
    %2492 = vmatpush.bf16.msra.mxu0 0
    %2493 = vmatpush.bf16.msra.mxu0 0
    %2494 = vmatpush.bf16.msra.mxu0 0
    %2495 = vmatpush.bf16.msra.mxu0 %v2486
    %2496 = vmatmul.bf16.gmra.mxu0 %v2483
    %v2497 = vpop.f32.mrf.mxu0
    %v2498 = vadd.f32 0.0, %v2497
    %v2499 = vpop.f32.mrf.mxu0
    %2500 = vdwg.mxu0
    %2501 = vrot.lane.b32.xlu0 %v2202, 64
    %v2502 = vpop.permute.xlu0 %2501
    %v2504 = vsel %vm241, %v2473, 0
    %v2507 = vsel %vm546, %v2502, 0
    %2509 = vmatpush.bf16.msra.mxu0 0
    %2510 = vmatpush.bf16.msra.mxu0 0
    %2511 = vmatpush.bf16.msra.mxu0 0
    %2512 = vmatpush.bf16.msra.mxu0 0
    %2513 = vmatpush.bf16.msra.mxu0 0
    %2514 = vmatpush.bf16.msra.mxu0 0
    %2515 = vmatpush.bf16.msra.mxu0 0
    %2516 = vmatpush.bf16.msra.mxu0 %v2507
    %2517 = vmatmul.bf16.gmra.mxu0 %v2504
    %v2518 = vpop.f32.mrf.mxu0
    %v2519 = vadd.f32 0.0, %v2518
    %v2520 = vpop.f32.mrf.mxu0
    %2521 = vdwg.mxu0
    %2522 = vrot.lane.b32.xlu0 %v2226, 64
    %v2523 = vpop.permute.xlu0 %2522
    %v2525 = vsel %vm241, %v2474, 0
    %v2528 = vsel %vm546, %v2523, 0
    %2530 = vmatpush.bf16.msra.mxu0 0
    %2531 = vmatpush.bf16.msra.mxu0 0
    %2532 = vmatpush.bf16.msra.mxu0 0
    %2533 = vmatpush.bf16.msra.mxu0 0
    %2534 = vmatpush.bf16.msra.mxu0 0
    %2535 = vmatpush.bf16.msra.mxu0 0
    %2536 = vmatpush.bf16.msra.mxu0 0
    %2537 = vmatpush.bf16.msra.mxu0 %v2528
    %2538 = vmatmul.bf16.gmra.mxu0 %v2525
    %v2539 = vpop.f32.mrf.mxu0
    %v2540 = vadd.f32 0.0, %v2539
    %v2541 = vpop.f32.mrf.mxu0
    %2542 = vdwg.mxu0
    %2543 = vrot.lane.b32.xlu0 %v2250, 64
    %v2544 = vpop.permute.xlu0 %2543
    %v2546 = vsel %vm241, %v2475, 0
    %v2549 = vsel %vm546, %v2544, 0
    %2551 = vmatpush.bf16.msra.mxu0 0
    %2552 = vmatpush.bf16.msra.mxu0 0
    %2553 = vmatpush.bf16.msra.mxu0 0
    %2554 = vmatpush.bf16.msra.mxu0 0
    %2555 = vmatpush.bf16.msra.mxu0 0
    %2556 = vmatpush.bf16.msra.mxu0 0
    %2557 = vmatpush.bf16.msra.mxu0 0
    %2558 = vmatpush.bf16.msra.mxu0 %v2549
    %2559 = vmatmul.bf16.gmra.mxu0 %v2546
    %v2560 = vpop.f32.mrf.mxu0
    %v2561 = vadd.f32 0.0, %v2560
    %v2562 = vpop.f32.mrf.mxu0
    %2563 = vdwg.mxu0
    %2564 = vrot.lane.b32.xlu0 %v2274, 64
    %v2565 = vpop.permute.xlu0 %2564
    %v2567 = vsel %vm241, %v2476, 0
    %v2570 = vsel %vm546, %v2565, 0
    %2572 = vmatpush.bf16.msra.mxu0 0
    %2573 = vmatpush.bf16.msra.mxu0 0
    %2574 = vmatpush.bf16.msra.mxu0 0
    %2575 = vmatpush.bf16.msra.mxu0 0
    %2576 = vmatpush.bf16.msra.mxu0 0
    %2577 = vmatpush.bf16.msra.mxu0 0
    %2578 = vmatpush.bf16.msra.mxu0 0
    %2579 = vmatpush.bf16.msra.mxu0 %v2570
    %2580 = vmatmul.bf16.gmra.mxu0 %v2567
    %v2581 = vpop.f32.mrf.mxu0
    %v2582 = vadd.f32 0.0, %v2581
    %v2583 = vpop.f32.mrf.mxu0
    %2584 = vdwg.mxu0
    %2585 = vrot.lane.b32.xlu0 %v2298, 64
    %v2586 = vpop.permute.xlu0 %2585
    %v2588 = vsel %vm241, %v2477, 0
    %v2591 = vsel %vm546, %v2586, 0
    %2593 = vmatpush.bf16.msra.mxu0 0
    %2594 = vmatpush.bf16.msra.mxu0 0
    %2595 = vmatpush.bf16.msra.mxu0 0
    %2596 = vmatpush.bf16.msra.mxu0 0
    %2597 = vmatpush.bf16.msra.mxu0 0
    %2598 = vmatpush.bf16.msra.mxu0 0
    %2599 = vmatpush.bf16.msra.mxu0 0
    %2600 = vmatpush.bf16.msra.mxu0 %v2591
    %2601 = vmatmul.bf16.gmra.mxu0 %v2588
    %v2602 = vpop.f32.mrf.mxu0
    %v2603 = vadd.f32 0.0, %v2602
    %v2604 = vpop.f32.mrf.mxu0
    %2605 = vdwg.mxu0
    %2606 = vrot.lane.b32.xlu0 %v2322, 64
    %v2607 = vpop.permute.xlu0 %2606
    %v2609 = vsel %vm241, %v2478, 0
    %v2612 = vsel %vm546, %v2607, 0
    %2614 = vmatpush.bf16.msra.mxu0 0
    %2615 = vmatpush.bf16.msra.mxu0 0
    %2616 = vmatpush.bf16.msra.mxu0 0
    %2617 = vmatpush.bf16.msra.mxu0 0
    %2618 = vmatpush.bf16.msra.mxu0 0
    %2619 = vmatpush.bf16.msra.mxu0 0
    %2620 = vmatpush.bf16.msra.mxu0 0
    %2621 = vmatpush.bf16.msra.mxu0 %v2612
    %2622 = vmatmul.bf16.gmra.mxu0 %v2609
    %v2623 = vpop.f32.mrf.mxu0
    %v2624 = vadd.f32 0.0, %v2623
    %v2625 = vpop.f32.mrf.mxu0
    %2626 = vdwg.mxu0
    %2627 = vrot.lane.b32.xlu0 %v2346, 64
    %v2628 = vpop.permute.xlu0 %2627
    %v2630 = vsel %vm241, %v2479, 0
    %v2633 = vsel %vm546, %v2628, 0
    %2635 = vmatpush.bf16.msra.mxu0 0
    %2636 = vmatpush.bf16.msra.mxu0 0
    %2637 = vmatpush.bf16.msra.mxu0 0
    %2638 = vmatpush.bf16.msra.mxu0 0
    %2639 = vmatpush.bf16.msra.mxu0 0
    %2640 = vmatpush.bf16.msra.mxu0 0
    %2641 = vmatpush.bf16.msra.mxu0 0
    %2642 = vmatpush.bf16.msra.mxu0 %v2633
    %2643 = vmatmul.bf16.gmra.mxu0 %v2630
    %v2644 = vpop.f32.mrf.mxu0
    %v2645 = vadd.f32 0.0, %v2644
    %v2646 = vpop.f32.mrf.mxu0
    %2647 = vdwg.mxu0
    %2650 = vrot.lane.b32.xlu0 %v2540, 8
    %v2651 = vpop.permute.xlu0 %2650
    %2652 = vrot.lane.b32.xlu0 %v2561, 8
    %v2653 = vpop.permute.xlu0 %2652
    %2658 = vrot.lane.b32.xlu0 %v2582, 16
    %v2659 = vpop.permute.xlu0 %2658
    %2660 = vrot.lane.b32.xlu0 %v2603, 16
    %v2661 = vpop.permute.xlu0 %2660
    %2666 = vrot.lane.b32.xlu0 %v2624, 24
    %v2667 = vpop.permute.xlu0 %2666
    %2668 = vrot.lane.b32.xlu0 %v2645, 24
    %v2669 = vpop.permute.xlu0 %2668
    %v2672 = vsel %vm241, %v2498, %v2651
    %v2673 = vsel %vm241, %v2519, %v2653
    %v2674 = vsel %vm736, %v2672, %v2659
    %v2675 = vsel %vm736, %v2673, %v2661
    %v2676 = vsel %vm739, %v2674, %v2667
    %v2677 = vsel %vm739, %v2675, %v2669
    %v2678 = vpack.c.bf16 %v2677, %v2676
    %v2680 = vperm.slane %v2036, 0
    %v2686 = vunpack.c.l.b16 %v2032
    %v2687 = vunpack.c.l.b16 %v2033
    %v2688 = vunpack.c.l.b16 %v2034
    %v2689 = vunpack.c.l.b16 %v2035
    %v2690 = vpack.c.b16 %v2687, %v2686
    %v2691 = vpack.c.b16 %v2689, %v2688
    %v2695 = vsel %vm113, %v2678, 0
    %2697 = vmatpush.bf16.msra.mxu0 0
    %2698 = vmatpush.bf16.msra.mxu0 0
    %2699 = vmatpush.bf16.msra.mxu0 0
    %2700 = vmatpush.bf16.msra.mxu0 0
    %2701 = vmatpush.bf16.msra.mxu0 0
    %2702 = vmatpush.bf16.msra.mxu0 0
    %2703 = vmatpush.bf16.msra.mxu0 %v2691
    %2704 = vmatpush.bf16.msra.mxu0 %v2690
    %2705 = vmatmul.bf16.gmra.mxu0 %v2695
    %v2706 = vpop.f32.mrf.mxu0
    %v2707 = vadd.f32 %v2680, %v2706
    %v2708 = vpop.f32.mrf.mxu0
    %v2709 = vadd.f32 %v2680, %v2708
    %2710 = vdwg.mxu0
    %v2711 = vadd.f32 %v2023, %v2707
    %v2712 = vadd.f32 %v2024, %v2709
    %v2713 = vsel %vm113, %v2711, 0.0
    %2714 = vadd.xlane.f32.xlu0 %v2713
    %v2715 = vpop.xlane.xlu0 %2714
    %v2716 = vsel %vm113, %v2712, 0.0
    %2717 = vadd.xlane.f32.xlu0 %v2716
    %v2718 = vpop.xlane.xlu0 %2717
    %v2719 = vmul.f32 %v2715, %v126
    %v2720 = vmul.f32 %v2718, %v126
    %v2721 = vsub.f32 %v2711, %v2719
    %v2722 = vsub.f32 %v2712, %v2720
    %v2723 = vmul.f32 %v2721, %v2721
    %v2724 = vmul.f32 %v2722, %v2722
    %v2725 = vsel %vm113, %v2723, 0.0
    %2726 = vadd.xlane.f32.xlu0 %v2725
    %v2727 = vpop.xlane.xlu0 %2726
    %v2728 = vsel %vm113, %v2724, 0.0
    %2729 = vadd.xlane.f32.xlu0 %v2728
    %v2730 = vpop.xlane.xlu0 %2729
    %v2731 = vmul.f32 %v2727, %v126
    %v2732 = vmul.f32 %v2730, %v126
    %v2733 = vadd.f32 %v2731, 1e-05
    %v2734 = vadd.f32 %v2732, 1e-05
    %v2735 = vrsqrt.pop %v2733
    %v2736 = vmul.f32 %v2735, %v2733
    %v2737 = vmul.f32 %v2736, %v2735
    %v2738 = vmul.f32 0.5, %v2737
    %v2739 = vsub.f32 1.5, %v2738
    %v2740 = vmul.f32 %v2735, %v2739
    %vm2741 = vweird.f32 %v2733
    %vm2742 = vweird.f32 %v2735
    %vm2743 = vmor %vm2741, %vm2742
    %v2744 = vsel %vm2743, %v2735, %v2740
    %v2745 = vrsqrt.pop %v2734
    %v2746 = vmul.f32 %v2745, %v2734
    %v2747 = vmul.f32 %v2746, %v2745
    %v2748 = vmul.f32 0.5, %v2747
    %v2749 = vsub.f32 1.5, %v2748
    %v2750 = vmul.f32 %v2745, %v2749
    %vm2751 = vweird.f32 %v2734
    %vm2752 = vweird.f32 %v2745
    %vm2753 = vmor %vm2751, %vm2752
    %v2754 = vsel %vm2753, %v2745, %v2750
    %v2755 = vmul.f32 %v2721, %v2744
    %v2756 = vmul.f32 %v2722, %v2754
    %v2758 = vperm.slane %v2037, 0
    %v2760 = vmul.f32 %v2755, %v2758
    %v2761 = vmul.f32 %v2756, %v2758
    %v2763 = vperm.slane %v2038, 0
    %v2765 = vadd.f32 %v2760, %v2763
    %v2766 = vadd.f32 %v2761, %v2763
    %v2767 = vpack.c.bf16 %v2766, %v2765
    %v2769 = vperm.slane %v2043, 0
    %v2770 = vperm.slane %v2043, 1
    %v2777 = vunpack.c.l.b16 %v2039
    %v2778 = vunpack.c.h.b16 %v2039
    %v2779 = vunpack.c.l.b16 %v2040
    %v2780 = vunpack.c.h.b16 %v2040
    %v2781 = vunpack.c.l.b16 %v2041
    %v2782 = vunpack.c.h.b16 %v2041
    %v2783 = vunpack.c.l.b16 %v2042
    %v2784 = vunpack.c.h.b16 %v2042
    %v2785 = vpack.c.b16 %v2779, %v2777
    %v2786 = vpack.c.b16 %v2780, %v2778
    %v2787 = vpack.c.b16 %v2783, %v2781
    %v2788 = vpack.c.b16 %v2784, %v2782
    %v2794 = vsel %vm113, %v2767, 0
    %2796 = vmatpush.bf16.msra.mxu0 0
    %2797 = vmatpush.bf16.msra.mxu0 0
    %2798 = vmatpush.bf16.msra.mxu0 0
    %2799 = vmatpush.bf16.msra.mxu0 0
    %2800 = vmatpush.bf16.msra.mxu0 0
    %2801 = vmatpush.bf16.msra.mxu0 0
    %2802 = vmatpush.bf16.msra.mxu0 %v2787
    %2803 = vmatpush.bf16.msra.mxu0 %v2785
    %2804 = vmatmul.bf16.gmra.mxu0 %v2794
    %v2805 = vpop.f32.mrf.mxu0
    %v2806 = vadd.f32 %v2769, %v2805
    %v2807 = vpop.f32.mrf.mxu0
    %v2808 = vadd.f32 %v2769, %v2807
    %2809 = vdwg.mxu0
    %2810 = vmatpush.bf16.msra.mxu0 0
    %2811 = vmatpush.bf16.msra.mxu0 0
    %2812 = vmatpush.bf16.msra.mxu0 0
    %2813 = vmatpush.bf16.msra.mxu0 0
    %2814 = vmatpush.bf16.msra.mxu0 0
    %2815 = vmatpush.bf16.msra.mxu0 0
    %2816 = vmatpush.bf16.msra.mxu0 %v2788
    %2817 = vmatpush.bf16.msra.mxu0 %v2786
    %2818 = vmatmul.bf16.gmra.mxu0 %v2794
    %v2819 = vpop.f32.mrf.mxu0
    %v2820 = vadd.f32 %v2770, %v2819
    %v2821 = vpop.f32.mrf.mxu0
    %v2822 = vadd.f32 %v2770, %v2821
    %2823 = vdwg.mxu0
    %v2824 = vmul.f32 %v2820, 0.5
    %v2825 = vmul.f32 %v2822, 0.5
    %v2826 = vmul.f32 %v2820, 0.70710677
    %v2827 = vmul.f32 %v2822, 0.70710677
    %v2828 = vmul.f32 %v2826, %v2826
    %v2829 = vmin.f32 16.0, %v2828
    %v2830 = vmul.f32 %v2829, 2.1237322e-06
    %v2831 = vadd.f32 %v2830, 0.00028619796
    %v2832 = vmul.f32 %v2829, %v2831
    %v2833 = vadd.f32 %v2832, 0.0036580483
    %v2834 = vmul.f32 %v2829, %v2833
    %v2835 = vadd.f32 %v2834, 0.05243302
    %v2836 = vmul.f32 %v2829, %v2835
    %v2837 = vadd.f32 %v2836, 0.18741608
    %v2838 = vmul.f32 %v2829, %v2837
    %v2839 = vadd.f32 %v2838, 1.1283791
    %v2840 = vmul.f32 %v2826, %v2839
    %v2841 = vmul.f32 %v2829, 3.8918573e-05
    %v2842 = vadd.f32 %v2841, 0.001143296
    %v2843 = vmul.f32 %v2829, %v2842
    %v2844 = vadd.f32 %v2843, 0.014752088
    %v2845 = vmul.f32 %v2829, %v2844
    %v2846 = vadd.f32 %v2845, 0.112945676
    %v2847 = vmul.f32 %v2829, %v2846
    %v2848 = vadd.f32 %v2847, 0.4994258
    %v2849 = vmul.f32 %v2829, %v2848
    %v2850 = vadd.f32 %v2849, 1.0
    %v2851 = vrcp.pop %v2850
    %v2852 = vmul.f32 %v2850, %v2851
    %v2853 = vsub.f32 1.0, %v2852
    %v2854 = vmul.f32 %v2851, %v2853
    %v2855 = vadd.f32 %v2851, %v2854
    %vm2856 = vweird.f32 %v2850
    %vm2857 = vweird.f32 %v2851
    %vm2858 = vmor %vm2856, %vm2857
    %v2859 = vsel %vm2858, %v2851, %v2855
    %v2860 = vand.u32 2147483647, %v2850
    %vm2861 = vcmp.eq.f32.partialorder %v2860, 8.507059e+37
    %v2862 = vand.u32 %v2850, 2147483648
    %v2863 = vor.u32 1.1754944e-38, %v2862
    %v2864 = vsel %vm2861, %v2863, %v2859
    %v2865 = vmul.f32 %v2840, %v2864
    %v2866 = vmin.f32 %v2865, 1.0
    %v2867 = vmax.f32 %v2866, -1.0
    %v2868 = vmul.f32 %v2827, %v2827
    %v2869 = vmin.f32 16.0, %v2868
    %v2870 = vmul.f32 %v2869, 2.1237322e-06
    %v2871 = vadd.f32 %v2870, 0.00028619796
    %v2872 = vmul.f32 %v2869, %v2871
    %v2873 = vadd.f32 %v2872, 0.0036580483
    %v2874 = vmul.f32 %v2869, %v2873
    %v2875 = vadd.f32 %v2874, 0.05243302
    %v2876 = vmul.f32 %v2869, %v2875
    %v2877 = vadd.f32 %v2876, 0.18741608
    %v2878 = vmul.f32 %v2869, %v2877
    %v2879 = vadd.f32 %v2878, 1.1283791
    %v2880 = vmul.f32 %v2827, %v2879
    %v2881 = vmul.f32 %v2869, 3.8918573e-05
    %v2882 = vadd.f32 %v2881, 0.001143296
    %v2883 = vmul.f32 %v2869, %v2882
    %v2884 = vadd.f32 %v2883, 0.014752088
    %v2885 = vmul.f32 %v2869, %v2884
    %v2886 = vadd.f32 %v2885, 0.112945676
    %v2887 = vmul.f32 %v2869, %v2886
    %v2888 = vadd.f32 %v2887, 0.4994258
    %v2889 = vmul.f32 %v2869, %v2888
    %v2890 = vadd.f32 %v2889, 1.0
    %v2891 = vrcp.pop %v2890
    %v2892 = vmul.f32 %v2890, %v2891
    %v2893 = vsub.f32 1.0, %v2892
    %v2894 = vmul.f32 %v2891, %v2893
    %v2895 = vadd.f32 %v2891, %v2894
    %vm2896 = vweird.f32 %v2890
    %vm2897 = vweird.f32 %v2891
    %vm2898 = vmor %vm2896, %vm2897
    %v2899 = vsel %vm2898, %v2891, %v2895
    %v2900 = vand.u32 2147483647, %v2890
    %vm2901 = vcmp.eq.f32.partialorder %v2900, 8.507059e+37
    %v2902 = vand.u32 %v2890, 2147483648
    %v2903 = vor.u32 1.1754944e-38, %v2902
    %v2904 = vsel %vm2901, %v2903, %v2899
    %v2905 = vmul.f32 %v2880, %v2904
    %v2906 = vmin.f32 %v2905, 1.0
    %v2907 = vmax.f32 %v2906, -1.0
    %v2908 = vadd.f32 %v2867, 1.0
    %v2909 = vadd.f32 %v2907, 1.0
    %v2910 = vmul.f32 %v2824, %v2908
    %v2911 = vmul.f32 %v2825, %v2909
    %v2912 = vmul.f32 %v2910, %v2806
    %v2913 = vmul.f32 %v2911, %v2808
    %v2914 = vpack.c.bf16 %v2913, %v2912
    %v2916 = vperm.slane %v2060, 0
    %v2934 = vunpack.c.l.b16 %v2044
    %v2935 = vunpack.c.l.b16 %v2045
    %v2936 = vunpack.c.l.b16 %v2046
    %v2937 = vunpack.c.l.b16 %v2047
    %v2938 = vunpack.c.l.b16 %v2048
    %v2939 = vunpack.c.l.b16 %v2049
    %v2940 = vunpack.c.l.b16 %v2050
    %v2941 = vunpack.c.l.b16 %v2051
    %v2942 = vunpack.c.l.b16 %v2052
    %v2943 = vunpack.c.l.b16 %v2053
    %v2944 = vunpack.c.l.b16 %v2054
    %v2945 = vunpack.c.l.b16 %v2055
    %v2946 = vunpack.c.l.b16 %v2056
    %v2947 = vunpack.c.l.b16 %v2057
    %v2948 = vunpack.c.l.b16 %v2058
    %v2949 = vunpack.c.l.b16 %v2059
    %v2950 = vpack.c.b16 %v2935, %v2934
    %v2951 = vpack.c.b16 %v2937, %v2936
    %v2952 = vpack.c.b16 %v2939, %v2938
    %v2953 = vpack.c.b16 %v2941, %v2940
    %v2954 = vpack.c.b16 %v2943, %v2942
    %v2955 = vpack.c.b16 %v2945, %v2944
    %v2956 = vpack.c.b16 %v2947, %v2946
    %v2957 = vpack.c.b16 %v2949, %v2948
    %2966 = vmatpush.bf16.msra.mxu0 %v2957
    %2967 = vmatpush.bf16.msra.mxu0 %v2956
    %2968 = vmatpush.bf16.msra.mxu0 %v2955
    %2969 = vmatpush.bf16.msra.mxu0 %v2954
    %2970 = vmatpush.bf16.msra.mxu0 %v2953
    %2971 = vmatpush.bf16.msra.mxu0 %v2952
    %2972 = vmatpush.bf16.msra.mxu0 %v2951
    %2973 = vmatpush.bf16.msra.mxu0 %v2950
    %2974 = vmatmul.bf16.gmra.mxu0 %v2914
    %v2975 = vpop.f32.mrf.mxu0
    %v2976 = vadd.f32 %v2916, %v2975
    %v2977 = vpop.f32.mrf.mxu0
    %v2978 = vadd.f32 %v2916, %v2977
    %2979 = vdwg.mxu0
    %v2980 = vadd.f32 %v2711, %v2976
    %v2981 = vadd.f32 %v2712, %v2978
    %v2982 = vld [vmem:[%s1046] sm:$0x1]
    %v2983 = vld [vmem:[%s1048] sm:$0x1]
    %v2984 = vld [vmem:[%s1050] sm:$0xf]
    %v2985 = vld [vmem:[%s1050 + $0x4] sm:$0xf]
    %v2986 = vld [vmem:[%s1050 + $0x8] sm:$0xf]
    %v2987 = vld [vmem:[%s1050 + $0xc] sm:$0xf]
    %v2988 = vld [vmem:[%s1055] sm:$0x1]
    %v2989 = vld [vmem:[%s1057] sm:$0xf]
    %v2990 = vld [vmem:[%s1057 + $0x4] sm:$0xf]
    %v2991 = vld [vmem:[%s1057 + $0x8] sm:$0xf]
    %v2992 = vld [vmem:[%s1057 + $0xc] sm:$0xf]
    %v2993 = vld [vmem:[%s1062] sm:$0x1]
    %v2994 = vld [vmem:[%s1064] sm:$0x1]
    %v2995 = vld [vmem:[%s1066] sm:$0x1]
    %v2996 = vld [vmem:[%s1068] sm:$0xff]
    %v2997 = vld [vmem:[%s1068 + $0x8] sm:$0xff]
    %v2998 = vld [vmem:[%s1068 + $0x10] sm:$0xff]
    %v2999 = vld [vmem:[%s1068 + $0x18] sm:$0xff]
    %v3000 = vld [vmem:[%s1073] sm:$0x3]
    %v3001 = vld [vmem:[%s1075] sm:$0xf]
    %v3002 = vld [vmem:[%s1075 + $0x4] sm:$0xf]
    %v3003 = vld [vmem:[%s1075 + $0x8] sm:$0xf]
    %v3004 = vld [vmem:[%s1075 + $0xc] sm:$0xf]
    %v3005 = vld [vmem:[%s1075 + $0x10] sm:$0xf]
    %v3006 = vld [vmem:[%s1075 + $0x14] sm:$0xf]
    %v3007 = vld [vmem:[%s1075 + $0x18] sm:$0xf]
    %v3008 = vld [vmem:[%s1075 + $0x1c] sm:$0xf]
    %v3009 = vld [vmem:[%s1075 + $0x20] sm:$0xf]
    %v3010 = vld [vmem:[%s1075 + $0x24] sm:$0xf]
    %v3011 = vld [vmem:[%s1075 + $0x28] sm:$0xf]
    %v3012 = vld [vmem:[%s1075 + $0x2c] sm:$0xf]
    %v3013 = vld [vmem:[%s1075 + $0x30] sm:$0xf]
    %v3014 = vld [vmem:[%s1075 + $0x34] sm:$0xf]
    %v3015 = vld [vmem:[%s1075 + $0x38] sm:$0xf]
    %v3016 = vld [vmem:[%s1075 + $0x3c] sm:$0xf]
    %v3017 = vld [vmem:[%s1092] sm:$0x1]
    %v3018 = vsel %vm113, %v2980, 0.0
    %3019 = vadd.xlane.f32.xlu0 %v3018
    %v3020 = vpop.xlane.xlu0 %3019
    %v3021 = vsel %vm113, %v2981, 0.0
    %3022 = vadd.xlane.f32.xlu0 %v3021
    %v3023 = vpop.xlane.xlu0 %3022
    %v3024 = vmul.f32 %v3020, %v126
    %v3025 = vmul.f32 %v3023, %v126
    %v3026 = vsub.f32 %v2980, %v3024
    %v3027 = vsub.f32 %v2981, %v3025
    %v3028 = vmul.f32 %v3026, %v3026
    %v3029 = vmul.f32 %v3027, %v3027
    %v3030 = vsel %vm113, %v3028, 0.0
    %3031 = vadd.xlane.f32.xlu0 %v3030
    %v3032 = vpop.xlane.xlu0 %3031
    %v3033 = vsel %vm113, %v3029, 0.0
    %3034 = vadd.xlane.f32.xlu0 %v3033
    %v3035 = vpop.xlane.xlu0 %3034
    %v3036 = vmul.f32 %v3032, %v126
    %v3037 = vmul.f32 %v3035, %v126
    %v3038 = vadd.f32 %v3036, 1e-05
    %v3039 = vadd.f32 %v3037, 1e-05
    %v3040 = vrsqrt.pop %v3038
    %v3041 = vmul.f32 %v3040, %v3038
    %v3042 = vmul.f32 %v3041, %v3040
    %v3043 = vmul.f32 0.5, %v3042
    %v3044 = vsub.f32 1.5, %v3043
    %v3045 = vmul.f32 %v3040, %v3044
    %vm3046 = vweird.f32 %v3038
    %vm3047 = vweird.f32 %v3040
    %vm3048 = vmor %vm3046, %vm3047
    %v3049 = vsel %vm3048, %v3040, %v3045
    %v3050 = vrsqrt.pop %v3039
    %v3051 = vmul.f32 %v3050, %v3039
    %v3052 = vmul.f32 %v3051, %v3050
    %v3053 = vmul.f32 0.5, %v3052
    %v3054 = vsub.f32 1.5, %v3053
    %v3055 = vmul.f32 %v3050, %v3054
    %vm3056 = vweird.f32 %v3039
    %vm3057 = vweird.f32 %v3050
    %vm3058 = vmor %vm3056, %vm3057
    %v3059 = vsel %vm3058, %v3050, %v3055
    %v3060 = vmul.f32 %v3026, %v3049
    %v3061 = vmul.f32 %v3027, %v3059
    %v3063 = vperm.slane %v2982, 0
    %v3065 = vmul.f32 %v3060, %v3063
    %v3066 = vmul.f32 %v3061, %v3063
    %v3068 = vperm.slane %v2983, 0
    %v3070 = vadd.f32 %v3065, %v3068
    %v3071 = vadd.f32 %v3066, %v3068
    %v3072 = vpack.c.bf16 %v3071, %v3070
    %v3074 = vperm.slane %v2988, 0
    %v3080 = vunpack.c.l.b16 %v2984
    %v3081 = vunpack.c.l.b16 %v2985
    %v3082 = vunpack.c.l.b16 %v2986
    %v3083 = vunpack.c.l.b16 %v2987
    %v3084 = vpack.c.b16 %v3081, %v3080
    %v3085 = vpack.c.b16 %v3083, %v3082
    %v3089 = vsel %vm113, %v3072, 0
    %3091 = vmatpush.bf16.msra.mxu0 0
    %3092 = vmatpush.bf16.msra.mxu0 0
    %3093 = vmatpush.bf16.msra.mxu0 0
    %3094 = vmatpush.bf16.msra.mxu0 0
    %3095 = vmatpush.bf16.msra.mxu0 0
    %3096 = vmatpush.bf16.msra.mxu0 0
    %3097 = vmatpush.bf16.msra.mxu0 %v3085
    %3098 = vmatpush.bf16.msra.mxu0 %v3084
    %3099 = vmatmul.bf16.gmra.mxu0 %v3089
    %v3100 = vpop.f32.mrf.mxu0
    %v3101 = vadd.f32 %v3074, %v3100
    %v3102 = vpop.f32.mrf.mxu0
    %v3103 = vadd.f32 %v3074, %v3102
    %3104 = vdwg.mxu0
    %3107 = vrot.lane.b32.xlu0 %v3101, 120
    %v3108 = vpop.permute.xlu0 %3107
    %3109 = vrot.lane.b32.xlu0 %v3103, 120
    %v3110 = vpop.permute.xlu0 %3109
    %3113 = vrot.lane.b32.xlu0 %v3101, 112
    %v3114 = vpop.permute.xlu0 %3113
    %3115 = vrot.lane.b32.xlu0 %v3103, 112
    %v3116 = vpop.permute.xlu0 %3115
    %3119 = vrot.lane.b32.xlu0 %v3101, 104
    %v3120 = vpop.permute.xlu0 %3119
    %3121 = vrot.lane.b32.xlu0 %v3103, 104
    %v3122 = vpop.permute.xlu0 %3121
    %v3125 = vpack.c.bf16 %v3101, %v3101
    %v3126 = vpack.c.bf16 %v3103, %v3103
    %v3127 = vpack.c.bf16 %v3108, %v3108
    %v3128 = vpack.c.bf16 %v3110, %v3110
    %v3129 = vpack.c.bf16 %v3114, %v3114
    %v3130 = vpack.c.bf16 %v3116, %v3116
    %v3131 = vpack.c.bf16 %v3120, %v3120
    %v3132 = vpack.c.bf16 %v3122, %v3122
    %v3134 = vunpack.c.l.b16 %v3125
    %v3135 = vpack.c.b16 %v3134, %v3134
    %3136 = vrot.lane.b32.xlu0 %v3135, 96
    %v3137 = vpop.permute.xlu0 %3136
    %v3139 = vsel %vm241, %v3125, 0
    %v3142 = vsel %vm241, %v3137, 0
    %3144 = vmatpush.bf16.xpose.msra.mxu0 0
    %3145 = vmatpush.bf16.xpose.msra.mxu0 0
    %3146 = vmatpush.bf16.xpose.msra.mxu0 0
    %3147 = vmatpush.bf16.xpose.msra.mxu0 0
    %3148 = vmatpush.bf16.xpose.msra.mxu0 0
    %3149 = vmatpush.bf16.xpose.msra.mxu0 0
    %3150 = vmatpush.bf16.xpose.msra.mxu0 0
    %3151 = vmatpush.bf16.xpose.msra.mxu0 %v3142
    %3152 = vmatmul.bf16.gmra.mxu0 %v3139
    %v3153 = vpop.f32.mrf.mxu0
    %v3154 = vadd.f32 0.0, %v3153
    %v3155 = vpop.f32.mrf.mxu0
    %3156 = vdwg.mxu0
    %v3158 = vunpack.c.l.b16 %v3126
    %v3159 = vpack.c.b16 %v3158, %v3158
    %3160 = vrot.lane.b32.xlu0 %v3159, 96
    %v3161 = vpop.permute.xlu0 %3160
    %v3163 = vsel %vm241, %v3126, 0
    %v3166 = vsel %vm241, %v3161, 0
    %3168 = vmatpush.bf16.xpose.msra.mxu0 0
    %3169 = vmatpush.bf16.xpose.msra.mxu0 0
    %3170 = vmatpush.bf16.xpose.msra.mxu0 0
    %3171 = vmatpush.bf16.xpose.msra.mxu0 0
    %3172 = vmatpush.bf16.xpose.msra.mxu0 0
    %3173 = vmatpush.bf16.xpose.msra.mxu0 0
    %3174 = vmatpush.bf16.xpose.msra.mxu0 0
    %3175 = vmatpush.bf16.xpose.msra.mxu0 %v3166
    %3176 = vmatmul.bf16.gmra.mxu0 %v3163
    %v3177 = vpop.f32.mrf.mxu0
    %v3178 = vadd.f32 0.0, %v3177
    %v3179 = vpop.f32.mrf.mxu0
    %3180 = vdwg.mxu0
    %v3182 = vunpack.c.l.b16 %v3127
    %v3183 = vpack.c.b16 %v3182, %v3182
    %3184 = vrot.lane.b32.xlu0 %v3183, 96
    %v3185 = vpop.permute.xlu0 %3184
    %v3187 = vsel %vm241, %v3127, 0
    %v3190 = vsel %vm241, %v3185, 0
    %3192 = vmatpush.bf16.xpose.msra.mxu0 0
    %3193 = vmatpush.bf16.xpose.msra.mxu0 0
    %3194 = vmatpush.bf16.xpose.msra.mxu0 0
    %3195 = vmatpush.bf16.xpose.msra.mxu0 0
    %3196 = vmatpush.bf16.xpose.msra.mxu0 0
    %3197 = vmatpush.bf16.xpose.msra.mxu0 0
    %3198 = vmatpush.bf16.xpose.msra.mxu0 0
    %3199 = vmatpush.bf16.xpose.msra.mxu0 %v3190
    %3200 = vmatmul.bf16.gmra.mxu0 %v3187
    %v3201 = vpop.f32.mrf.mxu0
    %v3202 = vadd.f32 0.0, %v3201
    %v3203 = vpop.f32.mrf.mxu0
    %3204 = vdwg.mxu0
    %v3206 = vunpack.c.l.b16 %v3128
    %v3207 = vpack.c.b16 %v3206, %v3206
    %3208 = vrot.lane.b32.xlu0 %v3207, 96
    %v3209 = vpop.permute.xlu0 %3208
    %v3211 = vsel %vm241, %v3128, 0
    %v3214 = vsel %vm241, %v3209, 0
    %3216 = vmatpush.bf16.xpose.msra.mxu0 0
    %3217 = vmatpush.bf16.xpose.msra.mxu0 0
    %3218 = vmatpush.bf16.xpose.msra.mxu0 0
    %3219 = vmatpush.bf16.xpose.msra.mxu0 0
    %3220 = vmatpush.bf16.xpose.msra.mxu0 0
    %3221 = vmatpush.bf16.xpose.msra.mxu0 0
    %3222 = vmatpush.bf16.xpose.msra.mxu0 0
    %3223 = vmatpush.bf16.xpose.msra.mxu0 %v3214
    %3224 = vmatmul.bf16.gmra.mxu0 %v3211
    %v3225 = vpop.f32.mrf.mxu0
    %v3226 = vadd.f32 0.0, %v3225
    %v3227 = vpop.f32.mrf.mxu0
    %3228 = vdwg.mxu0
    %v3230 = vunpack.c.l.b16 %v3129
    %v3231 = vpack.c.b16 %v3230, %v3230
    %3232 = vrot.lane.b32.xlu0 %v3231, 96
    %v3233 = vpop.permute.xlu0 %3232
    %v3235 = vsel %vm241, %v3129, 0
    %v3238 = vsel %vm241, %v3233, 0
    %3240 = vmatpush.bf16.xpose.msra.mxu0 0
    %3241 = vmatpush.bf16.xpose.msra.mxu0 0
    %3242 = vmatpush.bf16.xpose.msra.mxu0 0
    %3243 = vmatpush.bf16.xpose.msra.mxu0 0
    %3244 = vmatpush.bf16.xpose.msra.mxu0 0
    %3245 = vmatpush.bf16.xpose.msra.mxu0 0
    %3246 = vmatpush.bf16.xpose.msra.mxu0 0
    %3247 = vmatpush.bf16.xpose.msra.mxu0 %v3238
    %3248 = vmatmul.bf16.gmra.mxu0 %v3235
    %v3249 = vpop.f32.mrf.mxu0
    %v3250 = vadd.f32 0.0, %v3249
    %v3251 = vpop.f32.mrf.mxu0
    %3252 = vdwg.mxu0
    %v3254 = vunpack.c.l.b16 %v3130
    %v3255 = vpack.c.b16 %v3254, %v3254
    %3256 = vrot.lane.b32.xlu0 %v3255, 96
    %v3257 = vpop.permute.xlu0 %3256
    %v3259 = vsel %vm241, %v3130, 0
    %v3262 = vsel %vm241, %v3257, 0
    %3264 = vmatpush.bf16.xpose.msra.mxu0 0
    %3265 = vmatpush.bf16.xpose.msra.mxu0 0
    %3266 = vmatpush.bf16.xpose.msra.mxu0 0
    %3267 = vmatpush.bf16.xpose.msra.mxu0 0
    %3268 = vmatpush.bf16.xpose.msra.mxu0 0
    %3269 = vmatpush.bf16.xpose.msra.mxu0 0
    %3270 = vmatpush.bf16.xpose.msra.mxu0 0
    %3271 = vmatpush.bf16.xpose.msra.mxu0 %v3262
    %3272 = vmatmul.bf16.gmra.mxu0 %v3259
    %v3273 = vpop.f32.mrf.mxu0
    %v3274 = vadd.f32 0.0, %v3273
    %v3275 = vpop.f32.mrf.mxu0
    %3276 = vdwg.mxu0
    %v3278 = vunpack.c.l.b16 %v3131
    %v3279 = vpack.c.b16 %v3278, %v3278
    %3280 = vrot.lane.b32.xlu0 %v3279, 96
    %v3281 = vpop.permute.xlu0 %3280
    %v3283 = vsel %vm241, %v3131, 0
    %v3286 = vsel %vm241, %v3281, 0
    %3288 = vmatpush.bf16.xpose.msra.mxu0 0
    %3289 = vmatpush.bf16.xpose.msra.mxu0 0
    %3290 = vmatpush.bf16.xpose.msra.mxu0 0
    %3291 = vmatpush.bf16.xpose.msra.mxu0 0
    %3292 = vmatpush.bf16.xpose.msra.mxu0 0
    %3293 = vmatpush.bf16.xpose.msra.mxu0 0
    %3294 = vmatpush.bf16.xpose.msra.mxu0 0
    %3295 = vmatpush.bf16.xpose.msra.mxu0 %v3286
    %3296 = vmatmul.bf16.gmra.mxu0 %v3283
    %v3297 = vpop.f32.mrf.mxu0
    %v3298 = vadd.f32 0.0, %v3297
    %v3299 = vpop.f32.mrf.mxu0
    %3300 = vdwg.mxu0
    %v3302 = vunpack.c.l.b16 %v3132
    %v3303 = vpack.c.b16 %v3302, %v3302
    %3304 = vrot.lane.b32.xlu0 %v3303, 96
    %v3305 = vpop.permute.xlu0 %3304
    %v3307 = vsel %vm241, %v3132, 0
    %v3310 = vsel %vm241, %v3305, 0
    %3312 = vmatpush.bf16.xpose.msra.mxu0 0
    %3313 = vmatpush.bf16.xpose.msra.mxu0 0
    %3314 = vmatpush.bf16.xpose.msra.mxu0 0
    %3315 = vmatpush.bf16.xpose.msra.mxu0 0
    %3316 = vmatpush.bf16.xpose.msra.mxu0 0
    %3317 = vmatpush.bf16.xpose.msra.mxu0 0
    %3318 = vmatpush.bf16.xpose.msra.mxu0 0
    %3319 = vmatpush.bf16.xpose.msra.mxu0 %v3310
    %3320 = vmatmul.bf16.gmra.mxu0 %v3307
    %v3321 = vpop.f32.mrf.mxu0
    %v3322 = vadd.f32 0.0, %v3321
    %v3323 = vpop.f32.mrf.mxu0
    %3324 = vdwg.mxu0
    %v3325 = vmul.f32 %v3154, 0.35355338
    %v3326 = vmul.f32 %v3178, 0.35355338
    %v3327 = vmul.f32 %v3202, 0.35355338
    %v3328 = vmul.f32 %v3226, 0.35355338
    %v3329 = vmul.f32 %v3250, 0.35355338
    %v3330 = vmul.f32 %v3274, 0.35355338
    %v3331 = vmul.f32 %v3298, 0.35355338
    %v3332 = vmul.f32 %v3322, 0.35355338
    %v3333 = vadd.f32 %v3325, %v72
    %v3334 = vadd.f32 %v3326, %v72
    %v3335 = vadd.f32 %v3327, %v72
    %v3336 = vadd.f32 %v3328, %v72
    %v3337 = vadd.f32 %v3329, %v72
    %v3338 = vadd.f32 %v3330, %v72
    %v3339 = vadd.f32 %v3331, %v72
    %v3340 = vadd.f32 %v3332, %v72
    %v3341 = vsel %vm241, %v3333, -inf
    %3342 = vmax.xlane.f32.xlu0 %v3341
    %v3343 = vpop.xlane.xlu0 %3342
    %v3344 = vsel %vm241, %v3334, -inf
    %3345 = vmax.xlane.f32.xlu0 %v3344
    %v3346 = vpop.xlane.xlu0 %3345
    %v3347 = vsel %vm241, %v3335, -inf
    %3348 = vmax.xlane.f32.xlu0 %v3347
    %v3349 = vpop.xlane.xlu0 %3348
    %v3350 = vsel %vm241, %v3336, -inf
    %3351 = vmax.xlane.f32.xlu0 %v3350
    %v3352 = vpop.xlane.xlu0 %3351
    %v3353 = vsel %vm241, %v3337, -inf
    %3354 = vmax.xlane.f32.xlu0 %v3353
    %v3355 = vpop.xlane.xlu0 %3354
    %v3356 = vsel %vm241, %v3338, -inf
    %3357 = vmax.xlane.f32.xlu0 %v3356
    %v3358 = vpop.xlane.xlu0 %3357
    %v3359 = vsel %vm241, %v3339, -inf
    %3360 = vmax.xlane.f32.xlu0 %v3359
    %v3361 = vpop.xlane.xlu0 %3360
    %v3362 = vsel %vm241, %v3340, -inf
    %3363 = vmax.xlane.f32.xlu0 %v3362
    %v3364 = vpop.xlane.xlu0 %3363
    %v3365 = vsub.f32 %v3333, %v3343
    %v3366 = vsub.f32 %v3334, %v3346
    %v3367 = vsub.f32 %v3335, %v3349
    %v3368 = vsub.f32 %v3336, %v3352
    %v3369 = vsub.f32 %v3337, %v3355
    %v3370 = vsub.f32 %v3338, %v3358
    %v3371 = vsub.f32 %v3339, %v3361
    %v3372 = vsub.f32 %v3340, %v3364
    %v3373 = vmul.f32 %v3365, 1.442695
    %v3374 = vpow.pop %v3373
    %v3375 = vmul.f32 %v3366, 1.442695
    %v3376 = vpow.pop %v3375
    %v3377 = vmul.f32 %v3367, 1.442695
    %v3378 = vpow.pop %v3377
    %v3379 = vmul.f32 %v3368, 1.442695
    %v3380 = vpow.pop %v3379
    %v3381 = vmul.f32 %v3369, 1.442695
    %v3382 = vpow.pop %v3381
    %v3383 = vmul.f32 %v3370, 1.442695
    %v3384 = vpow.pop %v3383
    %v3385 = vmul.f32 %v3371, 1.442695
    %v3386 = vpow.pop %v3385
    %v3387 = vmul.f32 %v3372, 1.442695
    %v3388 = vpow.pop %v3387
    %v3389 = vsel %vm241, %v3374, 0.0
    %3390 = vadd.xlane.f32.xlu0 %v3389
    %v3391 = vpop.xlane.xlu0 %3390
    %v3392 = vsel %vm241, %v3376, 0.0
    %3393 = vadd.xlane.f32.xlu0 %v3392
    %v3394 = vpop.xlane.xlu0 %3393
    %v3395 = vsel %vm241, %v3378, 0.0
    %3396 = vadd.xlane.f32.xlu0 %v3395
    %v3397 = vpop.xlane.xlu0 %3396
    %v3398 = vsel %vm241, %v3380, 0.0
    %3399 = vadd.xlane.f32.xlu0 %v3398
    %v3400 = vpop.xlane.xlu0 %3399
    %v3401 = vsel %vm241, %v3382, 0.0
    %3402 = vadd.xlane.f32.xlu0 %v3401
    %v3403 = vpop.xlane.xlu0 %3402
    %v3404 = vsel %vm241, %v3384, 0.0
    %3405 = vadd.xlane.f32.xlu0 %v3404
    %v3406 = vpop.xlane.xlu0 %3405
    %v3407 = vsel %vm241, %v3386, 0.0
    %3408 = vadd.xlane.f32.xlu0 %v3407
    %v3409 = vpop.xlane.xlu0 %3408
    %v3410 = vsel %vm241, %v3388, 0.0
    %3411 = vadd.xlane.f32.xlu0 %v3410
    %v3412 = vpop.xlane.xlu0 %3411
    %v3413 = vrcp.pop %v3391
    %v3414 = vrcp.pop %v3394
    %v3415 = vrcp.pop %v3397
    %v3416 = vrcp.pop %v3400
    %v3417 = vrcp.pop %v3403
    %v3418 = vrcp.pop %v3406
    %v3419 = vrcp.pop %v3409
    %v3420 = vrcp.pop %v3412
    %v3421 = vmul.f32 %v3374, %v3413
    %v3422 = vmul.f32 %v3376, %v3414
    %v3423 = vmul.f32 %v3378, %v3415
    %v3424 = vmul.f32 %v3380, %v3416
    %v3425 = vmul.f32 %v3382, %v3417
    %v3426 = vmul.f32 %v3384, %v3418
    %v3427 = vmul.f32 %v3386, %v3419
    %v3428 = vmul.f32 %v3388, %v3420
    %v3429 = vpack.c.bf16 %v3421, %v3421
    %v3430 = vpack.c.bf16 %v3422, %v3422
    %v3431 = vpack.c.bf16 %v3423, %v3423
    %v3432 = vpack.c.bf16 %v3424, %v3424
    %v3433 = vpack.c.bf16 %v3425, %v3425
    %v3434 = vpack.c.bf16 %v3426, %v3426
    %v3435 = vpack.c.bf16 %v3427, %v3427
    %v3436 = vpack.c.bf16 %v3428, %v3428
    %3437 = vrot.lane.b32.xlu0 %v3135, 64
    %v3438 = vpop.permute.xlu0 %3437
    %v3440 = vsel %vm241, %v3429, 0
    %v3443 = vsel %vm546, %v3438, 0
    %3445 = vmatpush.bf16.msra.mxu0 0
    %3446 = vmatpush.bf16.msra.mxu0 0
    %3447 = vmatpush.bf16.msra.mxu0 0
    %3448 = vmatpush.bf16.msra.mxu0 0
    %3449 = vmatpush.bf16.msra.mxu0 0
    %3450 = vmatpush.bf16.msra.mxu0 0
    %3451 = vmatpush.bf16.msra.mxu0 0
    %3452 = vmatpush.bf16.msra.mxu0 %v3443
    %3453 = vmatmul.bf16.gmra.mxu0 %v3440
    %v3454 = vpop.f32.mrf.mxu0
    %v3455 = vadd.f32 0.0, %v3454
    %v3456 = vpop.f32.mrf.mxu0
    %3457 = vdwg.mxu0
    %3458 = vrot.lane.b32.xlu0 %v3159, 64
    %v3459 = vpop.permute.xlu0 %3458
    %v3461 = vsel %vm241, %v3430, 0
    %v3464 = vsel %vm546, %v3459, 0
    %3466 = vmatpush.bf16.msra.mxu0 0
    %3467 = vmatpush.bf16.msra.mxu0 0
    %3468 = vmatpush.bf16.msra.mxu0 0
    %3469 = vmatpush.bf16.msra.mxu0 0
    %3470 = vmatpush.bf16.msra.mxu0 0
    %3471 = vmatpush.bf16.msra.mxu0 0
    %3472 = vmatpush.bf16.msra.mxu0 0
    %3473 = vmatpush.bf16.msra.mxu0 %v3464
    %3474 = vmatmul.bf16.gmra.mxu0 %v3461
    %v3475 = vpop.f32.mrf.mxu0
    %v3476 = vadd.f32 0.0, %v3475
    %v3477 = vpop.f32.mrf.mxu0
    %3478 = vdwg.mxu0
    %3479 = vrot.lane.b32.xlu0 %v3183, 64
    %v3480 = vpop.permute.xlu0 %3479
    %v3482 = vsel %vm241, %v3431, 0
    %v3485 = vsel %vm546, %v3480, 0
    %3487 = vmatpush.bf16.msra.mxu0 0
    %3488 = vmatpush.bf16.msra.mxu0 0
    %3489 = vmatpush.bf16.msra.mxu0 0
    %3490 = vmatpush.bf16.msra.mxu0 0
    %3491 = vmatpush.bf16.msra.mxu0 0
    %3492 = vmatpush.bf16.msra.mxu0 0
    %3493 = vmatpush.bf16.msra.mxu0 0
    %3494 = vmatpush.bf16.msra.mxu0 %v3485
    %3495 = vmatmul.bf16.gmra.mxu0 %v3482
    %v3496 = vpop.f32.mrf.mxu0
    %v3497 = vadd.f32 0.0, %v3496
    %v3498 = vpop.f32.mrf.mxu0
    %3499 = vdwg.mxu0
    %3500 = vrot.lane.b32.xlu0 %v3207, 64
    %v3501 = vpop.permute.xlu0 %3500
    %v3503 = vsel %vm241, %v3432, 0
    %v3506 = vsel %vm546, %v3501, 0
    %3508 = vmatpush.bf16.msra.mxu0 0
    %3509 = vmatpush.bf16.msra.mxu0 0
    %3510 = vmatpush.bf16.msra.mxu0 0
    %3511 = vmatpush.bf16.msra.mxu0 0
    %3512 = vmatpush.bf16.msra.mxu0 0
    %3513 = vmatpush.bf16.msra.mxu0 0
    %3514 = vmatpush.bf16.msra.mxu0 0
    %3515 = vmatpush.bf16.msra.mxu0 %v3506
    %3516 = vmatmul.bf16.gmra.mxu0 %v3503
    %v3517 = vpop.f32.mrf.mxu0
    %v3518 = vadd.f32 0.0, %v3517
    %v3519 = vpop.f32.mrf.mxu0
    %3520 = vdwg.mxu0
    %3521 = vrot.lane.b32.xlu0 %v3231, 64
    %v3522 = vpop.permute.xlu0 %3521
    %v3524 = vsel %vm241, %v3433, 0
    %v3527 = vsel %vm546, %v3522, 0
    %3529 = vmatpush.bf16.msra.mxu0 0
    %3530 = vmatpush.bf16.msra.mxu0 0
    %3531 = vmatpush.bf16.msra.mxu0 0
    %3532 = vmatpush.bf16.msra.mxu0 0
    %3533 = vmatpush.bf16.msra.mxu0 0
    %3534 = vmatpush.bf16.msra.mxu0 0
    %3535 = vmatpush.bf16.msra.mxu0 0
    %3536 = vmatpush.bf16.msra.mxu0 %v3527
    %3537 = vmatmul.bf16.gmra.mxu0 %v3524
    %v3538 = vpop.f32.mrf.mxu0
    %v3539 = vadd.f32 0.0, %v3538
    %v3540 = vpop.f32.mrf.mxu0
    %3541 = vdwg.mxu0
    %3542 = vrot.lane.b32.xlu0 %v3255, 64
    %v3543 = vpop.permute.xlu0 %3542
    %v3545 = vsel %vm241, %v3434, 0
    %v3548 = vsel %vm546, %v3543, 0
    %3550 = vmatpush.bf16.msra.mxu0 0
    %3551 = vmatpush.bf16.msra.mxu0 0
    %3552 = vmatpush.bf16.msra.mxu0 0
    %3553 = vmatpush.bf16.msra.mxu0 0
    %3554 = vmatpush.bf16.msra.mxu0 0
    %3555 = vmatpush.bf16.msra.mxu0 0
    %3556 = vmatpush.bf16.msra.mxu0 0
    %3557 = vmatpush.bf16.msra.mxu0 %v3548
    %3558 = vmatmul.bf16.gmra.mxu0 %v3545
    %v3559 = vpop.f32.mrf.mxu0
    %v3560 = vadd.f32 0.0, %v3559
    %v3561 = vpop.f32.mrf.mxu0
    %3562 = vdwg.mxu0
    %3563 = vrot.lane.b32.xlu0 %v3279, 64
    %v3564 = vpop.permute.xlu0 %3563
    %v3566 = vsel %vm241, %v3435, 0
    %v3569 = vsel %vm546, %v3564, 0
    %3571 = vmatpush.bf16.msra.mxu0 0
    %3572 = vmatpush.bf16.msra.mxu0 0
    %3573 = vmatpush.bf16.msra.mxu0 0
    %3574 = vmatpush.bf16.msra.mxu0 0
    %3575 = vmatpush.bf16.msra.mxu0 0
    %3576 = vmatpush.bf16.msra.mxu0 0
    %3577 = vmatpush.bf16.msra.mxu0 0
    %3578 = vmatpush.bf16.msra.mxu0 %v3569
    %3579 = vmatmul.bf16.gmra.mxu0 %v3566
    %v3580 = vpop.f32.mrf.mxu0
    %v3581 = vadd.f32 0.0, %v3580
    %v3582 = vpop.f32.mrf.mxu0
    %3583 = vdwg.mxu0
    %3584 = vrot.lane.b32.xlu0 %v3303, 64
    %v3585 = vpop.permute.xlu0 %3584
    %v3587 = vsel %vm241, %v3436, 0
    %v3590 = vsel %vm546, %v3585, 0
    %3592 = vmatpush.bf16.msra.mxu0 0
    %3593 = vmatpush.bf16.msra.mxu0 0
    %3594 = vmatpush.bf16.msra.mxu0 0
    %3595 = vmatpush.bf16.msra.mxu0 0
    %3596 = vmatpush.bf16.msra.mxu0 0
    %3597 = vmatpush.bf16.msra.mxu0 0
    %3598 = vmatpush.bf16.msra.mxu0 0
    %3599 = vmatpush.bf16.msra.mxu0 %v3590
    %3600 = vmatmul.bf16.gmra.mxu0 %v3587
    %v3601 = vpop.f32.mrf.mxu0
    %v3602 = vadd.f32 0.0, %v3601
    %v3603 = vpop.f32.mrf.mxu0
    %3604 = vdwg.mxu0
    %3607 = vrot.lane.b32.xlu0 %v3497, 8
    %v3608 = vpop.permute.xlu0 %3607
    %3609 = vrot.lane.b32.xlu0 %v3518, 8
    %v3610 = vpop.permute.xlu0 %3609
    %3615 = vrot.lane.b32.xlu0 %v3539, 16
    %v3616 = vpop.permute.xlu0 %3615
    %3617 = vrot.lane.b32.xlu0 %v3560, 16
    %v3618 = vpop.permute.xlu0 %3617
    %3623 = vrot.lane.b32.xlu0 %v3581, 24
    %v3624 = vpop.permute.xlu0 %3623
    %3625 = vrot.lane.b32.xlu0 %v3602, 24
    %v3626 = vpop.permute.xlu0 %3625
    %v3629 = vsel %vm241, %v3455, %v3608
    %v3630 = vsel %vm241, %v3476, %v3610
    %v3631 = vsel %vm736, %v3629, %v3616
    %v3632 = vsel %vm736, %v3630, %v3618
    %v3633 = vsel %vm739, %v3631, %v3624
    %v3634 = vsel %vm739, %v3632, %v3626
    %v3635 = vpack.c.bf16 %v3634, %v3633
    %v3637 = vperm.slane %v2993, 0
    %v3643 = vunpack.c.l.b16 %v2989
    %v3644 = vunpack.c.l.b16 %v2990
    %v3645 = vunpack.c.l.b16 %v2991
    %v3646 = vunpack.c.l.b16 %v2992
    %v3647 = vpack.c.b16 %v3644, %v3643
    %v3648 = vpack.c.b16 %v3646, %v3645
    %v3652 = vsel %vm113, %v3635, 0
    %3654 = vmatpush.bf16.msra.mxu0 0
    %3655 = vmatpush.bf16.msra.mxu0 0
    %3656 = vmatpush.bf16.msra.mxu0 0
    %3657 = vmatpush.bf16.msra.mxu0 0
    %3658 = vmatpush.bf16.msra.mxu0 0
    %3659 = vmatpush.bf16.msra.mxu0 0
    %3660 = vmatpush.bf16.msra.mxu0 %v3648
    %3661 = vmatpush.bf16.msra.mxu0 %v3647
    %3662 = vmatmul.bf16.gmra.mxu0 %v3652
    %v3663 = vpop.f32.mrf.mxu0
    %v3664 = vadd.f32 %v3637, %v3663
    %v3665 = vpop.f32.mrf.mxu0
    %v3666 = vadd.f32 %v3637, %v3665
    %3667 = vdwg.mxu0
    %v3668 = vadd.f32 %v2980, %v3664
    %v3669 = vadd.f32 %v2981, %v3666
    %v3670 = vsel %vm113, %v3668, 0.0
    %3671 = vadd.xlane.f32.xlu0 %v3670
    %v3672 = vpop.xlane.xlu0 %3671
    %v3673 = vsel %vm113, %v3669, 0.0
    %3674 = vadd.xlane.f32.xlu0 %v3673
    %v3675 = vpop.xlane.xlu0 %3674
    %v3676 = vmul.f32 %v3672, %v126
    %v3677 = vmul.f32 %v3675, %v126
    %v3678 = vsub.f32 %v3668, %v3676
    %v3679 = vsub.f32 %v3669, %v3677
    %v3680 = vmul.f32 %v3678, %v3678
    %v3681 = vmul.f32 %v3679, %v3679
    %v3682 = vsel %vm113, %v3680, 0.0
    %3683 = vadd.xlane.f32.xlu0 %v3682
    %v3684 = vpop.xlane.xlu0 %3683
    %v3685 = vsel %vm113, %v3681, 0.0
    %3686 = vadd.xlane.f32.xlu0 %v3685
    %v3687 = vpop.xlane.xlu0 %3686
    %v3688 = vmul.f32 %v3684, %v126
    %v3689 = vmul.f32 %v3687, %v126
    %v3690 = vadd.f32 %v3688, 1e-05
    %v3691 = vadd.f32 %v3689, 1e-05
    %v3692 = vrsqrt.pop %v3690
    %v3693 = vmul.f32 %v3692, %v3690
    %v3694 = vmul.f32 %v3693, %v3692
    %v3695 = vmul.f32 0.5, %v3694
    %v3696 = vsub.f32 1.5, %v3695
    %v3697 = vmul.f32 %v3692, %v3696
    %vm3698 = vweird.f32 %v3690
    %vm3699 = vweird.f32 %v3692
    %vm3700 = vmor %vm3698, %vm3699
    %v3701 = vsel %vm3700, %v3692, %v3697
    %v3702 = vrsqrt.pop %v3691
    %v3703 = vmul.f32 %v3702, %v3691
    %v3704 = vmul.f32 %v3703, %v3702
    %v3705 = vmul.f32 0.5, %v3704
    %v3706 = vsub.f32 1.5, %v3705
    %v3707 = vmul.f32 %v3702, %v3706
    %vm3708 = vweird.f32 %v3691
    %vm3709 = vweird.f32 %v3702
    %vm3710 = vmor %vm3708, %vm3709
    %v3711 = vsel %vm3710, %v3702, %v3707
    %v3712 = vmul.f32 %v3678, %v3701
    %v3713 = vmul.f32 %v3679, %v3711
    %v3715 = vperm.slane %v2994, 0
    %v3717 = vmul.f32 %v3712, %v3715
    %v3718 = vmul.f32 %v3713, %v3715
    %v3720 = vperm.slane %v2995, 0
    %v3722 = vadd.f32 %v3717, %v3720
    %v3723 = vadd.f32 %v3718, %v3720
    %v3724 = vpack.c.bf16 %v3723, %v3722
    %v3726 = vperm.slane %v3000, 0
    %v3727 = vperm.slane %v3000, 1
    %v3734 = vunpack.c.l.b16 %v2996
    %v3735 = vunpack.c.h.b16 %v2996
    %v3736 = vunpack.c.l.b16 %v2997
    %v3737 = vunpack.c.h.b16 %v2997
    %v3738 = vunpack.c.l.b16 %v2998
    %v3739 = vunpack.c.h.b16 %v2998
    %v3740 = vunpack.c.l.b16 %v2999
    %v3741 = vunpack.c.h.b16 %v2999
    %v3742 = vpack.c.b16 %v3736, %v3734
    %v3743 = vpack.c.b16 %v3737, %v3735
    %v3744 = vpack.c.b16 %v3740, %v3738
    %v3745 = vpack.c.b16 %v3741, %v3739
    %v3751 = vsel %vm113, %v3724, 0
    %3753 = vmatpush.bf16.msra.mxu0 0
    %3754 = vmatpush.bf16.msra.mxu0 0
    %3755 = vmatpush.bf16.msra.mxu0 0
    %3756 = vmatpush.bf16.msra.mxu0 0
    %3757 = vmatpush.bf16.msra.mxu0 0
    %3758 = vmatpush.bf16.msra.mxu0 0
    %3759 = vmatpush.bf16.msra.mxu0 %v3744
    %3760 = vmatpush.bf16.msra.mxu0 %v3742
    %3761 = vmatmul.bf16.gmra.mxu0 %v3751
    %v3762 = vpop.f32.mrf.mxu0
    %v3763 = vadd.f32 %v3726, %v3762
    %v3764 = vpop.f32.mrf.mxu0
    %v3765 = vadd.f32 %v3726, %v3764
    %3766 = vdwg.mxu0
    %3767 = vmatpush.bf16.msra.mxu0 0
    %3768 = vmatpush.bf16.msra.mxu0 0
    %3769 = vmatpush.bf16.msra.mxu0 0
    %3770 = vmatpush.bf16.msra.mxu0 0
    %3771 = vmatpush.bf16.msra.mxu0 0
    %3772 = vmatpush.bf16.msra.mxu0 0
    %3773 = vmatpush.bf16.msra.mxu0 %v3745
    %3774 = vmatpush.bf16.msra.mxu0 %v3743
    %3775 = vmatmul.bf16.gmra.mxu0 %v3751
    %v3776 = vpop.f32.mrf.mxu0
    %v3777 = vadd.f32 %v3727, %v3776
    %v3778 = vpop.f32.mrf.mxu0
    %v3779 = vadd.f32 %v3727, %v3778
    %3780 = vdwg.mxu0
    %v3781 = vmul.f32 %v3777, 0.5
    %v3782 = vmul.f32 %v3779, 0.5
    %v3783 = vmul.f32 %v3777, 0.70710677
    %v3784 = vmul.f32 %v3779, 0.70710677
    %v3785 = vmul.f32 %v3783, %v3783
    %v3786 = vmin.f32 16.0, %v3785
    %v3787 = vmul.f32 %v3786, 2.1237322e-06
    %v3788 = vadd.f32 %v3787, 0.00028619796
    %v3789 = vmul.f32 %v3786, %v3788
    %v3790 = vadd.f32 %v3789, 0.0036580483
    %v3791 = vmul.f32 %v3786, %v3790
    %v3792 = vadd.f32 %v3791, 0.05243302
    %v3793 = vmul.f32 %v3786, %v3792
    %v3794 = vadd.f32 %v3793, 0.18741608
    %v3795 = vmul.f32 %v3786, %v3794
    %v3796 = vadd.f32 %v3795, 1.1283791
    %v3797 = vmul.f32 %v3783, %v3796
    %v3798 = vmul.f32 %v3786, 3.8918573e-05
    %v3799 = vadd.f32 %v3798, 0.001143296
    %v3800 = vmul.f32 %v3786, %v3799
    %v3801 = vadd.f32 %v3800, 0.014752088
    %v3802 = vmul.f32 %v3786, %v3801
    %v3803 = vadd.f32 %v3802, 0.112945676
    %v3804 = vmul.f32 %v3786, %v3803
    %v3805 = vadd.f32 %v3804, 0.4994258
    %v3806 = vmul.f32 %v3786, %v3805
    %v3807 = vadd.f32 %v3806, 1.0
    %v3808 = vrcp.pop %v3807
    %v3809 = vmul.f32 %v3807, %v3808
    %v3810 = vsub.f32 1.0, %v3809
    %v3811 = vmul.f32 %v3808, %v3810
    %v3812 = vadd.f32 %v3808, %v3811
    %vm3813 = vweird.f32 %v3807
    %vm3814 = vweird.f32 %v3808
    %vm3815 = vmor %vm3813, %vm3814
    %v3816 = vsel %vm3815, %v3808, %v3812
    %v3817 = vand.u32 2147483647, %v3807
    %vm3818 = vcmp.eq.f32.partialorder %v3817, 8.507059e+37
    %v3819 = vand.u32 %v3807, 2147483648
    %v3820 = vor.u32 1.1754944e-38, %v3819
    %v3821 = vsel %vm3818, %v3820, %v3816
    %v3822 = vmul.f32 %v3797, %v3821
    %v3823 = vmin.f32 %v3822, 1.0
    %v3824 = vmax.f32 %v3823, -1.0
    %v3825 = vmul.f32 %v3784, %v3784
    %v3826 = vmin.f32 16.0, %v3825
    %v3827 = vmul.f32 %v3826, 2.1237322e-06
    %v3828 = vadd.f32 %v3827, 0.00028619796
    %v3829 = vmul.f32 %v3826, %v3828
    %v3830 = vadd.f32 %v3829, 0.0036580483
    %v3831 = vmul.f32 %v3826, %v3830
    %v3832 = vadd.f32 %v3831, 0.05243302
    %v3833 = vmul.f32 %v3826, %v3832
    %v3834 = vadd.f32 %v3833, 0.18741608
    %v3835 = vmul.f32 %v3826, %v3834
    %v3836 = vadd.f32 %v3835, 1.1283791
    %v3837 = vmul.f32 %v3784, %v3836
    %v3838 = vmul.f32 %v3826, 3.8918573e-05
    %v3839 = vadd.f32 %v3838, 0.001143296
    %v3840 = vmul.f32 %v3826, %v3839
    %v3841 = vadd.f32 %v3840, 0.014752088
    %v3842 = vmul.f32 %v3826, %v3841
    %v3843 = vadd.f32 %v3842, 0.112945676
    %v3844 = vmul.f32 %v3826, %v3843
    %v3845 = vadd.f32 %v3844, 0.4994258
    %v3846 = vmul.f32 %v3826, %v3845
    %v3847 = vadd.f32 %v3846, 1.0
    %v3848 = vrcp.pop %v3847
    %v3849 = vmul.f32 %v3847, %v3848
    %v3850 = vsub.f32 1.0, %v3849
    %v3851 = vmul.f32 %v3848, %v3850
    %v3852 = vadd.f32 %v3848, %v3851
    %vm3853 = vweird.f32 %v3847
    %vm3854 = vweird.f32 %v3848
    %vm3855 = vmor %vm3853, %vm3854
    %v3856 = vsel %vm3855, %v3848, %v3852
    %v3857 = vand.u32 2147483647, %v3847
    %vm3858 = vcmp.eq.f32.partialorder %v3857, 8.507059e+37
    %v3859 = vand.u32 %v3847, 2147483648
    %v3860 = vor.u32 1.1754944e-38, %v3859
    %v3861 = vsel %vm3858, %v3860, %v3856
    %v3862 = vmul.f32 %v3837, %v3861
    %v3863 = vmin.f32 %v3862, 1.0
    %v3864 = vmax.f32 %v3863, -1.0
    %v3865 = vadd.f32 %v3824, 1.0
    %v3866 = vadd.f32 %v3864, 1.0
    %v3867 = vmul.f32 %v3781, %v3865
    %v3868 = vmul.f32 %v3782, %v3866
    %v3869 = vmul.f32 %v3867, %v3763
    %v3870 = vmul.f32 %v3868, %v3765
    %v3871 = vpack.c.bf16 %v3870, %v3869
    %v3873 = vperm.slane %v3017, 0
    %v3891 = vunpack.c.l.b16 %v3001
    %v3892 = vunpack.c.l.b16 %v3002
    %v3893 = vunpack.c.l.b16 %v3003
    %v3894 = vunpack.c.l.b16 %v3004
    %v3895 = vunpack.c.l.b16 %v3005
    %v3896 = vunpack.c.l.b16 %v3006
    %v3897 = vunpack.c.l.b16 %v3007
    %v3898 = vunpack.c.l.b16 %v3008
    %v3899 = vunpack.c.l.b16 %v3009
    %v3900 = vunpack.c.l.b16 %v3010
    %v3901 = vunpack.c.l.b16 %v3011
    %v3902 = vunpack.c.l.b16 %v3012
    %v3903 = vunpack.c.l.b16 %v3013
    %v3904 = vunpack.c.l.b16 %v3014
    %v3905 = vunpack.c.l.b16 %v3015
    %v3906 = vunpack.c.l.b16 %v3016
    %v3907 = vpack.c.b16 %v3892, %v3891
    %v3908 = vpack.c.b16 %v3894, %v3893
    %v3909 = vpack.c.b16 %v3896, %v3895
    %v3910 = vpack.c.b16 %v3898, %v3897
    %v3911 = vpack.c.b16 %v3900, %v3899
    %v3912 = vpack.c.b16 %v3902, %v3901
    %v3913 = vpack.c.b16 %v3904, %v3903
    %v3914 = vpack.c.b16 %v3906, %v3905
    %3923 = vmatpush.bf16.msra.mxu0 %v3914
    %3924 = vmatpush.bf16.msra.mxu0 %v3913
    %3925 = vmatpush.bf16.msra.mxu0 %v3912
    %3926 = vmatpush.bf16.msra.mxu0 %v3911
    %3927 = vmatpush.bf16.msra.mxu0 %v3910
    %3928 = vmatpush.bf16.msra.mxu0 %v3909
    %3929 = vmatpush.bf16.msra.mxu0 %v3908
    %3930 = vmatpush.bf16.msra.mxu0 %v3907
    %3931 = vmatmul.bf16.gmra.mxu0 %v3871
    %v3932 = vpop.f32.mrf.mxu0
    %v3933 = vadd.f32 %v3873, %v3932
    %v3934 = vpop.f32.mrf.mxu0
    %v3935 = vadd.f32 %v3873, %v3934
    %3936 = vdwg.mxu0
    %v3937 = vadd.f32 %v3668, %v3933
    %v3938 = vadd.f32 %v3669, %v3935
    %s3939 = sld [smem:[#allocation2 + $0x1]]
    %v3940 = vstv %s3939
    %v3941 = vmul.f32 %v3940, %v3937
    %v3942 = vmul.f32 %v3940, %v3938
    %v3943 = vadd.f32 %v2019, %v3941
    %v3944 = vadd.f32 %v2020, %v3942
    %3945 = vst.msk [vmem:[#allocation5] sm:$0xff] %vm113, %v3943
    %3946 = vst.msk [vmem:[#allocation5 + $0x8] sm:$0xff] %vm113, %v3944
    // Predicated region
    $region66: #{tpu_custom_call.1} parent=1 // pred_check
      _
    $region67: #{tpu_custom_call.1} parent=1 // pred_check_branch
      %3948 = sbr.rel (0) target = $region69
    $region68: #{tpu_custom_call.1} parent=1 // pred_region
      %3950 = vsyncadd [#allocation3], 0
      %s3951 = sshll.u32 [#allocation5], 4
      %s3952 = int_to_ptr.vmem [resolvable:$true] %s3951
      %s3953 = sshll.u32 %s15, 4
      %s3954 = int_to_ptr.hbm [resolvable:$true] %s3953
      %3959 = dma.vmem_to_hbm [thread:$0]  %s3952, 256, %s3954, [#allocation3], 128, 128, 8
    $region69: #{tpu_custom_call.1} parent=1 // pred_fallthru
      _
    // Predicated region
    $region70: #{tpu_custom_call.1} parent=1 // pred_check
      _
    $region71: #{tpu_custom_call.1} parent=1 // pred_check_branch
      %3961 = sbr.rel (0) target = $region73
    $region72: #{tpu_custom_call.1} parent=1 // pred_region
      %3963 = dma.done [#allocation3], 256
    $region73: #{tpu_custom_call.1} parent=1 // pred_fallthru
      _
    %3964 = vsyncpa [#allocation3], 1
    %3965 = vsyncpa [#allocation4], 1

</llo_original>
